<compile_context>
chip_gen: v7x
topology: tpu7x:2x2x1
jax: 0.10.0
libtpu: 0.0.40
codegen_flags: <defaults>
</compile_context>

<pallas_src>
import functools

import jax
import jax.numpy as jnp
from jax import lax
from jax.experimental import pallas as pl
from jax.experimental.pallas import tpu as pltpu

NEG_SLOPE = 0.1  # nn.LeakyReLU(0.1) used by model_utils.conv


def _leaky(x):
    return jnp.where(x >= 0.0, x, NEG_SLOPE * x)


# ---------------------------------------------------------------------------
# Fused kernel: conv1 -> conv2 -> conv3 for one image per grid step.
#
# xz_ref : (1, H2+1, W2+1, 4*Cin)  parity-split, padded input (bf16)
#          xz[i, j, p*2*Cin + q*Cin + c] = xpad[2i+p, 2j+q, c]
# z_ref  : (H2+1, W2+1, 4*C1) VMEM scratch = parity-split, padded conv1 output
#          z[i, j, p*2*C1 + q*C1 + c] = y1pad[2i+p, 2j+q, c]
# y2p_ref: (H2+2, W2+2, C2)   VMEM scratch = 1-px zero-padded conv2 output
# o_ref  : (1, C2, H2*W2)     conv3 output, already in NCHW-flatten layout
# ---------------------------------------------------------------------------
def _featextractor1_kernel(xz_ref, w1_ref, b1_ref, w2_ref, b2_ref,
                           w3_ref, b3_ref, o_ref, z_ref, y2p_ref,
                           *, H2, W2, C1, C2):
    M = H2 * W2
    C1x4 = 4 * C1
    Kin = w1_ref.shape[1]          # 4 * Cin

    # ---- zero only the halo frame of the scratches (O(perimeter)) ----------
    zdt = z_ref.dtype
    z_ref[0:1, :, :] = jnp.zeros((1, W2 + 1, C1x4), zdt)
    z_ref[H2:H2 + 1, :, :] = jnp.zeros((1, W2 + 1, C1x4), zdt)
    z_ref[:, 0:1, :] = jnp.zeros((H2 + 1, 1, C1x4), zdt)
    z_ref[:, W2:W2 + 1, :] = jnp.zeros((H2 + 1, 1, C1x4), zdt)

    ydt = y2p_ref.dtype
    y2p_ref[0:1, :, :] = jnp.zeros((1, W2 + 2, C2), ydt)
    y2p_ref[H2 + 1:H2 + 2, :, :] = jnp.zeros((1, W2 + 2, C2), ydt)
    y2p_ref[:, 0:1, :] = jnp.zeros((H2 + 2, 1, C2), ydt)
    y2p_ref[:, W2 + 1:W2 + 2, :] = jnp.zeros((H2 + 2, 1, C2), ydt)

    # ---- conv1: all four output parities in one GEMM per tap (K = 4*Cin) ----
    acc1 = jnp.zeros((M, C1x4), jnp.float32)
    for a in range(2):
        for b in range(2):
            patch = xz_ref[0, a:a + H2, b:b + W2, :].reshape(M, Kin)
            acc1 = acc1 + jnp.dot(patch, w1_ref[a * 2 + b],
                                  preferred_element_type=jnp.float32)
    y1 = _leaky(acc1 + b1_ref[...])                       # (M, 4*C1) f32
    # Scatter the four parity blocks into z with contiguous slice stores.
    for zblk in range(4):
        p, q = (3 - zblk) // 2, (3 - zblk) % 2            # output parity of blk
        z_ref[p:p + H2, q:q + W2, zblk * C1:(zblk + 1) * C1] = (
            y1[:, zblk * C1:(zblk + 1) * C1].reshape(H2, W2, C1).astype(zdt))

    # ---- conv2: 2x2 stride-1 conv over parity-split z (K = 4*C1 = 256) ------
    acc2 = jnp.zeros((M, C2), jnp.float32)
    for a in range(2):
        for b in range(2):
            patch = z_ref[a:a + H2, b:b + W2, :].reshape(M, C1x4)
            acc2 = acc2 + jnp.dot(patch, w2_ref[a * 2 + b],
                                  preferred_element_type=jnp.float32)
    y2 = _leaky(acc2 + b2_ref[...])                       # (M, C2) f32
    y2p_ref[1:1 + H2, 1:1 + W2, :] = y2.reshape(H2, W2, C2).astype(ydt)

    # ---- conv3: 3x3 stride-1, 9 shifted-slice dots off the VMEM scratch -----
    acc3 = jnp.zeros((M, C2), jnp.float32)
    for dy in range(3):
        for dx in range(3):
            patch = y2p_ref[dy:dy + H2, dx:dx + W2, :].reshape(M, C2)
            acc3 = acc3 + jnp.dot(patch, w3_ref[dy * 3 + dx],
                                  preferred_element_type=jnp.float32)
    y3 = _leaky(acc3 + b3_ref[...])                       # (M, C2) f32

    # ---- fold NHWC -> NCHW into the store ------------------------------------
    o_ref[...] = jnp.transpose(y3, (1, 0)).reshape(1, C2, M).astype(o_ref.dtype)


def featextractor1_pallas(xz, w1z, b1c, w2z, b2, w3, b3, *, H2, W2, C1, C2):
    N, _, _, Cin4 = xz.shape
    kern = functools.partial(_featextractor1_kernel, H2=H2, W2=W2, C1=C1, C2=C2)
    return pl.pallas_call(
        kern,
        out_shape=jax.ShapeDtypeStruct((N, C2, H2 * W2), jnp.float32),
        grid_spec=pltpu.PrefetchScalarGridSpec(
            num_scalar_prefetch=0,
            grid=(N,),
            in_specs=[
                pl.BlockSpec((1, H2 + 1, W2 + 1, Cin4), lambda n: (n, 0, 0, 0)),
                pl.BlockSpec((4, Cin4, 4 * C1), lambda n: (0, 0, 0)),
                pl.BlockSpec((1, 4 * C1), lambda n: (0, 0)),
                pl.BlockSpec((4, 4 * C1, C2), lambda n: (0, 0, 0)),
                pl.BlockSpec((1, C2), lambda n: (0, 0)),
                pl.BlockSpec((9, C2, C2), lambda n: (0, 0, 0)),
                pl.BlockSpec((1, C2), lambda n: (0, 0)),
            ],
            out_specs=pl.BlockSpec((1, C2, H2 * W2), lambda n: (n, 0, 0)),
            scratch_shapes=[
                pltpu.VMEM((H2 + 1, W2 + 1, 4 * C1), jnp.bfloat16),   # z
                pltpu.VMEM((H2 + 2, W2 + 2, C2), jnp.bfloat16),       # padded y2
            ],
        ),
        compiler_params=pltpu.CompilerParams(
            dimension_semantics=("parallel",),
            vmem_limit_bytes=48 * 1024 * 1024,
        ),
    )(xz, w1z, b1c, w2z, b2, w3, b3)


# ---------------------------------------------------------------------------
# Parameter init (deterministic, kaiming-normal-like; HWIO layout)
# ---------------------------------------------------------------------------
def init_params(key, c_in=3):
    def conv_params(k, cin, cout, ksize=3):
        kw_key, kb_key = jax.random.split(k)
        fan_in = cin * ksize * ksize
        std = (2.0 / fan_in) ** 0.5                      # kaiming_normal_
        w = std * jax.random.normal(kw_key, (ksize, ksize, cin, cout),
                                    dtype=jnp.float32)
        bound = 1.0 / (fan_in ** 0.5)                    # torch Conv2d bias init
        b = jax.random.uniform(kb_key, (cout,), minval=-bound, maxval=bound,
                               dtype=jnp.float32)
        return w, b

    k1, k2, k3 = jax.random.split(key, 3)
    return {
        "conv1": conv_params(k1, c_in, 64),
        "conv2": conv_params(k2, 64, 128),
        "conv3": conv_params(k3, 128, 128),
    }


# ---------------------------------------------------------------------------
# FeatExtractor1 forward
# ---------------------------------------------------------------------------
@jax.jit
def feat_extractor1_forward(params, x_nchw):
    # NCHW -> NHWC (channels on the 128-lane axis inside the kernel).
    x = jnp.transpose(x_nchw, (0, 2, 3, 1)).astype(jnp.float32)
    N, H, W, Cin = x.shape
    # TODO(synk): odd H/W would need an asymmetric parity split; GR-PSN crops are even.
    assert H % 2 == 0 and W % 2 == 0, (H, W)
    H2, W2 = H // 2, W // 2

    w1, b1 = params["conv1"]
    w2, b2 = params["conv2"]
    w3, b3 = params["conv3"]
    C1 = w1.shape[-1]        # 64
    C2 = w2.shape[-1]        # 128
    Cin4 = 4 * Cin

    # ---- parity-split (space-to-depth) the padded input: one tiny XLA pass --
    # xz[n, i, j, p*2*Cin + q*Cin + c] = xpad[n, 2i+p, 2j+q, c]
    xpad = jnp.pad(x, ((0, 0), (1, 1), (1, 1), (0, 0)))
    xz = (xpad.reshape(N, H2 + 1, 2, W2 + 1, 2, Cin)
              .transpose(0, 1, 3, 2, 4, 5)
              .reshape(N, H2 + 1, W2 + 1, Cin4)
              .astype(jnp.bfloat16))

    # ---- conv1 weights, re-expressed on the parity grid ----------------------
    # For z-channel block zblk (output parity p=(3-zblk)//2, q=(3-zblk)%2) and
    # tap (a, b) over the parity-split input:
    #   w1z[a*2+b, pp*2*Cin+qq*Cin+c, zblk*C1+co] = w1[2a+pp-p, 2b+qq-q, c, co]
    # (zero when the 3x3 tap index falls outside [0, 3)).
    w1z = jnp.zeros((2, 2, 2, 2, Cin, 4, C1), w1.dtype)   # [a,b,pp,qq,c,zblk,co]
    for a in range(2):
        for b in range(2):
            for zblk in range(4):
                p, q = (3 - zblk) // 2, (3 - zblk) % 2
                for pp in range(2):
                    for qq in range(2):
                        dy, dx = 2 * a + pp - p, 2 * b + qq - q
                        if 0 <= dy < 3 and 0 <= dx < 3:
                            w1z = w1z.at[a, b, pp, qq, :, zblk, :].set(w1[dy, dx])
    w1z = w1z.reshape(4, Cin4, 4 * C1).astype(jnp.bfloat16)
    b1c = jnp.tile(b1, 4).reshape(1, 4 * C1).astype(jnp.float32)

    # ---- conv2 (3x3 stride-2) weights as a 2x2 stride-1 kernel over z --------
    w2z = jnp.zeros((2, 2, 2, 2, C1, C2), w2.dtype)       # [a,b,p,q,c,co]
    for a in range(2):
        for b in range(2):
            for p in range(2):
                for q in range(2):
                    dy, dx = 2 * a + p, 2 * b + q
                    if dy < 3 and dx < 3:
                        w2z = w2z.at[a, b, p, q].set(w2[dy, dx])
    w2z = w2z.reshape(4, 4 * C1, C2).astype(jnp.bfloat16)
    b2f = b2.reshape(1, C2).astype(jnp.float32)

    w3f = w3.reshape(9, C2, C2).astype(jnp.bfloat16)
    b3f = b3.reshape(1, C2).astype(jnp.float32)

    # ---- one fused Pallas call: conv1 + conv2 + conv3 ------------------------
    out = featextractor1_pallas(xz, w1z, b1c, w2z, b2f, w3f, b3f,
                                H2=H2, W2=W2, C1=C1, C2=C2)  # (N, C2, H2*W2)

    # torch's .view(-1) on NCHW == row-major flatten of (N, C, H2*W2).
    out_feat = out.reshape(-1)
    return out_feat, (N, C2, H2, W2)


# ---------------------------------------------------------------------------
# Pure-XLA reference (same bf16 quantization points; f32 accumulation)
# ---------------------------------------------------------------------------
@jax.jit
def reference_forward(params, x_nchw):
    def conv_lrelu(x, w, b, stride):
        y = lax.conv_general_dilated(
            x.astype(jnp.bfloat16).astype(jnp.float32),
            w.astype(jnp.bfloat16).astype(jnp.float32),
            window_strides=(stride, stride),
            padding=((1, 1), (1, 1)),
            dimension_numbers=("NHWC", "HWIO", "NHWC"),
            precision=lax.Precision.HIGHEST)
        y = y + b
        return jnp.where(y >= 0.0, y, NEG_SLOPE * y)

    x = jnp.transpose(x_nchw, (0, 2, 3, 1)).astype(jnp.float32)
    w1, b1 = params["conv1"]
    w2, b2 = params["conv2"]
    w3, b3 = params["conv3"]
    y1 = conv_lrelu(x, w1, b1, 1)
    y2 = conv_lrelu(y1, w2, b2, 2)
    y3 = conv_lrelu(y2, w3, b3, 1)
    return jnp.transpose(y3, (0, 3, 1, 2)).reshape(-1)


if __name__ == "__main__":
    key = jax.random.PRNGKey(0)
    pkey, xkey = jax.random.split(key)

    c_in = 3
    params = init_params(pkey, c_in=c_in)

    # Small deterministic input consistent with the module: NCHW
    x = jax.random.normal(xkey, (2, c_in, 16, 16), dtype=jnp.float32)

    out_feat, shape_list = feat_extractor1_forward(params, x)
    out_feat = jax.block_until_ready(out_feat)

    n, c, h, w = shape_list
    assert (int(n), int(c), int(h), int(w)) == (2, 128, 8, 8), shape_list
    assert out_feat.shape == (2 * 128 * 8 * 8,), out_feat.shape
    assert bool(jnp.all(jnp.isfinite(out_feat)))

    # Numerical check against an XLA reference that uses the same bf16
    # quantization points (remaining difference is f32 accumulation order).
    ref = jax.block_until_ready(reference_forward(params, x))
    max_err = float(jnp.max(jnp.abs(out_feat - ref)))
    assert max_err < 3e-2, max_err

    print("KERNEL_OK")
</pallas_src>

<mosaic_0001>
module attributes {stable_mosaic.version = 11 : i64} {
  func.func @_featextractor1_kernel(%arg0: i32, %arg1: memref<1x9x9x12xbf16, #tpu.memory_space<vmem>>, %arg2: memref<4x12x256xbf16, #tpu.memory_space<vmem>>, %arg3: memref<1x256xf32, #tpu.memory_space<vmem>>, %arg4: memref<4x256x128xbf16, #tpu.memory_space<vmem>>, %arg5: memref<1x128xf32, #tpu.memory_space<vmem>>, %arg6: memref<9x128x128xbf16, #tpu.memory_space<vmem>>, %arg7: memref<1x128xf32, #tpu.memory_space<vmem>>, %arg8: memref<1x128x64xf32, #tpu.memory_space<vmem>>, %arg9: memref<9x9x256xbf16, #tpu.memory_space<vmem>>, %arg10: memref<10x10x128xbf16, #tpu.memory_space<vmem>>) attributes {dimension_semantics = [#tpu.dimension_semantics<parallel>], iteration_bounds = array<i64: 2>, scalar_prefetch = 0 : i64, scratch_operands = 2 : i64, tpu.core_type = #tpu.core_type<tc>, window_params = [{transform_indices = @transform_0, window_bounds = array<i64: 1, 9, 9, 12>}, {pipeline_mode = #tpu.pipeline_mode<synchronous>, transform_indices = @transform_1, window_bounds = array<i64: 4, 12, 256>}, {pipeline_mode = #tpu.pipeline_mode<synchronous>, transform_indices = @transform_2, window_bounds = array<i64: 1, 256>}, {pipeline_mode = #tpu.pipeline_mode<synchronous>, transform_indices = @transform_3, window_bounds = array<i64: 4, 256, 128>}, {pipeline_mode = #tpu.pipeline_mode<synchronous>, transform_indices = @transform_4, window_bounds = array<i64: 1, 128>}, {pipeline_mode = #tpu.pipeline_mode<synchronous>, transform_indices = @transform_5, window_bounds = array<i64: 9, 128, 128>}, {pipeline_mode = #tpu.pipeline_mode<synchronous>, transform_indices = @transform_6, window_bounds = array<i64: 1, 128>}, {transform_indices = @transform_7, window_bounds = array<i64: 1, 128, 64>}]} {
    %cst = arith.constant 0.000000e+00 : bf16
    %0 = vector.broadcast %cst : bf16 to vector<1x9x256xbf16>
    %c0 = arith.constant 0 : index
    %c0_0 = arith.constant 0 : index
    %c0_1 = arith.constant 0 : index
    %1 = vector.load %arg9[%c0, %c0_0, %c0_1] : memref<9x9x256xbf16, #tpu.memory_space<vmem>>, vector<1x9x256xbf16>
    tpu.vector_store %arg9[%c0, %c0_0, %c0_1], %0 {strides = array<i32>} : memref<9x9x256xbf16, #tpu.memory_space<vmem>>, vector<1x9x256xbf16>,
    %cst_2 = arith.constant 0.000000e+00 : bf16
    %2 = vector.broadcast %cst_2 : bf16 to vector<1x9x256xbf16>
    %c8 = arith.constant 8 : index
    %c0_3 = arith.constant 0 : index
    %c0_4 = arith.constant 0 : index
    %3 = vector.load %arg9[%c8, %c0_3, %c0_4] : memref<9x9x256xbf16, #tpu.memory_space<vmem>>, vector<1x9x256xbf16>
    tpu.vector_store %arg9[%c8, %c0_3, %c0_4], %2 {strides = array<i32>} : memref<9x9x256xbf16, #tpu.memory_space<vmem>>, vector<1x9x256xbf16>,
    %cst_5 = arith.constant 0.000000e+00 : bf16
    %4 = vector.broadcast %cst_5 : bf16 to vector<9x1x256xbf16>
    %c0_6 = arith.constant 0 : index
    %c0_7 = arith.constant 0 : index
    %c0_8 = arith.constant 0 : index
    %5 = vector.load %arg9[%c0_6, %c0_7, %c0_8] : memref<9x9x256xbf16, #tpu.memory_space<vmem>>, vector<9x1x256xbf16>
    tpu.vector_store %arg9[%c0_6, %c0_7, %c0_8], %4 {strides = array<i32>} : memref<9x9x256xbf16, #tpu.memory_space<vmem>>, vector<9x1x256xbf16>,
    %cst_9 = arith.constant 0.000000e+00 : bf16
    %6 = vector.broadcast %cst_9 : bf16 to vector<9x1x256xbf16>
    %c0_10 = arith.constant 0 : index
    %c8_11 = arith.constant 8 : index
    %c0_12 = arith.constant 0 : index
    %7 = vector.load %arg9[%c0_10, %c8_11, %c0_12] : memref<9x9x256xbf16, #tpu.memory_space<vmem>>, vector<9x1x256xbf16>
    tpu.vector_store %arg9[%c0_10, %c8_11, %c0_12], %6 {strides = array<i32>} : memref<9x9x256xbf16, #tpu.memory_space<vmem>>, vector<9x1x256xbf16>,
    %cst_13 = arith.constant 0.000000e+00 : bf16
    %8 = vector.broadcast %cst_13 : bf16 to vector<1x10x128xbf16>
    %c0_14 = arith.constant 0 : index
    %c0_15 = arith.constant 0 : index
    %c0_16 = arith.constant 0 : index
    %9 = vector.load %arg10[%c0_14, %c0_15, %c0_16] : memref<10x10x128xbf16, #tpu.memory_space<vmem>>, vector<1x10x128xbf16>
    tpu.vector_store %arg10[%c0_14, %c0_15, %c0_16], %8 {strides = array<i32>} : memref<10x10x128xbf16, #tpu.memory_space<vmem>>, vector<1x10x128xbf16>,
    %cst_17 = arith.constant 0.000000e+00 : bf16
    %10 = vector.broadcast %cst_17 : bf16 to vector<1x10x128xbf16>
    %c9 = arith.constant 9 : index
    %c0_18 = arith.constant 0 : index
    %c0_19 = arith.constant 0 : index
    %11 = vector.load %arg10[%c9, %c0_18, %c0_19] : memref<10x10x128xbf16, #tpu.memory_space<vmem>>, vector<1x10x128xbf16>
    tpu.vector_store %arg10[%c9, %c0_18, %c0_19], %10 {strides = array<i32>} : memref<10x10x128xbf16, #tpu.memory_space<vmem>>, vector<1x10x128xbf16>,
    %cst_20 = arith.constant 0.000000e+00 : bf16
    %12 = vector.broadcast %cst_20 : bf16 to vector<10x1x128xbf16>
    %c0_21 = arith.constant 0 : index
    %c0_22 = arith.constant 0 : index
    %c0_23 = arith.constant 0 : index
    %13 = vector.load %arg10[%c0_21, %c0_22, %c0_23] : memref<10x10x128xbf16, #tpu.memory_space<vmem>>, vector<10x1x128xbf16>
    tpu.vector_store %arg10[%c0_21, %c0_22, %c0_23], %12 {strides = array<i32>} : memref<10x10x128xbf16, #tpu.memory_space<vmem>>, vector<10x1x128xbf16>,
    %cst_24 = arith.constant 0.000000e+00 : bf16
    %14 = vector.broadcast %cst_24 : bf16 to vector<10x1x128xbf16>
    %c0_25 = arith.constant 0 : index
    %c9_26 = arith.constant 9 : index
    %c0_27 = arith.constant 0 : index
    %15 = vector.load %arg10[%c0_25, %c9_26, %c0_27] : memref<10x10x128xbf16, #tpu.memory_space<vmem>>, vector<10x1x128xbf16>
    tpu.vector_store %arg10[%c0_25, %c9_26, %c0_27], %14 {strides = array<i32>} : memref<10x10x128xbf16, #tpu.memory_space<vmem>>, vector<10x1x128xbf16>,
    %cst_28 = arith.constant 0.000000e+00 : f32
    %16 = vector.broadcast %cst_28 : f32 to vector<64x256xf32>
    %c0_29 = arith.constant 0 : index
    %c0_30 = arith.constant 0 : index
    %c0_31 = arith.constant 0 : index
    %c0_32 = arith.constant 0 : index
    %17 = vector.load %arg1[%c0_29, %c0_30, %c0_31, %c0_32] : memref<1x9x9x12xbf16, #tpu.memory_space<vmem>>, vector<1x8x8x12xbf16>
    %18 = vector.shape_cast %17 : vector<1x8x8x12xbf16> to vector<8x8x12xbf16>
    %19 = vector.shape_cast %18 : vector<8x8x12xbf16> to vector<64x12xbf16>
    %c0_33 = arith.constant 0 : index
    %c0_34 = arith.constant 0 : index
    %c0_35 = arith.constant 0 : index
    %20 = vector.load %arg2[%c0_33, %c0_34, %c0_35] : memref<4x12x256xbf16, #tpu.memory_space<vmem>>, vector<1x12x256xbf16>
    %21 = vector.shape_cast %20 : vector<1x12x256xbf16> to vector<12x256xbf16>
    %cst_36 = arith.constant dense<0.000000e+00> : vector<64x256xf32>
    %22 = tpu.matmul %19, %21, %cst_36 {dimension_numbers = #tpu.dot_dimension_numbers<[1], [0], [0], [1], [0, 0, 1, 1], [], []>} : vector<64x12xbf16>, vector<12x256xbf16>, vector<64x256xf32> -> vector<64x256xf32>
    %23 = arith.addf %16, %22 : vector<64x256xf32>
    %c0_37 = arith.constant 0 : index
    %c0_38 = arith.constant 0 : index
    %c1 = arith.constant 1 : index
    %c0_39 = arith.constant 0 : index
    %24 = vector.load %arg1[%c0_37, %c0_38, %c1, %c0_39] : memref<1x9x9x12xbf16, #tpu.memory_space<vmem>>, vector<1x8x8x12xbf16>
    %25 = vector.shape_cast %24 : vector<1x8x8x12xbf16> to vector<8x8x12xbf16>
    %26 = vector.shape_cast %25 : vector<8x8x12xbf16> to vector<64x12xbf16>
    %c1_40 = arith.constant 1 : index
    %c0_41 = arith.constant 0 : index
    %c0_42 = arith.constant 0 : index
    %27 = vector.load %arg2[%c1_40, %c0_41, %c0_42] : memref<4x12x256xbf16, #tpu.memory_space<vmem>>, vector<1x12x256xbf16>
    %28 = vector.shape_cast %27 : vector<1x12x256xbf16> to vector<12x256xbf16>
    %cst_43 = arith.constant dense<0.000000e+00> : vector<64x256xf32>
    %29 = tpu.matmul %26, %28, %cst_43 {dimension_numbers = #tpu.dot_dimension_numbers<[1], [0], [0], [1], [0, 0, 1, 1], [], []>} : vector<64x12xbf16>, vector<12x256xbf16>, vector<64x256xf32> -> vector<64x256xf32>
    %30 = arith.addf %23, %29 : vector<64x256xf32>
    %c0_44 = arith.constant 0 : index
    %c1_45 = arith.constant 1 : index
    %c0_46 = arith.constant 0 : index
    %c0_47 = arith.constant 0 : index
    %31 = vector.load %arg1[%c0_44, %c1_45, %c0_46, %c0_47] : memref<1x9x9x12xbf16, #tpu.memory_space<vmem>>, vector<1x8x8x12xbf16>
    %32 = vector.shape_cast %31 : vector<1x8x8x12xbf16> to vector<8x8x12xbf16>
    %33 = vector.shape_cast %32 : vector<8x8x12xbf16> to vector<64x12xbf16>
    %c2 = arith.constant 2 : index
    %c0_48 = arith.constant 0 : index
    %c0_49 = arith.constant 0 : index
    %34 = vector.load %arg2[%c2, %c0_48, %c0_49] : memref<4x12x256xbf16, #tpu.memory_space<vmem>>, vector<1x12x256xbf16>
    %35 = vector.shape_cast %34 : vector<1x12x256xbf16> to vector<12x256xbf16>
    %cst_50 = arith.constant dense<0.000000e+00> : vector<64x256xf32>
    %36 = tpu.matmul %33, %35, %cst_50 {dimension_numbers = #tpu.dot_dimension_numbers<[1], [0], [0], [1], [0, 0, 1, 1], [], []>} : vector<64x12xbf16>, vector<12x256xbf16>, vector<64x256xf32> -> vector<64x256xf32>
    %37 = arith.addf %30, %36 : vector<64x256xf32>
    %c0_51 = arith.constant 0 : index
    %c1_52 = arith.constant 1 : index
    %c1_53 = arith.constant 1 : index
    %c0_54 = arith.constant 0 : index
    %38 = vector.load %arg1[%c0_51, %c1_52, %c1_53, %c0_54] : memref<1x9x9x12xbf16, #tpu.memory_space<vmem>>, vector<1x8x8x12xbf16>
    %39 = vector.shape_cast %38 : vector<1x8x8x12xbf16> to vector<8x8x12xbf16>
    %40 = vector.shape_cast %39 : vector<8x8x12xbf16> to vector<64x12xbf16>
    %c3 = arith.constant 3 : index
    %c0_55 = arith.constant 0 : index
    %c0_56 = arith.constant 0 : index
    %41 = vector.load %arg2[%c3, %c0_55, %c0_56] : memref<4x12x256xbf16, #tpu.memory_space<vmem>>, vector<1x12x256xbf16>
    %42 = vector.shape_cast %41 : vector<1x12x256xbf16> to vector<12x256xbf16>
    %cst_57 = arith.constant dense<0.000000e+00> : vector<64x256xf32>
    %43 = tpu.matmul %40, %42, %cst_57 {dimension_numbers = #tpu.dot_dimension_numbers<[1], [0], [0], [1], [0, 0, 1, 1], [], []>} : vector<64x12xbf16>, vector<12x256xbf16>, vector<64x256xf32> -> vector<64x256xf32>
    %44 = arith.addf %37, %43 : vector<64x256xf32>
    %c0_58 = arith.constant 0 : index
    %c0_59 = arith.constant 0 : index
    %45 = vector.load %arg3[%c0_58, %c0_59] : memref<1x256xf32, #tpu.memory_space<vmem>>, vector<1x256xf32>
    %46 = vector.broadcast %45 : vector<1x256xf32> to vector<64x256xf32>
    %47 = arith.addf %44, %46 : vector<64x256xf32>
    %cst_60 = arith.constant 0.000000e+00 : f32
    %48 = vector.broadcast %cst_60 : f32 to vector<64x256xf32>
    %49 = arith.cmpf oge, %47, %48 : vector<64x256xf32>
    %cst_61 = arith.constant 1.000000e-01 : f32
    %50 = vector.broadcast %cst_61 : f32 to vector<64x256xf32>
    %51 = arith.mulf %50, %47 : vector<64x256xf32>
    %52 = arith.select %49, %47, %51 : vector<64x256xi1>, vector<64x256xf32>
    %53 = vector.extract_strided_slice %52 {offsets = [0, 0], sizes = [64, 64], strides = [1, 1]} : vector<64x256xf32> to vector<64x64xf32>
    %54 = vector.shape_cast %53 : vector<64x64xf32> to vector<8x8x64xf32>
    %55 = arith.truncf %54 : vector<8x8x64xf32> to vector<8x8x64xbf16>
    %c1_62 = arith.constant 1 : index
    %c1_63 = arith.constant 1 : index
    %c0_64 = arith.constant 0 : index
    %56 = vector.load %arg9[%c1_62, %c1_63, %c0_64] : memref<9x9x256xbf16, #tpu.memory_space<vmem>>, vector<8x8x64xbf16>
    tpu.vector_store %arg9[%c1_62, %c1_63, %c0_64], %55 {strides = array<i32>} : memref<9x9x256xbf16, #tpu.memory_space<vmem>>, vector<8x8x64xbf16>,
    %57 = vector.extract_strided_slice %52 {offsets = [0, 64], sizes = [64, 64], strides = [1, 1]} : vector<64x256xf32> to vector<64x64xf32>
    %58 = vector.shape_cast %57 : vector<64x64xf32> to vector<8x8x64xf32>
    %59 = arith.truncf %58 : vector<8x8x64xf32> to vector<8x8x64xbf16>
    %c1_65 = arith.constant 1 : index
    %c0_66 = arith.constant 0 : index
    %c64 = arith.constant 64 : index
    %60 = vector.load %arg9[%c1_65, %c0_66, %c64] : memref<9x9x256xbf16, #tpu.memory_space<vmem>>, vector<8x8x64xbf16>
    tpu.vector_store %arg9[%c1_65, %c0_66, %c64], %59 {strides = array<i32>} : memref<9x9x256xbf16, #tpu.memory_space<vmem>>, vector<8x8x64xbf16>,
    %61 = vector.extract_strided_slice %52 {offsets = [0, 128], sizes = [64, 64], strides = [1, 1]} : vector<64x256xf32> to vector<64x64xf32>
    %62 = vector.shape_cast %61 : vector<64x64xf32> to vector<8x8x64xf32>
    %63 = arith.truncf %62 : vector<8x8x64xf32> to vector<8x8x64xbf16>
    %c0_67 = arith.constant 0 : index
    %c1_68 = arith.constant 1 : index
    %c128 = arith.constant 128 : index
    %64 = vector.load %arg9[%c0_67, %c1_68, %c128] : memref<9x9x256xbf16, #tpu.memory_space<vmem>>, vector<8x8x64xbf16>
    tpu.vector_store %arg9[%c0_67, %c1_68, %c128], %63 {strides = array<i32>} : memref<9x9x256xbf16, #tpu.memory_space<vmem>>, vector<8x8x64xbf16>,
    %65 = vector.extract_strided_slice %52 {offsets = [0, 192], sizes = [64, 64], strides = [1, 1]} : vector<64x256xf32> to vector<64x64xf32>
    %66 = vector.shape_cast %65 : vector<64x64xf32> to vector<8x8x64xf32>
    %67 = arith.truncf %66 : vector<8x8x64xf32> to vector<8x8x64xbf16>
    %c0_69 = arith.constant 0 : index
    %c0_70 = arith.constant 0 : index
    %c192 = arith.constant 192 : index
    %68 = vector.load %arg9[%c0_69, %c0_70, %c192] : memref<9x9x256xbf16, #tpu.memory_space<vmem>>, vector<8x8x64xbf16>
    tpu.vector_store %arg9[%c0_69, %c0_70, %c192], %67 {strides = array<i32>} : memref<9x9x256xbf16, #tpu.memory_space<vmem>>, vector<8x8x64xbf16>,
    %cst_71 = arith.constant 0.000000e+00 : f32
    %69 = vector.broadcast %cst_71 : f32 to vector<64x128xf32>
    %c0_72 = arith.constant 0 : index
    %c0_73 = arith.constant 0 : index
    %c0_74 = arith.constant 0 : index
    %70 = vector.load %arg9[%c0_72, %c0_73, %c0_74] : memref<9x9x256xbf16, #tpu.memory_space<vmem>>, vector<8x8x256xbf16>
    %71 = vector.shape_cast %70 : vector<8x8x256xbf16> to vector<64x256xbf16>
    %c0_75 = arith.constant 0 : index
    %c0_76 = arith.constant 0 : index
    %c0_77 = arith.constant 0 : index
    %72 = vector.load %arg4[%c0_75, %c0_76, %c0_77] : memref<4x256x128xbf16, #tpu.memory_space<vmem>>, vector<1x256x128xbf16>
    %73 = vector.shape_cast %72 : vector<1x256x128xbf16> to vector<256x128xbf16>
    %cst_78 = arith.constant dense<0.000000e+00> : vector<64x128xf32>
    %74 = tpu.matmul %71, %73, %cst_78 {dimension_numbers = #tpu.dot_dimension_numbers<[1], [0], [0], [1], [0, 0, 1, 1], [], []>} : vector<64x256xbf16>, vector<256x128xbf16>, vector<64x128xf32> -> vector<64x128xf32>
    %75 = arith.addf %69, %74 : vector<64x128xf32>
    %c0_79 = arith.constant 0 : index
    %c1_80 = arith.constant 1 : index
    %c0_81 = arith.constant 0 : index
    %76 = vector.load %arg9[%c0_79, %c1_80, %c0_81] : memref<9x9x256xbf16, #tpu.memory_space<vmem>>, vector<8x8x256xbf16>
    %77 = vector.shape_cast %76 : vector<8x8x256xbf16> to vector<64x256xbf16>
    %c1_82 = arith.constant 1 : index
    %c0_83 = arith.constant 0 : index
    %c0_84 = arith.constant 0 : index
    %78 = vector.load %arg4[%c1_82, %c0_83, %c0_84] : memref<4x256x128xbf16, #tpu.memory_space<vmem>>, vector<1x256x128xbf16>
    %79 = vector.shape_cast %78 : vector<1x256x128xbf16> to vector<256x128xbf16>
    %cst_85 = arith.constant dense<0.000000e+00> : vector<64x128xf32>
    %80 = tpu.matmul %77, %79, %cst_85 {dimension_numbers = #tpu.dot_dimension_numbers<[1], [0], [0], [1], [0, 0, 1, 1], [], []>} : vector<64x256xbf16>, vector<256x128xbf16>, vector<64x128xf32> -> vector<64x128xf32>
    %81 = arith.addf %75, %80 : vector<64x128xf32>
    %c1_86 = arith.constant 1 : index
    %c0_87 = arith.constant 0 : index
    %c0_88 = arith.constant 0 : index
    %82 = vector.load %arg9[%c1_86, %c0_87, %c0_88] : memref<9x9x256xbf16, #tpu.memory_space<vmem>>, vector<8x8x256xbf16>
    %83 = vector.shape_cast %82 : vector<8x8x256xbf16> to vector<64x256xbf16>
    %c2_89 = arith.constant 2 : index
    %c0_90 = arith.constant 0 : index
    %c0_91 = arith.constant 0 : index
    %84 = vector.load %arg4[%c2_89, %c0_90, %c0_91] : memref<4x256x128xbf16, #tpu.memory_space<vmem>>, vector<1x256x128xbf16>
    %85 = vector.shape_cast %84 : vector<1x256x128xbf16> to vector<256x128xbf16>
    %cst_92 = arith.constant dense<0.000000e+00> : vector<64x128xf32>
    %86 = tpu.matmul %83, %85, %cst_92 {dimension_numbers = #tpu.dot_dimension_numbers<[1], [0], [0], [1], [0, 0, 1, 1], [], []>} : vector<64x256xbf16>, vector<256x128xbf16>, vector<64x128xf32> -> vector<64x128xf32>
    %87 = arith.addf %81, %86 : vector<64x128xf32>
    %c1_93 = arith.constant 1 : index
    %c1_94 = arith.constant 1 : index
    %c0_95 = arith.constant 0 : index
    %88 = vector.load %arg9[%c1_93, %c1_94, %c0_95] : memref<9x9x256xbf16, #tpu.memory_space<vmem>>, vector<8x8x256xbf16>
    %89 = vector.shape_cast %88 : vector<8x8x256xbf16> to vector<64x256xbf16>
    %c3_96 = arith.constant 3 : index
    %c0_97 = arith.constant 0 : index
    %c0_98 = arith.constant 0 : index
    %90 = vector.load %arg4[%c3_96, %c0_97, %c0_98] : memref<4x256x128xbf16, #tpu.memory_space<vmem>>, vector<1x256x128xbf16>
    %91 = vector.shape_cast %90 : vector<1x256x128xbf16> to vector<256x128xbf16>
    %cst_99 = arith.constant dense<0.000000e+00> : vector<64x128xf32>
    %92 = tpu.matmul %89, %91, %cst_99 {dimension_numbers = #tpu.dot_dimension_numbers<[1], [0], [0], [1], [0, 0, 1, 1], [], []>} : vector<64x256xbf16>, vector<256x128xbf16>, vector<64x128xf32> -> vector<64x128xf32>
    %93 = arith.addf %87, %92 : vector<64x128xf32>
    %c0_100 = arith.constant 0 : index
    %c0_101 = arith.constant 0 : index
    %94 = vector.load %arg5[%c0_100, %c0_101] : memref<1x128xf32, #tpu.memory_space<vmem>>, vector<1x128xf32>
    %95 = vector.broadcast %94 : vector<1x128xf32> to vector<64x128xf32>
    %96 = arith.addf %93, %95 : vector<64x128xf32>
    %cst_102 = arith.constant 0.000000e+00 : f32
    %97 = vector.broadcast %cst_102 : f32 to vector<64x128xf32>
    %98 = arith.cmpf oge, %96, %97 : vector<64x128xf32>
    %cst_103 = arith.constant 1.000000e-01 : f32
    %99 = vector.broadcast %cst_103 : f32 to vector<64x128xf32>
    %100 = arith.mulf %99, %96 : vector<64x128xf32>
    %101 = arith.select %98, %96, %100 : vector<64x128xi1>, vector<64x128xf32>
    %102 = vector.shape_cast %101 : vector<64x128xf32> to vector<8x8x128xf32>
    %103 = arith.truncf %102 : vector<8x8x128xf32> to vector<8x8x128xbf16>
    %c1_104 = arith.constant 1 : index
    %c1_105 = arith.constant 1 : index
    %c0_106 = arith.constant 0 : index
    %104 = vector.load %arg10[%c1_104, %c1_105, %c0_106] : memref<10x10x128xbf16, #tpu.memory_space<vmem>>, vector<8x8x128xbf16>
    tpu.vector_store %arg10[%c1_104, %c1_105, %c0_106], %103 {strides = array<i32>} : memref<10x10x128xbf16, #tpu.memory_space<vmem>>, vector<8x8x128xbf16>,
    %cst_107 = arith.constant 0.000000e+00 : f32
    %105 = vector.broadcast %cst_107 : f32 to vector<64x128xf32>
    %c0_108 = arith.constant 0 : index
    %c0_109 = arith.constant 0 : index
    %c0_110 = arith.constant 0 : index
    %106 = vector.load %arg10[%c0_108, %c0_109, %c0_110] : memref<10x10x128xbf16, #tpu.memory_space<vmem>>, vector<8x8x128xbf16>
    %107 = vector.shape_cast %106 : vector<8x8x128xbf16> to vector<64x128xbf16>
    %c0_111 = arith.constant 0 : index
    %c0_112 = arith.constant 0 : index
    %c0_113 = arith.constant 0 : index
    %108 = vector.load %arg6[%c0_111, %c0_112, %c0_113] : memref<9x128x128xbf16, #tpu.memory_space<vmem>>, vector<1x128x128xbf16>
    %109 = vector.shape_cast %108 : vector<1x128x128xbf16> to vector<128x128xbf16>
    %cst_114 = arith.constant dense<0.000000e+00> : vector<64x128xf32>
    %110 = tpu.matmul %107, %109, %cst_114 {dimension_numbers = #tpu.dot_dimension_numbers<[1], [0], [0], [1], [0, 0, 1, 1], [], []>} : vector<64x128xbf16>, vector<128x128xbf16>, vector<64x128xf32> -> vector<64x128xf32>
    %111 = arith.addf %105, %110 : vector<64x128xf32>
    %c0_115 = arith.constant 0 : index
    %c1_116 = arith.constant 1 : index
    %c0_117 = arith.constant 0 : index
    %112 = vector.load %arg10[%c0_115, %c1_116, %c0_117] : memref<10x10x128xbf16, #tpu.memory_space<vmem>>, vector<8x8x128xbf16>
    %113 = vector.shape_cast %112 : vector<8x8x128xbf16> to vector<64x128xbf16>
    %c1_118 = arith.constant 1 : index
    %c0_119 = arith.constant 0 : index
    %c0_120 = arith.constant 0 : index
    %114 = vector.load %arg6[%c1_118, %c0_119, %c0_120] : memref<9x128x128xbf16, #tpu.memory_space<vmem>>, vector<1x128x128xbf16>
    %115 = vector.shape_cast %114 : vector<1x128x128xbf16> to vector<128x128xbf16>
    %cst_121 = arith.constant dense<0.000000e+00> : vector<64x128xf32>
    %116 = tpu.matmul %113, %115, %cst_121 {dimension_numbers = #tpu.dot_dimension_numbers<[1], [0], [0], [1], [0, 0, 1, 1], [], []>} : vector<64x128xbf16>, vector<128x128xbf16>, vector<64x128xf32> -> vector<64x128xf32>
    %117 = arith.addf %111, %116 : vector<64x128xf32>
    %c0_122 = arith.constant 0 : index
    %c2_123 = arith.constant 2 : index
    %c0_124 = arith.constant 0 : index
    %118 = vector.load %arg10[%c0_122, %c2_123, %c0_124] : memref<10x10x128xbf16, #tpu.memory_space<vmem>>, vector<8x8x128xbf16>
    %119 = vector.shape_cast %118 : vector<8x8x128xbf16> to vector<64x128xbf16>
    %c2_125 = arith.constant 2 : index
    %c0_126 = arith.constant 0 : index
    %c0_127 = arith.constant 0 : index
    %120 = vector.load %arg6[%c2_125, %c0_126, %c0_127] : memref<9x128x128xbf16, #tpu.memory_space<vmem>>, vector<1x128x128xbf16>
    %121 = vector.shape_cast %120 : vector<1x128x128xbf16> to vector<128x128xbf16>
    %cst_128 = arith.constant dense<0.000000e+00> : vector<64x128xf32>
    %122 = tpu.matmul %119, %121, %cst_128 {dimension_numbers = #tpu.dot_dimension_numbers<[1], [0], [0], [1], [0, 0, 1, 1], [], []>} : vector<64x128xbf16>, vector<128x128xbf16>, vector<64x128xf32> -> vector<64x128xf32>
    %123 = arith.addf %117, %122 : vector<64x128xf32>
    %c1_129 = arith.constant 1 : index
    %c0_130 = arith.constant 0 : index
    %c0_131 = arith.constant 0 : index
    %124 = vector.load %arg10[%c1_129, %c0_130, %c0_131] : memref<10x10x128xbf16, #tpu.memory_space<vmem>>, vector<8x8x128xbf16>
    %125 = vector.shape_cast %124 : vector<8x8x128xbf16> to vector<64x128xbf16>
    %c3_132 = arith.constant 3 : index
    %c0_133 = arith.constant 0 : index
    %c0_134 = arith.constant 0 : index
    %126 = vector.load %arg6[%c3_132, %c0_133, %c0_134] : memref<9x128x128xbf16, #tpu.memory_space<vmem>>, vector<1x128x128xbf16>
    %127 = vector.shape_cast %126 : vector<1x128x128xbf16> to vector<128x128xbf16>
    %cst_135 = arith.constant dense<0.000000e+00> : vector<64x128xf32>
    %128 = tpu.matmul %125, %127, %cst_135 {dimension_numbers = #tpu.dot_dimension_numbers<[1], [0], [0], [1], [0, 0, 1, 1], [], []>} : vector<64x128xbf16>, vector<128x128xbf16>, vector<64x128xf32> -> vector<64x128xf32>
    %129 = arith.addf %123, %128 : vector<64x128xf32>
    %c1_136 = arith.constant 1 : index
    %c1_137 = arith.constant 1 : index
    %c0_138 = arith.constant 0 : index
    %130 = vector.load %arg10[%c1_136, %c1_137, %c0_138] : memref<10x10x128xbf16, #tpu.memory_space<vmem>>, vector<8x8x128xbf16>
    %131 = vector.shape_cast %130 : vector<8x8x128xbf16> to vector<64x128xbf16>
    %c4 = arith.constant 4 : index
    %c0_139 = arith.constant 0 : index
    %c0_140 = arith.constant 0 : index
    %132 = vector.load %arg6[%c4, %c0_139, %c0_140] : memref<9x128x128xbf16, #tpu.memory_space<vmem>>, vector<1x128x128xbf16>
    %133 = vector.shape_cast %132 : vector<1x128x128xbf16> to vector<128x128xbf16>
    %cst_141 = arith.constant dense<0.000000e+00> : vector<64x128xf32>
    %134 = tpu.matmul %131, %133, %cst_141 {dimension_numbers = #tpu.dot_dimension_numbers<[1], [0], [0], [1], [0, 0, 1, 1], [], []>} : vector<64x128xbf16>, vector<128x128xbf16>, vector<64x128xf32> -> vector<64x128xf32>
    %135 = arith.addf %129, %134 : vector<64x128xf32>
    %c1_142 = arith.constant 1 : index
    %c2_143 = arith.constant 2 : index
    %c0_144 = arith.constant 0 : index
    %136 = vector.load %arg10[%c1_142, %c2_143, %c0_144] : memref<10x10x128xbf16, #tpu.memory_space<vmem>>, vector<8x8x128xbf16>
    %137 = vector.shape_cast %136 : vector<8x8x128xbf16> to vector<64x128xbf16>
    %c5 = arith.constant 5 : index
    %c0_145 = arith.constant 0 : index
    %c0_146 = arith.constant 0 : index
    %138 = vector.load %arg6[%c5, %c0_145, %c0_146] : memref<9x128x128xbf16, #tpu.memory_space<vmem>>, vector<1x128x128xbf16>
    %139 = vector.shape_cast %138 : vector<1x128x128xbf16> to vector<128x128xbf16>
    %cst_147 = arith.constant dense<0.000000e+00> : vector<64x128xf32>
    %140 = tpu.matmul %137, %139, %cst_147 {dimension_numbers = #tpu.dot_dimension_numbers<[1], [0], [0], [1], [0, 0, 1, 1], [], []>} : vector<64x128xbf16>, vector<128x128xbf16>, vector<64x128xf32> -> vector<64x128xf32>
    %141 = arith.addf %135, %140 : vector<64x128xf32>
    %c2_148 = arith.constant 2 : index
    %c0_149 = arith.constant 0 : index
    %c0_150 = arith.constant 0 : index
    %142 = vector.load %arg10[%c2_148, %c0_149, %c0_150] : memref<10x10x128xbf16, #tpu.memory_space<vmem>>, vector<8x8x128xbf16>
    %143 = vector.shape_cast %142 : vector<8x8x128xbf16> to vector<64x128xbf16>
    %c6 = arith.constant 6 : index
    %c0_151 = arith.constant 0 : index
    %c0_152 = arith.constant 0 : index
    %144 = vector.load %arg6[%c6, %c0_151, %c0_152] : memref<9x128x128xbf16, #tpu.memory_space<vmem>>, vector<1x128x128xbf16>
    %145 = vector.shape_cast %144 : vector<1x128x128xbf16> to vector<128x128xbf16>
    %cst_153 = arith.constant dense<0.000000e+00> : vector<64x128xf32>
    %146 = tpu.matmul %143, %145, %cst_153 {dimension_numbers = #tpu.dot_dimension_numbers<[1], [0], [0], [1], [0, 0, 1, 1], [], []>} : vector<64x128xbf16>, vector<128x128xbf16>, vector<64x128xf32> -> vector<64x128xf32>
    %147 = arith.addf %141, %146 : vector<64x128xf32>
    %c2_154 = arith.constant 2 : index
    %c1_155 = arith.constant 1 : index
    %c0_156 = arith.constant 0 : index
    %148 = vector.load %arg10[%c2_154, %c1_155, %c0_156] : memref<10x10x128xbf16, #tpu.memory_space<vmem>>, vector<8x8x128xbf16>
    %149 = vector.shape_cast %148 : vector<8x8x128xbf16> to vector<64x128xbf16>
    %c7 = arith.constant 7 : index
    %c0_157 = arith.constant 0 : index
    %c0_158 = arith.constant 0 : index
    %150 = vector.load %arg6[%c7, %c0_157, %c0_158] : memref<9x128x128xbf16, #tpu.memory_space<vmem>>, vector<1x128x128xbf16>
    %151 = vector.shape_cast %150 : vector<1x128x128xbf16> to vector<128x128xbf16>
    %cst_159 = arith.constant dense<0.000000e+00> : vector<64x128xf32>
    %152 = tpu.matmul %149, %151, %cst_159 {dimension_numbers = #tpu.dot_dimension_numbers<[1], [0], [0], [1], [0, 0, 1, 1], [], []>} : vector<64x128xbf16>, vector<128x128xbf16>, vector<64x128xf32> -> vector<64x128xf32>
    %153 = arith.addf %147, %152 : vector<64x128xf32>
    %c2_160 = arith.constant 2 : index
    %c2_161 = arith.constant 2 : index
    %c0_162 = arith.constant 0 : index
    %154 = vector.load %arg10[%c2_160, %c2_161, %c0_162] : memref<10x10x128xbf16, #tpu.memory_space<vmem>>, vector<8x8x128xbf16>
    %155 = vector.shape_cast %154 : vector<8x8x128xbf16> to vector<64x128xbf16>
    %c8_163 = arith.constant 8 : index
    %c0_164 = arith.constant 0 : index
    %c0_165 = arith.constant 0 : index
    %156 = vector.load %arg6[%c8_163, %c0_164, %c0_165] : memref<9x128x128xbf16, #tpu.memory_space<vmem>>, vector<1x128x128xbf16>
    %157 = vector.shape_cast %156 : vector<1x128x128xbf16> to vector<128x128xbf16>
    %cst_166 = arith.constant dense<0.000000e+00> : vector<64x128xf32>
    %158 = tpu.matmul %155, %157, %cst_166 {dimension_numbers = #tpu.dot_dimension_numbers<[1], [0], [0], [1], [0, 0, 1, 1], [], []>} : vector<64x128xbf16>, vector<128x128xbf16>, vector<64x128xf32> -> vector<64x128xf32>
    %159 = arith.addf %153, %158 : vector<64x128xf32>
    %c0_167 = arith.constant 0 : index
    %c0_168 = arith.constant 0 : index
    %160 = vector.load %arg7[%c0_167, %c0_168] : memref<1x128xf32, #tpu.memory_space<vmem>>, vector<1x128xf32>
    %161 = vector.broadcast %160 : vector<1x128xf32> to vector<64x128xf32>
    %162 = arith.addf %159, %161 : vector<64x128xf32>
    %cst_169 = arith.constant 0.000000e+00 : f32
    %163 = vector.broadcast %cst_169 : f32 to vector<64x128xf32>
    %164 = arith.cmpf oge, %162, %163 : vector<64x128xf32>
    %cst_170 = arith.constant 1.000000e-01 : f32
    %165 = vector.broadcast %cst_170 : f32 to vector<64x128xf32>
    %166 = arith.mulf %165, %162 : vector<64x128xf32>
    %167 = arith.select %164, %162, %166 : vector<64x128xi1>, vector<64x128xf32>
    %168 = tpu.transpose %167, [1, 0] : vector<64x128xf32> -> vector<128x64xf32>
    %169 = vector.shape_cast %168 : vector<128x64xf32> to vector<1x128x64xf32>
    %c0_171 = arith.constant 0 : index
    %c0_172 = arith.constant 0 : index
    %c0_173 = arith.constant 0 : index
    %170 = vector.load %arg8[%c0_171, %c0_172, %c0_173] : memref<1x128x64xf32, #tpu.memory_space<vmem>>, vector<1x128x64xf32>
    tpu.vector_store %arg8[%c0_171, %c0_172, %c0_173], %169 {strides = array<i32>} : memref<1x128x64xf32, #tpu.memory_space<vmem>>, vector<1x128x64xf32>,
    return
  }
  func.func @transform_0(%arg0: i32) -> (i32, i32, i32, i32) {
    %c0_i32 = arith.constant 0 : i32
    %c0_i32_0 = arith.constant 0 : i32
    %c0_i32_1 = arith.constant 0 : i32
    %c0_i32_2 = arith.constant 0 : i32
    return %arg0, %c0_i32, %c0_i32_0, %c0_i32_1 : i32, i32, i32, i32
  }
  func.func @transform_1(%arg0: i32) -> (i32, i32, i32) {
    %c0_i32 = arith.constant 0 : i32
    %c0_i32_0 = arith.constant 0 : i32
    %c0_i32_1 = arith.constant 0 : i32
    %c0_i32_2 = arith.constant 0 : i32
    return %c0_i32, %c0_i32_0, %c0_i32_1 : i32, i32, i32
  }
  func.func @transform_2(%arg0: i32) -> (i32, i32) {
    %c0_i32 = arith.constant 0 : i32
    %c0_i32_0 = arith.constant 0 : i32
    %c0_i32_1 = arith.constant 0 : i32
    return %c0_i32, %c0_i32_0 : i32, i32
  }
  func.func @transform_3(%arg0: i32) -> (i32, i32, i32) {
    %c0_i32 = arith.constant 0 : i32
    %c0_i32_0 = arith.constant 0 : i32
    %c0_i32_1 = arith.constant 0 : i32
    %c0_i32_2 = arith.constant 0 : i32
    return %c0_i32, %c0_i32_0, %c0_i32_1 : i32, i32, i32
  }
  func.func @transform_4(%arg0: i32) -> (i32, i32) {
    %c0_i32 = arith.constant 0 : i32
    %c0_i32_0 = arith.constant 0 : i32
    %c0_i32_1 = arith.constant 0 : i32
    return %c0_i32, %c0_i32_0 : i32, i32
  }
  func.func @transform_5(%arg0: i32) -> (i32, i32, i32) {
    %c0_i32 = arith.constant 0 : i32
    %c0_i32_0 = arith.constant 0 : i32
    %c0_i32_1 = arith.constant 0 : i32
    %c0_i32_2 = arith.constant 0 : i32
    return %c0_i32, %c0_i32_0, %c0_i32_1 : i32, i32, i32
  }
  func.func @transform_6(%arg0: i32) -> (i32, i32) {
    %c0_i32 = arith.constant 0 : i32
    %c0_i32_0 = arith.constant 0 : i32
    %c0_i32_1 = arith.constant 0 : i32
    return %c0_i32, %c0_i32_0 : i32, i32
  }
  func.func @transform_7(%arg0: i32) -> (i32, i32, i32) {
    %c0_i32 = arith.constant 0 : i32
    %c0_i32_0 = arith.constant 0 : i32
    %c0_i32_1 = arith.constant 0 : i32
    return %arg0, %c0_i32, %c0_i32_0 : i32, i32, i32
  }
}

</mosaic_0001>

<llo_original>
// kernel: tile.8
$region0: #{tile.8}
  #allocation0 [shape = 's32[1]{0}', space=sflag, size = 0x4, scoped, tag = 'scoped memory for tile.8']
  %s0 = inlined_call_operand.vmem [shape: f32[64], index: 0, kind: input, shape index: {}]
  %s1 = inlined_call_operand.vmem [shape: f32[4,64], index: 1, kind: output, shape index: {}]
  // Predicated region
  $region2: #{tile.8} parent=0 // pred_check
    _
  $region3: #{tile.8} parent=0 // pred_check_branch
    %3 = sbr.rel (0) target = $region5
  $region4: #{tile.8} parent=0 // pred_region
    _
  $region5: #{tile.8} parent=0 // pred_fallthru
    _
  %v4 = vld [vmem:[%s0] ss:$0 sm:$0xff]
  %5 = vst [vmem:[%s1] sm:$0xf] %v4

// kernel: tile.9
$region0: #{tile.9}
  %s0 = inlined_call_operand.vmem [shape: f32[4,64], index: 0, kind: input, shape index: {}]
  %s1 = inlined_call_operand.vmem [shape: f32[1,256], index: 1, kind: output, shape index: {}]
  $region1: #{tile.9} parent=0
    #allocation0 [shape = 'u8[8192]{0}', space=vmem, size = 0x2000, scoped, tag = 'scoped mem for output reshape']
    #allocation1 [shape = 'u8[4096]{0}', space=vmem, size = 0x1000, scoped, tag = 'scoped mem for input reshape']
    %s3 = sshllo.u32 0, 4
    %v4 = vld [vmem:[%s0] sm:%s3]
    %5 = vst [vmem:[#allocation1] sm:%s3] %v4
    %s6 = smov 3
    %v7 = vld [vmem:[#allocation1] ss:$2 sm:%s6]
    %vm8 = vcmask 523264
    %9 = vst.msk [vmem:[#allocation0] ss:$8 sm:$0x3] %vm8, %v7
    %s10 = scalar_lea.vmem [#allocation1], 1
    %s11 = smov 3
    %v12 = vld [vmem:[%s10] ss:$2 sm:%s11]
    %13 = vrot.lane.b32.xlu0 %v12, 64
    %v14 = vpop.permute.xlu0 %13
    %vm15 = vcmask 1048064
    %16 = vst.msk [vmem:[#allocation0] ss:$8 sm:$0x3] %vm15, %v14
    %s18 = sshllo.u32 0, 1
    %v20 = vld [vmem:[#allocation0] sm:%s18]
    %s21 = sshllo.u32 0, 1
    %22 = vst [vmem:[%s1] sm:%s21] %v20
    %s23 = scalar_lea.vmem [#allocation0], 8
    %v24 = vld [vmem:[%s23] sm:%s18]
    %s25 = sshllo.u32 0, 1
    %s26 = scalar_lea.vmem %s1, 1
    %27 = vst [vmem:[%s26] sm:%s25] %v24

// kernel: feat_extractor1_forward.1
$region0: #{feat_extractor1_forward.1}
  #allocation0 [shape = 'u32[]', space=smem, size = 0x4, offset = 0x4, fixed_abs, tag = 'smem constant byte address 0x4 - core index']
  #allocation1 [shape = 'u32[144,128]{1,0:T(1,128)}', space=vmem, size = 0x12000, scoped, tag = 'internal scratch']
  #allocation2 [shape = 'bf16[9,9,256]{2,1,0:T(8,128)(2,1)}', space=vmem, size = 0x12000, scoped, tag = 'scratch operand']
  #allocation3 [shape = 'bf16[10,10,128]{2,1,0:T(8,128)(2,1)}', space=vmem, size = 0xa000, scoped, tag = 'scratch operand']
  %s0 = inlined_call_operand.vmem [shape: bf16[2,9,9,12], index: 0, kind: input, shape index: {}]
  %s1 = inlined_call_operand.vmem [shape: bf16[4,12,256], index: 1, kind: input, shape index: {}]
  %s2 = inlined_call_operand.vmem [shape: f32[1,256], index: 2, kind: input, shape index: {}]
  %s3 = inlined_call_operand.vmem [shape: bf16[4,256,128], index: 3, kind: input, shape index: {}]
  %s4 = inlined_call_operand.vmem [shape: f32[1,128], index: 4, kind: input, shape index: {}]
  %s5 = inlined_call_operand.vmem [shape: bf16[9,128,128], index: 5, kind: input, shape index: {}]
  %s6 = inlined_call_operand.vmem [shape: f32[1,128], index: 6, kind: input, shape index: {}]
  %s7 = inlined_call_operand.vmem [shape: f32[2,128,64], index: 7, kind: output, shape index: {}]
  %s8 = sld [smem:[#allocation0]]
  $region61: #{feat_extractor1_forward.1} parent=0
    _
  %s10 = ssub.s32 1, %s8
  %s11 = scalar_select 0, %s10, %s8
  loop: start=0, step=1, limit=4
  $region2: #{feat_extractor1_forward.1} parent=0 // loop_pre_header
    _
  $region3: #{feat_extractor1_forward.1} parent=0 // loop_header
    %s13 = sphi 0, %s17
    %p14 = scmp.ge.s32.totalorder %s13, 4
    %s23 = sphi 0, %s25
    %s26 = sphi 0, %s23
    %s27 = sphi 0, %s26
    %s43 = sphi 0, %s27
    %s47 = sphi 0, %s47
    %s49 = sphi 0, %s47
    %s50 = sphi 0, %s49
    %s64 = sphi 0, %s50
    %s68 = sphi 0, %s68
    %s70 = sphi 0, %s68
    %s71 = sphi 0, %s70
    %s85 = sphi 0, %s71
    %s89 = sphi 0, %s89
    %s91 = sphi 0, %s89
    %s92 = sphi 0, %s91
    %s106 = sphi 0, %s92
    %s110 = sphi 0, %s110
    %s112 = sphi 0, %s110
    %s113 = sphi 0, %s112
    %s127 = sphi 0, %s113
    %s131 = sphi 0, %s131
    %s133 = sphi 0, %s131
    %s134 = sphi 0, %s133
    %s148 = sphi 0, %s134
    %s152 = sphi 0, %s152
    %s154 = sphi 0, %s152
    %s155 = sphi 0, %s154
    %s169 = sphi 0, %s155
    %s175 = sphi 0, %s177
    %s178 = sphi 0, %s175
    %s179 = sphi 0, %s178
    %s195 = sphi 0, %s179
  $region4: #{feat_extractor1_forward.1} parent=0 // loop_header_branch
    %16 = sbr.rel (%p14) target = $region8
  $region5: #{feat_extractor1_forward.1} parent=0 // loop_body
    %s18 = ssub.s32 %s13, 1
    %s19 = ssub.s32 %s13, 2
    %s20 = sadd.s32 %s13, 1
    %s21 = ssub.s32 %s13, %s20
    %p22 = scmp.eq.s32.totalorder %s21, 0
    %s24 = sadd.s32 %s23, 1
    %s25 = scalar_select %p22, %s23, %s24
    %p28 = pneg %p22
    %p29 = scmp.eq.s32.totalorder %s13, 1
    %p30 = por %p28, %p29
    %p31 = scmp.ne.s32.totalorder %s23, %s26
    %p32 = scmp.eq.s32.totalorder %s13, 0
    %p33 = por %p31, %p32
    %p34 = scmp.ne.s32.totalorder %s23, %s26
    %p35 = scmp.eq.s32.totalorder %s18, 1
    %p36 = por %p34, %p35
    %p37 = scmp.ne.s32.totalorder %s26, %s27
    %p38 = scmp.eq.s32.totalorder %s18, 0
    %p39 = por %p37, %p38
    %p40 = scmp.ne.s32.totalorder %s26, %s27
    %p41 = scmp.eq.s32.totalorder %s19, 1
    %p42 = por %p40, %p41
    %p44 = scmp.ne.s32.totalorder %s27, %s43
    %p45 = scmp.eq.s32.totalorder %s19, 0
    %p46 = por %p44, %p45
    %s48 = sadd.s32 %s47, 1
    %p51 = scmp.eq.s32.totalorder %s13, 1
    %p52 = scmp.ne.s32.totalorder %s47, %s49
    %p53 = scmp.eq.s32.totalorder %s13, 0
    %p54 = por %p52, %p53
    %p55 = scmp.ne.s32.totalorder %s47, %s49
    %p56 = scmp.eq.s32.totalorder %s18, 1
    %p57 = por %p55, %p56
    %p58 = scmp.ne.s32.totalorder %s49, %s50
    %p59 = scmp.eq.s32.totalorder %s18, 0
    %p60 = por %p58, %p59
    %p61 = scmp.ne.s32.totalorder %s49, %s50
    %p62 = scmp.eq.s32.totalorder %s19, 1
    %p63 = por %p61, %p62
    %p65 = scmp.ne.s32.totalorder %s50, %s64
    %p66 = scmp.eq.s32.totalorder %s19, 0
    %p67 = por %p65, %p66
    %s69 = sadd.s32 %s68, 1
    %p72 = scmp.eq.s32.totalorder %s13, 1
    %p73 = scmp.ne.s32.totalorder %s68, %s70
    %p74 = scmp.eq.s32.totalorder %s13, 0
    %p75 = por %p73, %p74
    %p76 = scmp.ne.s32.totalorder %s68, %s70
    %p77 = scmp.eq.s32.totalorder %s18, 1
    %p78 = por %p76, %p77
    %p79 = scmp.ne.s32.totalorder %s70, %s71
    %p80 = scmp.eq.s32.totalorder %s18, 0
    %p81 = por %p79, %p80
    %p82 = scmp.ne.s32.totalorder %s70, %s71
    %p83 = scmp.eq.s32.totalorder %s19, 1
    %p84 = por %p82, %p83
    %p86 = scmp.ne.s32.totalorder %s71, %s85
    %p87 = scmp.eq.s32.totalorder %s19, 0
    %p88 = por %p86, %p87
    %s90 = sadd.s32 %s89, 1
    %p93 = scmp.eq.s32.totalorder %s13, 1
    %p94 = scmp.ne.s32.totalorder %s89, %s91
    %p95 = scmp.eq.s32.totalorder %s13, 0
    %p96 = por %p94, %p95
    %p97 = scmp.ne.s32.totalorder %s89, %s91
    %p98 = scmp.eq.s32.totalorder %s18, 1
    %p99 = por %p97, %p98
    %p100 = scmp.ne.s32.totalorder %s91, %s92
    %p101 = scmp.eq.s32.totalorder %s18, 0
    %p102 = por %p100, %p101
    %p103 = scmp.ne.s32.totalorder %s91, %s92
    %p104 = scmp.eq.s32.totalorder %s19, 1
    %p105 = por %p103, %p104
    %p107 = scmp.ne.s32.totalorder %s92, %s106
    %p108 = scmp.eq.s32.totalorder %s19, 0
    %p109 = por %p107, %p108
    %s111 = sadd.s32 %s110, 1
    %p114 = scmp.eq.s32.totalorder %s13, 1
    %p115 = scmp.ne.s32.totalorder %s110, %s112
    %p116 = scmp.eq.s32.totalorder %s13, 0
    %p117 = por %p115, %p116
    %p118 = scmp.ne.s32.totalorder %s110, %s112
    %p119 = scmp.eq.s32.totalorder %s18, 1
    %p120 = por %p118, %p119
    %p121 = scmp.ne.s32.totalorder %s112, %s113
    %p122 = scmp.eq.s32.totalorder %s18, 0
    %p123 = por %p121, %p122
    %p124 = scmp.ne.s32.totalorder %s112, %s113
    %p125 = scmp.eq.s32.totalorder %s19, 1
    %p126 = por %p124, %p125
    %p128 = scmp.ne.s32.totalorder %s113, %s127
    %p129 = scmp.eq.s32.totalorder %s19, 0
    %p130 = por %p128, %p129
    %s132 = sadd.s32 %s131, 1
    %p135 = scmp.eq.s32.totalorder %s13, 1
    %p136 = scmp.ne.s32.totalorder %s131, %s133
    %p137 = scmp.eq.s32.totalorder %s13, 0
    %p138 = por %p136, %p137
    %p139 = scmp.ne.s32.totalorder %s131, %s133
    %p140 = scmp.eq.s32.totalorder %s18, 1
    %p141 = por %p139, %p140
    %p142 = scmp.ne.s32.totalorder %s133, %s134
    %p143 = scmp.eq.s32.totalorder %s18, 0
    %p144 = por %p142, %p143
    %p145 = scmp.ne.s32.totalorder %s133, %s134
    %p146 = scmp.eq.s32.totalorder %s19, 1
    %p147 = por %p145, %p146
    %p149 = scmp.ne.s32.totalorder %s134, %s148
    %p150 = scmp.eq.s32.totalorder %s19, 0
    %p151 = por %p149, %p150
    %s153 = sadd.s32 %s152, 1
    %p156 = scmp.eq.s32.totalorder %s13, 1
    %p157 = scmp.ne.s32.totalorder %s152, %s154
    %p158 = scmp.eq.s32.totalorder %s13, 0
    %p159 = por %p157, %p158
    %p160 = scmp.ne.s32.totalorder %s152, %s154
    %p161 = scmp.eq.s32.totalorder %s18, 1
    %p162 = por %p160, %p161
    %p163 = scmp.ne.s32.totalorder %s154, %s155
    %p164 = scmp.eq.s32.totalorder %s18, 0
    %p165 = por %p163, %p164
    %p166 = scmp.ne.s32.totalorder %s154, %s155
    %p167 = scmp.eq.s32.totalorder %s19, 1
    %p168 = por %p166, %p167
    %p170 = scmp.ne.s32.totalorder %s155, %s169
    %p171 = scmp.eq.s32.totalorder %s19, 0
    %p172 = por %p170, %p171
    %s173 = ssub.s32 %s13, %s20
    %p174 = scmp.eq.s32.totalorder %s173, 0
    %s176 = sadd.s32 %s175, 1
    %s177 = scalar_select %p174, %s175, %s176
    %p180 = pneg %p174
    %p181 = scmp.eq.s32.totalorder %s13, 1
    %p182 = por %p180, %p181
    %p183 = scmp.ne.s32.totalorder %s175, %s178
    %p184 = scmp.eq.s32.totalorder %s13, 0
    %p185 = por %p183, %p184
    %p186 = scmp.ne.s32.totalorder %s175, %s178
    %p187 = scmp.eq.s32.totalorder %s18, 1
    %p188 = por %p186, %p187
    %p189 = scmp.ne.s32.totalorder %s178, %s179
    %p190 = scmp.eq.s32.totalorder %s18, 0
    %p191 = por %p189, %p190
    %p192 = scmp.ne.s32.totalorder %s178, %s179
    %p193 = scmp.eq.s32.totalorder %s19, 1
    %p194 = por %p192, %p193
    %p196 = scmp.ne.s32.totalorder %s179, %s195
    %p197 = scmp.eq.s32.totalorder %s19, 0
    %p198 = por %p196, %p197
    %p199 = scmp.le.s32.totalorder 1, %s13
    %p200 = scmp.lt.s32.totalorder %s13, 3
    %p201 = pnand %p199, %p200
    %p202 = pneg %p201
    // Predicated region
    $region9: #{feat_extractor1_forward.1} parent=5 // pred_check
      _
    $region10: #{feat_extractor1_forward.1} parent=5 // pred_check_branch
      %204 = sbr.rel (%p201) target = $region12
    $region11: #{feat_extractor1_forward.1} parent=5 // pred_region
      %s205 = ssub.s32 %s13, 1
      // Predicated region
      $region13: #{feat_extractor1_forward.1} parent=11 // pred_check
        %p206 = pneg %p60
      $region14: #{feat_extractor1_forward.1} parent=11 // pred_check_branch
        %208 = sbr.rel (%p206) target = $region16
      $region15: #{feat_extractor1_forward.1} parent=11 // pred_region
        _
      $region16: #{feat_extractor1_forward.1} parent=11 // pred_fallthru
        _
      // Predicated region
      $region17: #{feat_extractor1_forward.1} parent=11 // pred_check
        %p209 = pneg %p81
      $region18: #{feat_extractor1_forward.1} parent=11 // pred_check_branch
        %211 = sbr.rel (%p209) target = $region20
      $region19: #{feat_extractor1_forward.1} parent=11 // pred_region
        _
      $region20: #{feat_extractor1_forward.1} parent=11 // pred_fallthru
        _
      // Predicated region
      $region21: #{feat_extractor1_forward.1} parent=11 // pred_check
        %p212 = pneg %p102
      $region22: #{feat_extractor1_forward.1} parent=11 // pred_check_branch
        %214 = sbr.rel (%p212) target = $region24
      $region23: #{feat_extractor1_forward.1} parent=11 // pred_region
        _
      $region24: #{feat_extractor1_forward.1} parent=11 // pred_fallthru
        _
      // Predicated region
      $region25: #{feat_extractor1_forward.1} parent=11 // pred_check
        %p215 = pneg %p123
      $region26: #{feat_extractor1_forward.1} parent=11 // pred_check_branch
        %217 = sbr.rel (%p215) target = $region28
      $region27: #{feat_extractor1_forward.1} parent=11 // pred_region
        _
      $region28: #{feat_extractor1_forward.1} parent=11 // pred_fallthru
        _
      // Predicated region
      $region29: #{feat_extractor1_forward.1} parent=11 // pred_check
        %p218 = pneg %p144
      $region30: #{feat_extractor1_forward.1} parent=11 // pred_check_branch
        %220 = sbr.rel (%p218) target = $region32
      $region31: #{feat_extractor1_forward.1} parent=11 // pred_region
        _
      $region32: #{feat_extractor1_forward.1} parent=11 // pred_fallthru
        _
      // Predicated region
      $region33: #{feat_extractor1_forward.1} parent=11 // pred_check
        %p221 = pneg %p165
      $region34: #{feat_extractor1_forward.1} parent=11 // pred_check_branch
        %223 = sbr.rel (%p221) target = $region36
      $region35: #{feat_extractor1_forward.1} parent=11 // pred_region
        _
      $region36: #{feat_extractor1_forward.1} parent=11 // pred_fallthru
        _
    $region12: #{feat_extractor1_forward.1} parent=5 // pred_fallthru
      _
    %p224 = scmp.lt.s32.totalorder %s13, 2
    // Predicated region
    $region37: #{feat_extractor1_forward.1} parent=5 // pred_check
      %p225 = pneg %p224
    $region38: #{feat_extractor1_forward.1} parent=5 // pred_check_branch
      %227 = sbr.rel (%p225) target = $region40
    $region39: #{feat_extractor1_forward.1} parent=5 // pred_region
      // Predicated region
      $region41: #{feat_extractor1_forward.1} parent=39 // pred_check
        %p228 = pneg %p33
      $region42: #{feat_extractor1_forward.1} parent=39 // pred_check_branch
        %230 = sbr.rel (%p228) target = $region44
      $region43: #{feat_extractor1_forward.1} parent=39 // pred_region
        %p231 = scmp.lt.s32.totalorder %s13, 1
        %s232 = scalar_select %p231, %s13, 1
        %s233 = smul.addr %s232, 18
        %s234 = smul.addr %s233, 4
        %s235 = scalar_lea.vmem %s0, %s234
      $region44: #{feat_extractor1_forward.1} parent=39 // pred_fallthru
        _
    $region40: #{feat_extractor1_forward.1} parent=5 // pred_fallthru
      _
    %p236 = scmp.le.s32.totalorder 1, %s13
    %p237 = scmp.lt.s32.totalorder %s13, 3
    %p238 = pnand %p236, %p237
    %p239 = pneg %p238
    // Predicated region
    $region45: #{feat_extractor1_forward.1} parent=5 // pred_check
      _
    $region46: #{feat_extractor1_forward.1} parent=5 // pred_check_branch
      %241 = sbr.rel (%p238) target = $region48
    $region47: #{feat_extractor1_forward.1} parent=5 // pred_region
      %s242 = ssub.s32 %s13, 1
      %p243 = scmp.lt.s32.totalorder %s18, 1
      %s244 = scalar_select %p243, %s18, 1
      %s245 = smul.addr %s244, 18
      %s246 = smul.addr %s245, 4
      %s247 = scalar_lea.vmem %s0, %s246
      %p248 = pneg %p39
      %p249 = pneg %p36
      %p250 = pneg %p60
      %p251 = pneg %p57
      %p252 = pneg %p81
      %p253 = pneg %p78
      %p254 = pneg %p102
      %p255 = pneg %p99
      %p256 = pneg %p123
      %p257 = pneg %p120
      %p258 = pneg %p144
      %p259 = pneg %p141
      %p260 = pneg %p165
      %p261 = pneg %p162
      %p262 = pneg %p191
      %p263 = pneg %p188
      %p264 = scmp.lt.s32.totalorder %s18, 1
      %s265 = scalar_select %p264, %s18, 1
      %s266 = smul.addr %s265, 16
      %s267 = smul.addr %s266, 8
      %s268 = scalar_lea.vmem %s7, %s267
      %p269 = scmp.lt.s32.totalorder %s18, 1
      %s270 = scalar_select %p269, %s18, 1
      %s271 = smul.addr %s270, 18
      %s272 = smul.addr %s271, 4
      %s273 = scalar_lea.vmem %s0, %s272
      %p274 = scmp.lt.s32.totalorder %s18, 1
      %s275 = scalar_select %p274, %s18, 1
      %s276 = smul.addr %s275, 16
      %s277 = smul.addr %s276, 8
      %s278 = scalar_lea.vmem %s7, %s277
      %280 = vst [vmem:[#allocation2] sm:$0xff] 0
      %vm281 = vcmask 1040384
      %vm282 = vsmask.f32 256
      %vm283 = vmand %vm281, %vm282
      %vm284 = vcmask 1044484
      %vm285 = vsmask.f32 4352
      %vm286 = vmand %vm284, %vm285
      %vm287 = vmor %vm286, %vm283
      %v288 = vld [vmem:[#allocation2 + $0x8] sm:$0x11]
      %v289 = vsel %vm287, 0, %v288
      %290 = vst [vmem:[#allocation2 + $0x8] sm:$0x11] %v289
      %s291 = scalar_lea.vmem [#allocation2], 128
      %292 = vst [vmem:[%s291] sm:$0xff] 0
      %v293 = vld [vmem:[%s291 + $0x8] sm:$0x11]
      %v294 = vsel %vm287, 0, %v293
      %295 = vst [vmem:[%s291 + $0x8] sm:$0x11] %v294
      %v296 = vld [vmem:[#allocation2] sm:$0x11]
      %v297 = vsel %vm287, 0, %v296
      %298 = vst [vmem:[#allocation2] sm:$0x11] %v297
      %v299 = vld [vmem:[#allocation2 + $0x10] sm:$0x11]
      %v300 = vsel %vm287, 0, %v299
      %301 = vst [vmem:[#allocation2 + $0x10] sm:$0x11] %v300
      %v302 = vld [vmem:[#allocation2 + $0x20] sm:$0x11]
      %v303 = vsel %vm287, 0, %v302
      %304 = vst [vmem:[#allocation2 + $0x20] sm:$0x11] %v303
      %v305 = vld [vmem:[#allocation2 + $0x30] sm:$0x11]
      %v306 = vsel %vm287, 0, %v305
      %307 = vst [vmem:[#allocation2 + $0x30] sm:$0x11] %v306
      %v308 = vld [vmem:[#allocation2 + $0x40] sm:$0x11]
      %v309 = vsel %vm287, 0, %v308
      %310 = vst [vmem:[#allocation2 + $0x40] sm:$0x11] %v309
      %v311 = vld [vmem:[#allocation2 + $0x50] sm:$0x11]
      %v312 = vsel %vm287, 0, %v311
      %313 = vst [vmem:[#allocation2 + $0x50] sm:$0x11] %v312
      %v314 = vld [vmem:[#allocation2 + $0x60] sm:$0x11]
      %v315 = vsel %vm287, 0, %v314
      %316 = vst [vmem:[#allocation2 + $0x60] sm:$0x11] %v315
      %v317 = vld [vmem:[#allocation2 + $0x70] sm:$0x11]
      %v318 = vsel %vm287, 0, %v317
      %319 = vst [vmem:[#allocation2 + $0x70] sm:$0x11] %v318
      %v320 = vld [vmem:[#allocation2 + $0x80] sm:$0x11]
      %v321 = vsel %vm287, 0, %v320
      %322 = vst [vmem:[#allocation2 + $0x80] sm:$0x11] %v321
      %v323 = vld [vmem:[#allocation2 + $0x8] sm:$0x11]
      %v324 = vsel %vm287, 0, %v323
      %325 = vst [vmem:[#allocation2 + $0x8] sm:$0x11] %v324
      %v326 = vld [vmem:[#allocation2 + $0x18] sm:$0x11]
      %v327 = vsel %vm287, 0, %v326
      %328 = vst [vmem:[#allocation2 + $0x18] sm:$0x11] %v327
      %v329 = vld [vmem:[#allocation2 + $0x28] sm:$0x11]
      %v330 = vsel %vm287, 0, %v329
      %331 = vst [vmem:[#allocation2 + $0x28] sm:$0x11] %v330
      %v332 = vld [vmem:[#allocation2 + $0x38] sm:$0x11]
      %v333 = vsel %vm287, 0, %v332
      %334 = vst [vmem:[#allocation2 + $0x38] sm:$0x11] %v333
      %v335 = vld [vmem:[#allocation2 + $0x48] sm:$0x11]
      %v336 = vsel %vm287, 0, %v335
      %337 = vst [vmem:[#allocation2 + $0x48] sm:$0x11] %v336
      %v338 = vld [vmem:[#allocation2 + $0x58] sm:$0x11]
      %v339 = vsel %vm287, 0, %v338
      %340 = vst [vmem:[#allocation2 + $0x58] sm:$0x11] %v339
      %v341 = vld [vmem:[#allocation2 + $0x68] sm:$0x11]
      %v342 = vsel %vm287, 0, %v341
      %343 = vst [vmem:[#allocation2 + $0x68] sm:$0x11] %v342
      %v344 = vld [vmem:[#allocation2 + $0x78] sm:$0x11]
      %v345 = vsel %vm287, 0, %v344
      %346 = vst [vmem:[#allocation2 + $0x78] sm:$0x11] %v345
      %v347 = vld [vmem:[#allocation2 + $0x88] sm:$0x11]
      %v348 = vsel %vm287, 0, %v347
      %349 = vst [vmem:[#allocation2 + $0x88] sm:$0x11] %v348
      %350 = vst [vmem:[#allocation3] sm:$0xf] 0
      %351 = vst [vmem:[#allocation3 + $0x4] sm:$0x1] 0
      %s352 = scalar_lea.vmem [#allocation3], 72
      %353 = vst [vmem:[%s352] sm:$0xf] 0
      %354 = vst [vmem:[%s352 + $0x4] sm:$0x1] 0
      %v355 = vld [vmem:[#allocation3] sm:$0x1]
      %v356 = vsel %vm283, 0, %v355
      %357 = vst [vmem:[#allocation3] sm:$0x1] %v356
      %v358 = vld [vmem:[#allocation3 + $0x8] sm:$0x1]
      %v359 = vsel %vm283, 0, %v358
      %360 = vst [vmem:[#allocation3 + $0x8] sm:$0x1] %v359
      %v361 = vld [vmem:[#allocation3 + $0x10] sm:$0x1]
      %v362 = vsel %vm283, 0, %v361
      %363 = vst [vmem:[#allocation3 + $0x10] sm:$0x1] %v362
      %v364 = vld [vmem:[#allocation3 + $0x18] sm:$0x1]
      %v365 = vsel %vm283, 0, %v364
      %366 = vst [vmem:[#allocation3 + $0x18] sm:$0x1] %v365
      %v367 = vld [vmem:[#allocation3 + $0x20] sm:$0x1]
      %v368 = vsel %vm283, 0, %v367
      %369 = vst [vmem:[#allocation3 + $0x20] sm:$0x1] %v368
      %v370 = vld [vmem:[#allocation3 + $0x28] sm:$0x1]
      %v371 = vsel %vm283, 0, %v370
      %372 = vst [vmem:[#allocation3 + $0x28] sm:$0x1] %v371
      %v373 = vld [vmem:[#allocation3 + $0x30] sm:$0x1]
      %v374 = vsel %vm283, 0, %v373
      %375 = vst [vmem:[#allocation3 + $0x30] sm:$0x1] %v374
      %v376 = vld [vmem:[#allocation3 + $0x38] sm:$0x1]
      %v377 = vsel %vm283, 0, %v376
      %378 = vst [vmem:[#allocation3 + $0x38] sm:$0x1] %v377
      %v379 = vld [vmem:[#allocation3 + $0x40] sm:$0x1]
      %v380 = vsel %vm283, 0, %v379
      %381 = vst [vmem:[#allocation3 + $0x40] sm:$0x1] %v380
      %v382 = vld [vmem:[#allocation3 + $0x48] sm:$0x1]
      %v383 = vsel %vm283, 0, %v382
      %384 = vst [vmem:[#allocation3 + $0x48] sm:$0x1] %v383
      %vm385 = vsmask.f32 7938
      %vm386 = vmand %vm281, %vm385
      %v387 = vld [vmem:[#allocation3 + $0x4] sm:$0x1]
      %v388 = vsel %vm386, 0, %v387
      %389 = vst [vmem:[#allocation3 + $0x4] sm:$0x1] %v388
      %v390 = vld [vmem:[#allocation3 + $0xc] sm:$0x1]
      %v391 = vsel %vm386, 0, %v390
      %392 = vst [vmem:[#allocation3 + $0xc] sm:$0x1] %v391
      %v393 = vld [vmem:[#allocation3 + $0x14] sm:$0x1]
      %v394 = vsel %vm386, 0, %v393
      %395 = vst [vmem:[#allocation3 + $0x14] sm:$0x1] %v394
      %v396 = vld [vmem:[#allocation3 + $0x1c] sm:$0x1]
      %v397 = vsel %vm386, 0, %v396
      %398 = vst [vmem:[#allocation3 + $0x1c] sm:$0x1] %v397
      %v399 = vld [vmem:[#allocation3 + $0x24] sm:$0x1]
      %v400 = vsel %vm386, 0, %v399
      %401 = vst [vmem:[#allocation3 + $0x24] sm:$0x1] %v400
      %v402 = vld [vmem:[#allocation3 + $0x2c] sm:$0x1]
      %v403 = vsel %vm386, 0, %v402
      %404 = vst [vmem:[#allocation3 + $0x2c] sm:$0x1] %v403
      %v405 = vld [vmem:[#allocation3 + $0x34] sm:$0x1]
      %v406 = vsel %vm386, 0, %v405
      %407 = vst [vmem:[#allocation3 + $0x34] sm:$0x1] %v406
      %v408 = vld [vmem:[#allocation3 + $0x3c] sm:$0x1]
      %v409 = vsel %vm386, 0, %v408
      %410 = vst [vmem:[#allocation3 + $0x3c] sm:$0x1] %v409
      %v411 = vld [vmem:[#allocation3 + $0x44] sm:$0x1]
      %v412 = vsel %vm386, 0, %v411
      %413 = vst [vmem:[#allocation3 + $0x44] sm:$0x1] %v412
      %v414 = vld [vmem:[#allocation3 + $0x4c] sm:$0x1]
      %v415 = vsel %vm386, 0, %v414
      %416 = vst [vmem:[#allocation3 + $0x4c] sm:$0x1] %v415
      %v417 = vld [vmem:[%s273] sm:$0xf]
      %v418 = vld [vmem:[%s273 + $0x8] sm:$0xf]
      %v419 = vld [vmem:[%s273 + $0x10] sm:$0xf]
      %v420 = vld [vmem:[%s273 + $0x18] sm:$0xf]
      %v421 = vld [vmem:[%s273 + $0x20] sm:$0xf]
      %v422 = vld [vmem:[%s273 + $0x28] sm:$0xf]
      %v423 = vld [vmem:[%s273 + $0x30] sm:$0xf]
      %v424 = vld [vmem:[%s273 + $0x38] sm:$0xf]
      %v425 = vld [vmem:[%s1] sm:$0xff]
      %v426 = vld [vmem:[%s1 + $0x8] sm:$0x33]
      %v427 = vld [vmem:[%s273 + $0x4] sm:$0x1]
      %v428 = vld [vmem:[%s273 + $0xc] sm:$0x1]
      %v429 = vld [vmem:[%s273 + $0x14] sm:$0x1]
      %v430 = vld [vmem:[%s273 + $0x1c] sm:$0x1]
      %v431 = vld [vmem:[%s273 + $0x24] sm:$0x1]
      %v432 = vld [vmem:[%s273 + $0x2c] sm:$0x1]
      %v433 = vld [vmem:[%s273 + $0x34] sm:$0x1]
      %v434 = vld [vmem:[%s273 + $0x3c] sm:$0x1]
      %vm435 = vsmask.f32 3328
      %vm436 = vsmask.f32 7440
      %vm437 = vmor %vm435, %vm436
      %v439 = vshrl.u32 %v417, 16
      %v441 = vrot.slane %v439, 4
      %v442 = vshll.u32 %v417, 16
      %v444 = vrot.slane %v442, 5
      %v445 = vor.u32 %v441, %v444
      %v446 = vrot.slane %v445, 4
      %v448 = vshll.u32 %v427, 16
      %v450 = vrot.slane %v448, 5
      %v451 = vsel %vm437, %v446, %v450
      %v453 = vshrl.u32 %v418, 16
      %v455 = vrot.slane %v453, 4
      %v456 = vshll.u32 %v418, 16
      %v458 = vrot.slane %v456, 5
      %v459 = vor.u32 %v455, %v458
      %v460 = vrot.slane %v459, 4
      %v462 = vshll.u32 %v428, 16
      %v464 = vrot.slane %v462, 5
      %v465 = vsel %vm437, %v460, %v464
      %v467 = vshrl.u32 %v419, 16
      %v469 = vrot.slane %v467, 4
      %v470 = vshll.u32 %v419, 16
      %v472 = vrot.slane %v470, 5
      %v473 = vor.u32 %v469, %v472
      %v474 = vrot.slane %v473, 4
      %v476 = vshll.u32 %v429, 16
      %v478 = vrot.slane %v476, 5
      %v479 = vsel %vm437, %v474, %v478
      %v481 = vshrl.u32 %v420, 16
      %v483 = vrot.slane %v481, 4
      %v484 = vshll.u32 %v420, 16
      %v486 = vrot.slane %v484, 5
      %v487 = vor.u32 %v483, %v486
      %v488 = vrot.slane %v487, 4
      %v490 = vshll.u32 %v430, 16
      %v492 = vrot.slane %v490, 5
      %v493 = vsel %vm437, %v488, %v492
      %v495 = vshrl.u32 %v421, 16
      %v497 = vrot.slane %v495, 4
      %v498 = vshll.u32 %v421, 16
      %v500 = vrot.slane %v498, 5
      %v501 = vor.u32 %v497, %v500
      %v502 = vrot.slane %v501, 4
      %v504 = vshll.u32 %v431, 16
      %v506 = vrot.slane %v504, 5
      %v507 = vsel %vm437, %v502, %v506
      %v509 = vshrl.u32 %v422, 16
      %v511 = vrot.slane %v509, 4
      %v512 = vshll.u32 %v422, 16
      %v514 = vrot.slane %v512, 5
      %v515 = vor.u32 %v511, %v514
      %v516 = vrot.slane %v515, 4
      %v518 = vshll.u32 %v432, 16
      %v520 = vrot.slane %v518, 5
      %v521 = vsel %vm437, %v516, %v520
      %v523 = vshrl.u32 %v423, 16
      %v525 = vrot.slane %v523, 4
      %v526 = vshll.u32 %v423, 16
      %v528 = vrot.slane %v526, 5
      %v529 = vor.u32 %v525, %v528
      %v530 = vrot.slane %v529, 4
      %v532 = vshll.u32 %v433, 16
      %v534 = vrot.slane %v532, 5
      %v535 = vsel %vm437, %v530, %v534
      %v537 = vshrl.u32 %v424, 16
      %v539 = vrot.slane %v537, 4
      %v540 = vshll.u32 %v424, 16
      %v542 = vrot.slane %v540, 5
      %v543 = vor.u32 %v539, %v542
      %v544 = vrot.slane %v543, 4
      %v546 = vshll.u32 %v434, 16
      %v548 = vrot.slane %v546, 5
      %v549 = vsel %vm437, %v544, %v548
      %s550 = scalar_lea.vmem %s1, 16
      %v551 = vld [vmem:[%s550] sm:$0xff]
      %v552 = vld [vmem:[%s550 + $0x8] sm:$0x33]
      %v553 = vunpack.c.l.b16 %v451
      %v554 = vunpack.c.l.b16 %v465
      %v555 = vunpack.c.l.b16 %v479
      %v556 = vunpack.c.l.b16 %v493
      %v557 = vunpack.c.l.b16 %v507
      %v558 = vunpack.c.l.b16 %v521
      %v559 = vunpack.c.l.b16 %v535
      %v560 = vunpack.c.l.b16 %v549
      %v561 = vpack.c.b16 %v554, %v553
      %v562 = vpack.c.b16 %v556, %v555
      %v563 = vpack.c.b16 %v558, %v557
      %v564 = vpack.c.b16 %v560, %v559
      %v567 = vunpack.c.l.b16 %v551
      %v568 = vunpack.c.h.b16 %v551
      %v569 = vunpack.c.l.b16 %v552
      %v570 = vunpack.c.h.b16 %v552
      %v571 = vpack.c.b16 %v569, %v567
      %v572 = vpack.c.b16 %v570, %v568
      %vm573 = vcmask 97280
      %v575 = vsel %vm573, %v561, 0
      %v578 = vsel %vm573, %v562, 0
      %v581 = vsel %vm573, %v563, 0
      %v584 = vsel %vm573, %v564, 0
      %vm586 = vcmask 1045504
      %v588 = vsel %vm586, %v571, 0
      %v591 = vsel %vm586, %v572, 0
      %593 = vmatprep.subr.bf16.mxu0 %v591
      %594 = vmatpush1.bf16.msra.mxu0 %v588
      %595 = vmatprep.subr.bf16.mxu0 0
      %596 = vmatpush1.bf16.msra.mxu0 0
      %597 = vmatprep.subr.bf16.mxu0 0
      %598 = vmatpush1.bf16.msra.mxu0 0
      %599 = vmatprep.subr.bf16.mxu0 0
      %600 = vmatpush1.bf16.msra.mxu0 0
      %601 = vmatprep.subr.bf16.mxu0 0
      %602 = vmatpush1.bf16.msra.mxu0 0
      %603 = vmatprep.subr.bf16.mxu0 0
      %604 = vmatpush1.bf16.msra.mxu0 0
      %605 = vmatprep.subr.bf16.mxu0 0
      %606 = vmatpush1.bf16.msra.mxu0 0
      %607 = vmatprep.subr.bf16.mxu0 0
      %608 = vmatpush1.bf16.msra.mxu0 0
      %609 = vmatprep.subr.bf16.mxu0 0
      %610 = vmatpush1.bf16.msra.mxu0 0
      %611 = vmatprep.subr.bf16.mxu0 0
      %612 = vmatpush1.bf16.msra.mxu0 0
      %613 = vmatprep.subr.bf16.mxu0 0
      %614 = vmatpush1.bf16.msra.mxu0 0
      %615 = vmatprep.subr.bf16.mxu0 0
      %616 = vmatpush1.bf16.msra.mxu0 0
      %617 = vmatprep.subr.bf16.mxu0 0
      %618 = vmatpush1.bf16.msra.mxu0 0
      %619 = vmatprep.subr.bf16.mxu0 0
      %620 = vmatpush1.bf16.msra.mxu0 0
      %621 = vmatprep.subr.bf16.mxu0 0
      %622 = vmatpush1.bf16.msra.mxu0 0
      %623 = vmatprep.subr.bf16.mxu0 0
      %624 = vmatpush1.bf16.msra.mxu0 0
      %625 = vmatprep.mubr.bf16.mxu0 0
      %626 = vmatmul.mubr.bf16.gmra.mrb[0].mxu0 %v575
      %v627 = vpop.f32.mrb[0].mxu0
      %v628 = vadd.f32 0.0, %v627
      %v629 = vpop.f32.mrb[0].mxu0
      %v630 = vadd.f32 0.0, %v629
      %v631 = vpop.f32.mrb[0].mxu0
      %v632 = vadd.f32 0.0, %v631
      %v633 = vpop.f32.mrb[0].mxu0
      %v634 = vadd.f32 0.0, %v633
      %635 = vmatprep.mubr.bf16.mxu0 0
      %636 = vmatmul.mubr.bf16.gmra.mrb[0].mxu0 %v578
      %v637 = vpop.f32.mrb[0].mxu0
      %v638 = vadd.f32 0.0, %v637
      %v639 = vpop.f32.mrb[0].mxu0
      %v640 = vadd.f32 0.0, %v639
      %v641 = vpop.f32.mrb[0].mxu0
      %v642 = vadd.f32 0.0, %v641
      %v643 = vpop.f32.mrb[0].mxu0
      %v644 = vadd.f32 0.0, %v643
      %645 = vmatprep.mubr.bf16.mxu0 0
      %646 = vmatmul.mubr.bf16.gmra.mrb[0].mxu0 %v581
      %v647 = vpop.f32.mrb[0].mxu0
      %v648 = vadd.f32 0.0, %v647
      %v649 = vpop.f32.mrb[0].mxu0
      %v650 = vadd.f32 0.0, %v649
      %v651 = vpop.f32.mrb[0].mxu0
      %v652 = vadd.f32 0.0, %v651
      %v653 = vpop.f32.mrb[0].mxu0
      %v654 = vadd.f32 0.0, %v653
      %655 = vmatprep.mubr.bf16.mxu0 0
      %656 = vmatmul.mubr.bf16.gmra.mrb[0].mxu0 %v584
      %v657 = vpop.f32.mrb[0].mxu0
      %v658 = vadd.f32 0.0, %v657
      %v659 = vpop.f32.mrb[0].mxu0
      %v660 = vadd.f32 0.0, %v659
      %v661 = vpop.f32.mrb[0].mxu0
      %v662 = vadd.f32 0.0, %v661
      %v663 = vpop.f32.mrb[0].mxu0
      %v664 = vadd.f32 0.0, %v663
      %665 = vdwg.mxu0
      %v674 = vunpack.c.l.b16 %v417
      %v675 = vunpack.c.l.b16 %v418
      %v676 = vunpack.c.l.b16 %v419
      %v677 = vunpack.c.l.b16 %v420
      %v678 = vunpack.c.l.b16 %v421
      %v679 = vunpack.c.l.b16 %v422
      %v680 = vunpack.c.l.b16 %v423
      %v681 = vunpack.c.l.b16 %v424
      %v682 = vpack.c.b16 %v675, %v674
      %v683 = vpack.c.b16 %v677, %v676
      %v684 = vpack.c.b16 %v679, %v678
      %v685 = vpack.c.b16 %v681, %v680
      %v688 = vunpack.c.l.b16 %v425
      %v689 = vunpack.c.h.b16 %v425
      %v690 = vunpack.c.l.b16 %v426
      %v691 = vunpack.c.h.b16 %v426
      %v692 = vpack.c.b16 %v690, %v688
      %v693 = vpack.c.b16 %v691, %v689
      %v695 = vsel %vm573, %v682, 0
      %v698 = vsel %vm573, %v683, 0
      %v701 = vsel %vm573, %v684, 0
      %v704 = vsel %vm573, %v685, 0
      %v707 = vsel %vm586, %v692, 0
      %v710 = vsel %vm586, %v693, 0
      %712 = vmatprep.subr.bf16.mxu0 %v710
      %713 = vmatpush1.bf16.msra.mxu0 %v707
      %714 = vmatprep.subr.bf16.mxu0 0
      %715 = vmatpush1.bf16.msra.mxu0 0
      %716 = vmatprep.subr.bf16.mxu0 0
      %717 = vmatpush1.bf16.msra.mxu0 0
      %718 = vmatprep.subr.bf16.mxu0 0
      %719 = vmatpush1.bf16.msra.mxu0 0
      %720 = vmatprep.subr.bf16.mxu0 0
      %721 = vmatpush1.bf16.msra.mxu0 0
      %722 = vmatprep.subr.bf16.mxu0 0
      %723 = vmatpush1.bf16.msra.mxu0 0
      %724 = vmatprep.subr.bf16.mxu0 0
      %725 = vmatpush1.bf16.msra.mxu0 0
      %726 = vmatprep.subr.bf16.mxu0 0
      %727 = vmatpush1.bf16.msra.mxu0 0
      %728 = vmatprep.subr.bf16.mxu0 0
      %729 = vmatpush1.bf16.msra.mxu0 0
      %730 = vmatprep.subr.bf16.mxu0 0
      %731 = vmatpush1.bf16.msra.mxu0 0
      %732 = vmatprep.subr.bf16.mxu0 0
      %733 = vmatpush1.bf16.msra.mxu0 0
      %734 = vmatprep.subr.bf16.mxu0 0
      %735 = vmatpush1.bf16.msra.mxu0 0
      %736 = vmatprep.subr.bf16.mxu0 0
      %737 = vmatpush1.bf16.msra.mxu0 0
      %738 = vmatprep.subr.bf16.mxu0 0
      %739 = vmatpush1.bf16.msra.mxu0 0
      %740 = vmatprep.subr.bf16.mxu0 0
      %741 = vmatpush1.bf16.msra.mxu0 0
      %742 = vmatprep.subr.bf16.mxu0 0
      %743 = vmatpush1.bf16.msra.mxu0 0
      %744 = vmatprep.mubr.bf16.mxu0 0
      %745 = vmatmul.mubr.bf16.gmra.mrb[0].mxu0 %v695
      %v746 = vpop.f32.mrb[0].mxu0
      %v747 = vadd.f32 %v628, %v746
      %v748 = vpop.f32.mrb[0].mxu0
      %v749 = vadd.f32 %v630, %v748
      %v750 = vpop.f32.mrb[0].mxu0
      %v751 = vadd.f32 %v632, %v750
      %v752 = vpop.f32.mrb[0].mxu0
      %v753 = vadd.f32 %v634, %v752
      %754 = vmatprep.mubr.bf16.mxu0 0
      %755 = vmatmul.mubr.bf16.gmra.mrb[0].mxu0 %v698
      %v756 = vpop.f32.mrb[0].mxu0
      %v757 = vadd.f32 %v638, %v756
      %v758 = vpop.f32.mrb[0].mxu0
      %v759 = vadd.f32 %v640, %v758
      %v760 = vpop.f32.mrb[0].mxu0
      %v761 = vadd.f32 %v642, %v760
      %v762 = vpop.f32.mrb[0].mxu0
      %v763 = vadd.f32 %v644, %v762
      %764 = vmatprep.mubr.bf16.mxu0 0
      %765 = vmatmul.mubr.bf16.gmra.mrb[0].mxu0 %v701
      %v766 = vpop.f32.mrb[0].mxu0
      %v767 = vadd.f32 %v648, %v766
      %v768 = vpop.f32.mrb[0].mxu0
      %v769 = vadd.f32 %v650, %v768
      %v770 = vpop.f32.mrb[0].mxu0
      %v771 = vadd.f32 %v652, %v770
      %v772 = vpop.f32.mrb[0].mxu0
      %v773 = vadd.f32 %v654, %v772
      %774 = vmatprep.mubr.bf16.mxu0 0
      %775 = vmatmul.mubr.bf16.gmra.mrb[0].mxu0 %v704
      %v776 = vpop.f32.mrb[0].mxu0
      %v777 = vadd.f32 %v658, %v776
      %v778 = vpop.f32.mrb[0].mxu0
      %v779 = vadd.f32 %v660, %v778
      %v780 = vpop.f32.mrb[0].mxu0
      %v781 = vadd.f32 %v662, %v780
      %v782 = vpop.f32.mrb[0].mxu0
      %v783 = vadd.f32 %v664, %v782
      %784 = vdwg.mxu0
      %s785 = scalar_lea.vmem %s273, 8
      %v786 = vld [vmem:[%s785] sm:$0xf]
      %v787 = vld [vmem:[%s785 + $0x8] sm:$0xf]
      %v788 = vld [vmem:[%s785 + $0x10] sm:$0xf]
      %v789 = vld [vmem:[%s785 + $0x18] sm:$0xf]
      %v790 = vld [vmem:[%s785 + $0x20] sm:$0xf]
      %v791 = vld [vmem:[%s785 + $0x28] sm:$0xf]
      %v792 = vld [vmem:[%s785 + $0x30] sm:$0xf]
      %v793 = vld [vmem:[%s785 + $0x38] sm:$0xf]
      %s794 = scalar_lea.vmem %s1, 32
      %v795 = vld [vmem:[%s794] sm:$0xff]
      %v796 = vld [vmem:[%s794 + $0x8] sm:$0x33]
      %v805 = vunpack.c.l.b16 %v786
      %v806 = vunpack.c.l.b16 %v787
      %v807 = vunpack.c.l.b16 %v788
      %v808 = vunpack.c.l.b16 %v789
      %v809 = vunpack.c.l.b16 %v790
      %v810 = vunpack.c.l.b16 %v791
      %v811 = vunpack.c.l.b16 %v792
      %v812 = vunpack.c.l.b16 %v793
      %v813 = vpack.c.b16 %v806, %v805
      %v814 = vpack.c.b16 %v808, %v807
      %v815 = vpack.c.b16 %v810, %v809
      %v816 = vpack.c.b16 %v812, %v811
      %v819 = vunpack.c.l.b16 %v795
      %v820 = vunpack.c.h.b16 %v795
      %v821 = vunpack.c.l.b16 %v796
      %v822 = vunpack.c.h.b16 %v796
      %v823 = vpack.c.b16 %v821, %v819
      %v824 = vpack.c.b16 %v822, %v820
      %v826 = vsel %vm573, %v813, 0
      %v829 = vsel %vm573, %v814, 0
      %v832 = vsel %vm573, %v815, 0
      %v835 = vsel %vm573, %v816, 0
      %v838 = vsel %vm586, %v823, 0
      %v841 = vsel %vm586, %v824, 0
      %843 = vmatprep.subr.bf16.mxu0 %v841
      %844 = vmatpush1.bf16.msra.mxu0 %v838
      %845 = vmatprep.subr.bf16.mxu0 0
      %846 = vmatpush1.bf16.msra.mxu0 0
      %847 = vmatprep.subr.bf16.mxu0 0
      %848 = vmatpush1.bf16.msra.mxu0 0
      %849 = vmatprep.subr.bf16.mxu0 0
      %850 = vmatpush1.bf16.msra.mxu0 0
      %851 = vmatprep.subr.bf16.mxu0 0
      %852 = vmatpush1.bf16.msra.mxu0 0
      %853 = vmatprep.subr.bf16.mxu0 0
      %854 = vmatpush1.bf16.msra.mxu0 0
      %855 = vmatprep.subr.bf16.mxu0 0
      %856 = vmatpush1.bf16.msra.mxu0 0
      %857 = vmatprep.subr.bf16.mxu0 0
      %858 = vmatpush1.bf16.msra.mxu0 0
      %859 = vmatprep.subr.bf16.mxu0 0
      %860 = vmatpush1.bf16.msra.mxu0 0
      %861 = vmatprep.subr.bf16.mxu0 0
      %862 = vmatpush1.bf16.msra.mxu0 0
      %863 = vmatprep.subr.bf16.mxu0 0
      %864 = vmatpush1.bf16.msra.mxu0 0
      %865 = vmatprep.subr.bf16.mxu0 0
      %866 = vmatpush1.bf16.msra.mxu0 0
      %867 = vmatprep.subr.bf16.mxu0 0
      %868 = vmatpush1.bf16.msra.mxu0 0
      %869 = vmatprep.subr.bf16.mxu0 0
      %870 = vmatpush1.bf16.msra.mxu0 0
      %871 = vmatprep.subr.bf16.mxu0 0
      %872 = vmatpush1.bf16.msra.mxu0 0
      %873 = vmatprep.subr.bf16.mxu0 0
      %874 = vmatpush1.bf16.msra.mxu0 0
      %875 = vmatprep.mubr.bf16.mxu0 0
      %876 = vmatmul.mubr.bf16.gmra.mrb[0].mxu0 %v826
      %v877 = vpop.f32.mrb[0].mxu0
      %v878 = vadd.f32 0.0, %v877
      %v879 = vpop.f32.mrb[0].mxu0
      %v880 = vadd.f32 0.0, %v879
      %v881 = vpop.f32.mrb[0].mxu0
      %v882 = vadd.f32 0.0, %v881
      %v883 = vpop.f32.mrb[0].mxu0
      %v884 = vadd.f32 0.0, %v883
      %885 = vmatprep.mubr.bf16.mxu0 0
      %886 = vmatmul.mubr.bf16.gmra.mrb[0].mxu0 %v829
      %v887 = vpop.f32.mrb[0].mxu0
      %v888 = vadd.f32 0.0, %v887
      %v889 = vpop.f32.mrb[0].mxu0
      %v890 = vadd.f32 0.0, %v889
      %v891 = vpop.f32.mrb[0].mxu0
      %v892 = vadd.f32 0.0, %v891
      %v893 = vpop.f32.mrb[0].mxu0
      %v894 = vadd.f32 0.0, %v893
      %895 = vmatprep.mubr.bf16.mxu0 0
      %896 = vmatmul.mubr.bf16.gmra.mrb[0].mxu0 %v832
      %v897 = vpop.f32.mrb[0].mxu0
      %v898 = vadd.f32 0.0, %v897
      %v899 = vpop.f32.mrb[0].mxu0
      %v900 = vadd.f32 0.0, %v899
      %v901 = vpop.f32.mrb[0].mxu0
      %v902 = vadd.f32 0.0, %v901
      %v903 = vpop.f32.mrb[0].mxu0
      %v904 = vadd.f32 0.0, %v903
      %905 = vmatprep.mubr.bf16.mxu0 0
      %906 = vmatmul.mubr.bf16.gmra.mrb[0].mxu0 %v835
      %v907 = vpop.f32.mrb[0].mxu0
      %v908 = vadd.f32 0.0, %v907
      %v909 = vpop.f32.mrb[0].mxu0
      %v910 = vadd.f32 0.0, %v909
      %v911 = vpop.f32.mrb[0].mxu0
      %v912 = vadd.f32 0.0, %v911
      %v913 = vpop.f32.mrb[0].mxu0
      %v914 = vadd.f32 0.0, %v913
      %915 = vdwg.mxu0
      %v916 = vadd.f32 %v747, %v878
      %v917 = vadd.f32 %v749, %v880
      %v918 = vadd.f32 %v751, %v882
      %v919 = vadd.f32 %v753, %v884
      %v920 = vadd.f32 %v757, %v888
      %v921 = vadd.f32 %v759, %v890
      %v922 = vadd.f32 %v761, %v892
      %v923 = vadd.f32 %v763, %v894
      %v924 = vadd.f32 %v767, %v898
      %v925 = vadd.f32 %v769, %v900
      %v926 = vadd.f32 %v771, %v902
      %v927 = vadd.f32 %v773, %v904
      %v928 = vadd.f32 %v777, %v908
      %v929 = vadd.f32 %v779, %v910
      %v930 = vadd.f32 %v781, %v912
      %v931 = vadd.f32 %v783, %v914
      %v932 = vld [vmem:[%s785] sm:$0xf]
      %v933 = vld [vmem:[%s785 + $0x4] sm:$0x1]
      %v934 = vld [vmem:[%s785 + $0x8] sm:$0xf]
      %v935 = vld [vmem:[%s785 + $0xc] sm:$0x1]
      %v936 = vld [vmem:[%s785 + $0x10] sm:$0xf]
      %v937 = vld [vmem:[%s785 + $0x14] sm:$0x1]
      %v938 = vld [vmem:[%s785 + $0x18] sm:$0xf]
      %v939 = vld [vmem:[%s785 + $0x1c] sm:$0x1]
      %v940 = vld [vmem:[%s785 + $0x20] sm:$0xf]
      %v941 = vld [vmem:[%s785 + $0x24] sm:$0x1]
      %v942 = vld [vmem:[%s785 + $0x28] sm:$0xf]
      %v943 = vld [vmem:[%s785 + $0x2c] sm:$0x1]
      %v944 = vld [vmem:[%s785 + $0x30] sm:$0xf]
      %v945 = vld [vmem:[%s785 + $0x34] sm:$0x1]
      %v946 = vld [vmem:[%s785 + $0x38] sm:$0xf]
      %v947 = vld [vmem:[%s785 + $0x3c] sm:$0x1]
      %v949 = vshrl.u32 %v932, 16
      %v951 = vrot.slane %v949, 4
      %v952 = vshll.u32 %v932, 16
      %v954 = vrot.slane %v952, 5
      %v955 = vor.u32 %v951, %v954
      %v956 = vrot.slane %v955, 4
      %v958 = vshll.u32 %v933, 16
      %v960 = vrot.slane %v958, 5
      %v961 = vsel %vm437, %v956, %v960
      %v963 = vshrl.u32 %v934, 16
      %v965 = vrot.slane %v963, 4
      %v966 = vshll.u32 %v934, 16
      %v968 = vrot.slane %v966, 5
      %v969 = vor.u32 %v965, %v968
      %v970 = vrot.slane %v969, 4
      %v972 = vshll.u32 %v935, 16
      %v974 = vrot.slane %v972, 5
      %v975 = vsel %vm437, %v970, %v974
      %v977 = vshrl.u32 %v936, 16
      %v979 = vrot.slane %v977, 4
      %v980 = vshll.u32 %v936, 16
      %v982 = vrot.slane %v980, 5
      %v983 = vor.u32 %v979, %v982
      %v984 = vrot.slane %v983, 4
      %v986 = vshll.u32 %v937, 16
      %v988 = vrot.slane %v986, 5
      %v989 = vsel %vm437, %v984, %v988
      %v991 = vshrl.u32 %v938, 16
      %v993 = vrot.slane %v991, 4
      %v994 = vshll.u32 %v938, 16
      %v996 = vrot.slane %v994, 5
      %v997 = vor.u32 %v993, %v996
      %v998 = vrot.slane %v997, 4
      %v1000 = vshll.u32 %v939, 16
      %v1002 = vrot.slane %v1000, 5
      %v1003 = vsel %vm437, %v998, %v1002
      %v1005 = vshrl.u32 %v940, 16
      %v1007 = vrot.slane %v1005, 4
      %v1008 = vshll.u32 %v940, 16
      %v1010 = vrot.slane %v1008, 5
      %v1011 = vor.u32 %v1007, %v1010
      %v1012 = vrot.slane %v1011, 4
      %v1014 = vshll.u32 %v941, 16
      %v1016 = vrot.slane %v1014, 5
      %v1017 = vsel %vm437, %v1012, %v1016
      %v1019 = vshrl.u32 %v942, 16
      %v1021 = vrot.slane %v1019, 4
      %v1022 = vshll.u32 %v942, 16
      %v1024 = vrot.slane %v1022, 5
      %v1025 = vor.u32 %v1021, %v1024
      %v1026 = vrot.slane %v1025, 4
      %v1028 = vshll.u32 %v943, 16
      %v1030 = vrot.slane %v1028, 5
      %v1031 = vsel %vm437, %v1026, %v1030
      %v1033 = vshrl.u32 %v944, 16
      %v1035 = vrot.slane %v1033, 4
      %v1036 = vshll.u32 %v944, 16
      %v1038 = vrot.slane %v1036, 5
      %v1039 = vor.u32 %v1035, %v1038
      %v1040 = vrot.slane %v1039, 4
      %v1042 = vshll.u32 %v945, 16
      %v1044 = vrot.slane %v1042, 5
      %v1045 = vsel %vm437, %v1040, %v1044
      %v1047 = vshrl.u32 %v946, 16
      %v1049 = vrot.slane %v1047, 4
      %v1050 = vshll.u32 %v946, 16
      %v1052 = vrot.slane %v1050, 5
      %v1053 = vor.u32 %v1049, %v1052
      %v1054 = vrot.slane %v1053, 4
      %v1056 = vshll.u32 %v947, 16
      %v1058 = vrot.slane %v1056, 5
      %v1059 = vsel %vm437, %v1054, %v1058
      %s1060 = scalar_lea.vmem %s1, 48
      %v1061 = vld [vmem:[%s1060] sm:$0xff]
      %v1062 = vld [vmem:[%s1060 + $0x8] sm:$0x33]
      %v1063 = vunpack.c.l.b16 %v961
      %v1064 = vunpack.c.l.b16 %v975
      %v1065 = vunpack.c.l.b16 %v989
      %v1066 = vunpack.c.l.b16 %v1003
      %v1067 = vunpack.c.l.b16 %v1017
      %v1068 = vunpack.c.l.b16 %v1031
      %v1069 = vunpack.c.l.b16 %v1045
      %v1070 = vunpack.c.l.b16 %v1059
      %v1071 = vpack.c.b16 %v1064, %v1063
      %v1072 = vpack.c.b16 %v1066, %v1065
      %v1073 = vpack.c.b16 %v1068, %v1067
      %v1074 = vpack.c.b16 %v1070, %v1069
      %v1077 = vunpack.c.l.b16 %v1061
      %v1078 = vunpack.c.h.b16 %v1061
      %v1079 = vunpack.c.l.b16 %v1062
      %v1080 = vunpack.c.h.b16 %v1062
      %v1081 = vpack.c.b16 %v1079, %v1077
      %v1082 = vpack.c.b16 %v1080, %v1078
      %v1084 = vsel %vm573, %v1071, 0
      %v1087 = vsel %vm573, %v1072, 0
      %v1090 = vsel %vm573, %v1073, 0
      %v1093 = vsel %vm573, %v1074, 0
      %v1096 = vsel %vm586, %v1081, 0
      %v1099 = vsel %vm586, %v1082, 0
      %1101 = vmatprep.subr.bf16.mxu0 %v1099
      %1102 = vmatpush1.bf16.msra.mxu0 %v1096
      %1103 = vmatprep.subr.bf16.mxu0 0
      %1104 = vmatpush1.bf16.msra.mxu0 0
      %1105 = vmatprep.subr.bf16.mxu0 0
      %1106 = vmatpush1.bf16.msra.mxu0 0
      %1107 = vmatprep.subr.bf16.mxu0 0
      %1108 = vmatpush1.bf16.msra.mxu0 0
      %1109 = vmatprep.subr.bf16.mxu0 0
      %1110 = vmatpush1.bf16.msra.mxu0 0
      %1111 = vmatprep.subr.bf16.mxu0 0
      %1112 = vmatpush1.bf16.msra.mxu0 0
      %1113 = vmatprep.subr.bf16.mxu0 0
      %1114 = vmatpush1.bf16.msra.mxu0 0
      %1115 = vmatprep.subr.bf16.mxu0 0
      %1116 = vmatpush1.bf16.msra.mxu0 0
      %1117 = vmatprep.subr.bf16.mxu0 0
      %1118 = vmatpush1.bf16.msra.mxu0 0
      %1119 = vmatprep.subr.bf16.mxu0 0
      %1120 = vmatpush1.bf16.msra.mxu0 0
      %1121 = vmatprep.subr.bf16.mxu0 0
      %1122 = vmatpush1.bf16.msra.mxu0 0
      %1123 = vmatprep.subr.bf16.mxu0 0
      %1124 = vmatpush1.bf16.msra.mxu0 0
      %1125 = vmatprep.subr.bf16.mxu0 0
      %1126 = vmatpush1.bf16.msra.mxu0 0
      %1127 = vmatprep.subr.bf16.mxu0 0
      %1128 = vmatpush1.bf16.msra.mxu0 0
      %1129 = vmatprep.subr.bf16.mxu0 0
      %1130 = vmatpush1.bf16.msra.mxu0 0
      %1131 = vmatprep.subr.bf16.mxu0 0
      %1132 = vmatpush1.bf16.msra.mxu0 0
      %1133 = vmatprep.mubr.bf16.mxu0 0
      %1134 = vmatmul.mubr.bf16.gmra.mrb[0].mxu0 %v1084
      %v1135 = vpop.f32.mrb[0].mxu0
      %v1136 = vadd.f32 0.0, %v1135
      %v1137 = vpop.f32.mrb[0].mxu0
      %v1138 = vadd.f32 0.0, %v1137
      %v1139 = vpop.f32.mrb[0].mxu0
      %v1140 = vadd.f32 0.0, %v1139
      %v1141 = vpop.f32.mrb[0].mxu0
      %v1142 = vadd.f32 0.0, %v1141
      %1143 = vmatprep.mubr.bf16.mxu0 0
      %1144 = vmatmul.mubr.bf16.gmra.mrb[0].mxu0 %v1087
      %v1145 = vpop.f32.mrb[0].mxu0
      %v1146 = vadd.f32 0.0, %v1145
      %v1147 = vpop.f32.mrb[0].mxu0
      %v1148 = vadd.f32 0.0, %v1147
      %v1149 = vpop.f32.mrb[0].mxu0
      %v1150 = vadd.f32 0.0, %v1149
      %v1151 = vpop.f32.mrb[0].mxu0
      %v1152 = vadd.f32 0.0, %v1151
      %1153 = vmatprep.mubr.bf16.mxu0 0
      %1154 = vmatmul.mubr.bf16.gmra.mrb[0].mxu0 %v1090
      %v1155 = vpop.f32.mrb[0].mxu0
      %v1156 = vadd.f32 0.0, %v1155
      %v1157 = vpop.f32.mrb[0].mxu0
      %v1158 = vadd.f32 0.0, %v1157
      %v1159 = vpop.f32.mrb[0].mxu0
      %v1160 = vadd.f32 0.0, %v1159
      %v1161 = vpop.f32.mrb[0].mxu0
      %v1162 = vadd.f32 0.0, %v1161
      %1163 = vmatprep.mubr.bf16.mxu0 0
      %1164 = vmatmul.mubr.bf16.gmra.mrb[0].mxu0 %v1093
      %v1165 = vpop.f32.mrb[0].mxu0
      %v1166 = vadd.f32 0.0, %v1165
      %v1167 = vpop.f32.mrb[0].mxu0
      %v1168 = vadd.f32 0.0, %v1167
      %v1169 = vpop.f32.mrb[0].mxu0
      %v1170 = vadd.f32 0.0, %v1169
      %v1171 = vpop.f32.mrb[0].mxu0
      %v1172 = vadd.f32 0.0, %v1171
      %1173 = vdwg.mxu0
      %v1174 = vadd.f32 %v916, %v1136
      %v1175 = vadd.f32 %v917, %v1138
      %v1176 = vadd.f32 %v918, %v1140
      %v1177 = vadd.f32 %v919, %v1142
      %v1178 = vadd.f32 %v920, %v1146
      %v1179 = vadd.f32 %v921, %v1148
      %v1180 = vadd.f32 %v922, %v1150
      %v1181 = vadd.f32 %v923, %v1152
      %v1182 = vadd.f32 %v924, %v1156
      %v1183 = vadd.f32 %v925, %v1158
      %v1184 = vadd.f32 %v926, %v1160
      %v1185 = vadd.f32 %v927, %v1162
      %v1186 = vadd.f32 %v928, %v1166
      %v1187 = vadd.f32 %v929, %v1168
      %v1188 = vadd.f32 %v930, %v1170
      %v1189 = vadd.f32 %v931, %v1172
      %v1190 = vld [vmem:[%s2] sm:$0x3]
      %v1192 = vlaneseq
      %v1193 = vshrl.u32 %v1192, 7
      %v1194 = vsub.s32 0, %v1193
      %v1195 = vrot.slane %v1190, %v1194
      %v1196 = vlaneseq
      %v1197 = vshrl.u32 %v1196, 7
      %v1198 = vsub.s32 1, %v1197
      %v1199 = vrot.slane %v1190, %v1198
      %v1202 = vadd.f32 %v1174, %v1195
      %v1203 = vadd.f32 %v1175, %v1199
      %v1204 = vadd.f32 %v1176, %v1195
      %v1205 = vadd.f32 %v1177, %v1199
      %v1206 = vadd.f32 %v1178, %v1195
      %v1207 = vadd.f32 %v1179, %v1199
      %v1208 = vadd.f32 %v1180, %v1195
      %v1209 = vadd.f32 %v1181, %v1199
      %v1210 = vadd.f32 %v1182, %v1195
      %v1211 = vadd.f32 %v1183, %v1199
      %v1212 = vadd.f32 %v1184, %v1195
      %v1213 = vadd.f32 %v1185, %v1199
      %v1214 = vadd.f32 %v1186, %v1195
      %v1215 = vadd.f32 %v1187, %v1199
      %v1216 = vadd.f32 %v1188, %v1195
      %v1217 = vadd.f32 %v1189, %v1199
      %vm1218 = vcmp.ge.f32.partialorder %v1202, 0.0
      %vm1219 = vcmp.ge.f32.partialorder %v1203, 0.0
      %vm1220 = vcmp.ge.f32.partialorder %v1204, 0.0
      %vm1221 = vcmp.ge.f32.partialorder %v1205, 0.0
      %vm1222 = vcmp.ge.f32.partialorder %v1206, 0.0
      %vm1223 = vcmp.ge.f32.partialorder %v1207, 0.0
      %vm1224 = vcmp.ge.f32.partialorder %v1208, 0.0
      %vm1225 = vcmp.ge.f32.partialorder %v1209, 0.0
      %vm1226 = vcmp.ge.f32.partialorder %v1210, 0.0
      %vm1227 = vcmp.ge.f32.partialorder %v1211, 0.0
      %vm1228 = vcmp.ge.f32.partialorder %v1212, 0.0
      %vm1229 = vcmp.ge.f32.partialorder %v1213, 0.0
      %vm1230 = vcmp.ge.f32.partialorder %v1214, 0.0
      %vm1231 = vcmp.ge.f32.partialorder %v1215, 0.0
      %vm1232 = vcmp.ge.f32.partialorder %v1216, 0.0
      %vm1233 = vcmp.ge.f32.partialorder %v1217, 0.0
      %v1234 = vmul.f32 %v1202, 0.1
      %v1235 = vmul.f32 %v1203, 0.1
      %v1236 = vmul.f32 %v1204, 0.1
      %v1237 = vmul.f32 %v1205, 0.1
      %v1238 = vmul.f32 %v1206, 0.1
      %v1239 = vmul.f32 %v1207, 0.1
      %v1240 = vmul.f32 %v1208, 0.1
      %v1241 = vmul.f32 %v1209, 0.1
      %v1242 = vmul.f32 %v1210, 0.1
      %v1243 = vmul.f32 %v1211, 0.1
      %v1244 = vmul.f32 %v1212, 0.1
      %v1245 = vmul.f32 %v1213, 0.1
      %v1246 = vmul.f32 %v1214, 0.1
      %v1247 = vmul.f32 %v1215, 0.1
      %v1248 = vmul.f32 %v1216, 0.1
      %v1249 = vmul.f32 %v1217, 0.1
      %v1250 = vsel %vm1218, %v1202, %v1234
      %v1251 = vsel %vm1219, %v1203, %v1235
      %v1252 = vsel %vm1220, %v1204, %v1236
      %v1253 = vsel %vm1221, %v1205, %v1237
      %v1254 = vsel %vm1222, %v1206, %v1238
      %v1255 = vsel %vm1223, %v1207, %v1239
      %v1256 = vsel %vm1224, %v1208, %v1240
      %v1257 = vsel %vm1225, %v1209, %v1241
      %v1258 = vsel %vm1226, %v1210, %v1242
      %v1259 = vsel %vm1227, %v1211, %v1243
      %v1260 = vsel %vm1228, %v1212, %v1244
      %v1261 = vsel %vm1229, %v1213, %v1245
      %v1262 = vsel %vm1230, %v1214, %v1246
      %v1263 = vsel %vm1231, %v1215, %v1247
      %v1264 = vsel %vm1232, %v1216, %v1248
      %v1265 = vsel %vm1233, %v1217, %v1249
      %v1266 = vpack.c.bf16 %v1250, %v1250
      %v1267 = vpack.c.bf16 %v1252, %v1252
      %v1268 = vpack.c.bf16 %v1254, %v1254
      %v1269 = vpack.c.bf16 %v1256, %v1256
      %v1270 = vpack.c.bf16 %v1258, %v1258
      %v1271 = vpack.c.bf16 %v1260, %v1260
      %v1272 = vpack.c.bf16 %v1262, %v1262
      %v1273 = vpack.c.bf16 %v1264, %v1264
      %v1282 = vunpack.c.l.b16 %v1266
      %v1283 = vunpack.c.l.b16 %v1267
      %v1284 = vunpack.c.l.b16 %v1268
      %v1285 = vunpack.c.l.b16 %v1269
      %v1286 = vunpack.c.l.b16 %v1270
      %v1287 = vunpack.c.l.b16 %v1271
      %v1288 = vunpack.c.l.b16 %v1272
      %v1289 = vunpack.c.l.b16 %v1273
      %v1290 = vpack.c.b16 %v1282, %v1282
      %v1291 = vpack.c.b16 %v1283, %v1283
      %v1292 = vpack.c.b16 %v1284, %v1284
      %v1293 = vpack.c.b16 %v1285, %v1285
      %v1294 = vpack.c.b16 %v1286, %v1286
      %v1295 = vpack.c.b16 %v1287, %v1287
      %v1296 = vpack.c.b16 %v1288, %v1288
      %v1297 = vpack.c.b16 %v1289, %v1289
      %v1299 = vshrl.u32 %v1290, 16
      %v1301 = vrot.slane %v1299, 7
      %v1302 = vshll.u32 %v1290, 16
      %v1304 = vor.u32 %v1301, %v1302
      %v1305 = vrot.slane %v1301, 4
      %v1307 = vshrl.u32 %v1291, 16
      %v1309 = vrot.slane %v1307, 7
      %v1310 = vshll.u32 %v1291, 16
      %v1312 = vor.u32 %v1309, %v1310
      %v1313 = vrot.slane %v1309, 4
      %v1315 = vshrl.u32 %v1292, 16
      %v1317 = vrot.slane %v1315, 7
      %v1318 = vshll.u32 %v1292, 16
      %v1320 = vor.u32 %v1317, %v1318
      %v1321 = vrot.slane %v1317, 4
      %v1323 = vshrl.u32 %v1293, 16
      %v1325 = vrot.slane %v1323, 7
      %v1326 = vshll.u32 %v1293, 16
      %v1328 = vor.u32 %v1325, %v1326
      %v1329 = vrot.slane %v1325, 4
      %v1331 = vshrl.u32 %v1294, 16
      %v1333 = vrot.slane %v1331, 7
      %v1334 = vshll.u32 %v1294, 16
      %v1336 = vor.u32 %v1333, %v1334
      %v1337 = vrot.slane %v1333, 4
      %v1339 = vshrl.u32 %v1295, 16
      %v1341 = vrot.slane %v1339, 7
      %v1342 = vshll.u32 %v1295, 16
      %v1344 = vor.u32 %v1341, %v1342
      %v1345 = vrot.slane %v1341, 4
      %v1347 = vshrl.u32 %v1296, 16
      %v1349 = vrot.slane %v1347, 7
      %v1350 = vshll.u32 %v1296, 16
      %v1352 = vor.u32 %v1349, %v1350
      %v1353 = vrot.slane %v1349, 4
      %v1355 = vshrl.u32 %v1297, 16
      %v1357 = vrot.slane %v1355, 7
      %v1358 = vshll.u32 %v1297, 16
      %v1360 = vor.u32 %v1357, %v1358
      %v1361 = vrot.slane %v1357, 4
      %s1378 = scalar_lea.vmem [#allocation2], 16
      %vm1379 = vcmask 519168
      %vm1380 = vmand %vm1379, %vm385
      %v1381 = vld [vmem:[%s1378] sm:$0xf]
      %v1382 = vsel %vm1380, %v1304, %v1381
      %1383 = vst [vmem:[%s1378] sm:$0xf] %v1382
      %vm1384 = vcmask 516096
      %vm1385 = vmand %vm1384, %vm282
      %v1386 = vld [vmem:[%s1378 + $0x8] sm:$0x1]
      %v1387 = vsel %vm1385, %v1305, %v1386
      %1388 = vst [vmem:[%s1378 + $0x8] sm:$0x1] %v1387
      %v1389 = vld [vmem:[%s1378 + $0x10] sm:$0xf]
      %v1390 = vsel %vm1380, %v1312, %v1389
      %1391 = vst [vmem:[%s1378 + $0x10] sm:$0xf] %v1390
      %v1392 = vld [vmem:[%s1378 + $0x18] sm:$0x1]
      %v1393 = vsel %vm1385, %v1313, %v1392
      %1394 = vst [vmem:[%s1378 + $0x18] sm:$0x1] %v1393
      %v1395 = vld [vmem:[%s1378 + $0x20] sm:$0xf]
      %v1396 = vsel %vm1380, %v1320, %v1395
      %1397 = vst [vmem:[%s1378 + $0x20] sm:$0xf] %v1396
      %v1398 = vld [vmem:[%s1378 + $0x28] sm:$0x1]
      %v1399 = vsel %vm1385, %v1321, %v1398
      %1400 = vst [vmem:[%s1378 + $0x28] sm:$0x1] %v1399
      %v1401 = vld [vmem:[%s1378 + $0x30] sm:$0xf]
      %v1402 = vsel %vm1380, %v1328, %v1401
      %1403 = vst [vmem:[%s1378 + $0x30] sm:$0xf] %v1402
      %v1404 = vld [vmem:[%s1378 + $0x38] sm:$0x1]
      %v1405 = vsel %vm1385, %v1329, %v1404
      %1406 = vst [vmem:[%s1378 + $0x38] sm:$0x1] %v1405
      %v1407 = vld [vmem:[%s1378 + $0x40] sm:$0xf]
      %v1408 = vsel %vm1380, %v1336, %v1407
      %1409 = vst [vmem:[%s1378 + $0x40] sm:$0xf] %v1408
      %v1410 = vld [vmem:[%s1378 + $0x48] sm:$0x1]
      %v1411 = vsel %vm1385, %v1337, %v1410
      %1412 = vst [vmem:[%s1378 + $0x48] sm:$0x1] %v1411
      %v1413 = vld [vmem:[%s1378 + $0x50] sm:$0xf]
      %v1414 = vsel %vm1380, %v1344, %v1413
      %1415 = vst [vmem:[%s1378 + $0x50] sm:$0xf] %v1414
      %v1416 = vld [vmem:[%s1378 + $0x58] sm:$0x1]
      %v1417 = vsel %vm1385, %v1345, %v1416
      %1418 = vst [vmem:[%s1378 + $0x58] sm:$0x1] %v1417
      %v1419 = vld [vmem:[%s1378 + $0x60] sm:$0xf]
      %v1420 = vsel %vm1380, %v1352, %v1419
      %1421 = vst [vmem:[%s1378 + $0x60] sm:$0xf] %v1420
      %v1422 = vld [vmem:[%s1378 + $0x68] sm:$0x1]
      %v1423 = vsel %vm1385, %v1353, %v1422
      %1424 = vst [vmem:[%s1378 + $0x68] sm:$0x1] %v1423
      %v1425 = vld [vmem:[%s1378 + $0x70] sm:$0xf]
      %v1426 = vsel %vm1380, %v1360, %v1425
      %1427 = vst [vmem:[%s1378 + $0x70] sm:$0xf] %v1426
      %v1428 = vld [vmem:[%s1378 + $0x78] sm:$0x1]
      %v1429 = vsel %vm1385, %v1361, %v1428
      %1430 = vst [vmem:[%s1378 + $0x78] sm:$0x1] %v1429
      %vm1431 = vcmask 1043968
      %1432 = vst.msk [vmem:[%s1378] sm:$0xf] %vm1431, %v1266
      %1433 = vst.msk [vmem:[%s1378 + $0x10] sm:$0xf] %vm1431, %v1267
      %1434 = vst.msk [vmem:[%s1378 + $0x20] sm:$0xf] %vm1431, %v1268
      %1435 = vst.msk [vmem:[%s1378 + $0x30] sm:$0xf] %vm1431, %v1269
      %1436 = vst.msk [vmem:[%s1378 + $0x40] sm:$0xf] %vm1431, %v1270
      %1437 = vst.msk [vmem:[%s1378 + $0x50] sm:$0xf] %vm1431, %v1271
      %1438 = vst.msk [vmem:[%s1378 + $0x60] sm:$0xf] %vm1431, %v1272
      %1439 = vst.msk [vmem:[%s1378 + $0x70] sm:$0xf] %vm1431, %v1273
      %v1440 = vpack.c.bf16 %v1251, %v1251
      %v1441 = vpack.c.bf16 %v1253, %v1253
      %v1442 = vpack.c.bf16 %v1255, %v1255
      %v1443 = vpack.c.bf16 %v1257, %v1257
      %v1444 = vpack.c.bf16 %v1259, %v1259
      %v1445 = vpack.c.bf16 %v1261, %v1261
      %v1446 = vpack.c.bf16 %v1263, %v1263
      %v1447 = vpack.c.bf16 %v1265, %v1265
      %v1456 = vunpack.c.l.b16 %v1440
      %v1457 = vunpack.c.l.b16 %v1441
      %v1458 = vunpack.c.l.b16 %v1442
      %v1459 = vunpack.c.l.b16 %v1443
      %v1460 = vunpack.c.l.b16 %v1444
      %v1461 = vunpack.c.l.b16 %v1445
      %v1462 = vunpack.c.l.b16 %v1446
      %v1463 = vunpack.c.l.b16 %v1447
      %v1464 = vpack.c.b16 %v1456, %v1456
      %v1465 = vpack.c.b16 %v1457, %v1457
      %v1466 = vpack.c.b16 %v1458, %v1458
      %v1467 = vpack.c.b16 %v1459, %v1459
      %v1468 = vpack.c.b16 %v1460, %v1460
      %v1469 = vpack.c.b16 %v1461, %v1461
      %v1470 = vpack.c.b16 %v1462, %v1462
      %v1471 = vpack.c.b16 %v1463, %v1463
      %v1473 = vshrl.u32 %v1464, 16
      %v1475 = vrot.slane %v1473, 7
      %v1476 = vshll.u32 %v1464, 16
      %v1478 = vor.u32 %v1475, %v1476
      %v1479 = vrot.slane %v1475, 4
      %v1481 = vshrl.u32 %v1465, 16
      %v1483 = vrot.slane %v1481, 7
      %v1484 = vshll.u32 %v1465, 16
      %v1486 = vor.u32 %v1483, %v1484
      %v1487 = vrot.slane %v1483, 4
      %v1489 = vshrl.u32 %v1466, 16
      %v1491 = vrot.slane %v1489, 7
      %v1492 = vshll.u32 %v1466, 16
      %v1494 = vor.u32 %v1491, %v1492
      %v1495 = vrot.slane %v1491, 4
      %v1497 = vshrl.u32 %v1467, 16
      %v1499 = vrot.slane %v1497, 7
      %v1500 = vshll.u32 %v1467, 16
      %v1502 = vor.u32 %v1499, %v1500
      %v1503 = vrot.slane %v1499, 4
      %v1505 = vshrl.u32 %v1468, 16
      %v1507 = vrot.slane %v1505, 7
      %v1508 = vshll.u32 %v1468, 16
      %v1510 = vor.u32 %v1507, %v1508
      %v1511 = vrot.slane %v1507, 4
      %v1513 = vshrl.u32 %v1469, 16
      %v1515 = vrot.slane %v1513, 7
      %v1516 = vshll.u32 %v1469, 16
      %v1518 = vor.u32 %v1515, %v1516
      %v1519 = vrot.slane %v1515, 4
      %v1521 = vshrl.u32 %v1470, 16
      %v1523 = vrot.slane %v1521, 7
      %v1524 = vshll.u32 %v1470, 16
      %v1526 = vor.u32 %v1523, %v1524
      %v1527 = vrot.slane %v1523, 4
      %v1529 = vshrl.u32 %v1471, 16
      %v1531 = vrot.slane %v1529, 7
      %v1532 = vshll.u32 %v1471, 16
      %v1534 = vor.u32 %v1531, %v1532
      %v1535 = vrot.slane %v1531, 4
      %v1552 = vld [vmem:[#allocation2 + $0x4] sm:$0xf]
      %v1553 = vsel %vm1380, %v1478, %v1552
      %1554 = vst [vmem:[#allocation2 + $0x4] sm:$0xf] %v1553
      %v1555 = vld [vmem:[#allocation2 + $0xc] sm:$0x1]
      %v1556 = vsel %vm1385, %v1479, %v1555
      %1557 = vst [vmem:[#allocation2 + $0xc] sm:$0x1] %v1556
      %v1558 = vld [vmem:[#allocation2 + $0x14] sm:$0xf]
      %v1559 = vsel %vm1380, %v1486, %v1558
      %1560 = vst [vmem:[#allocation2 + $0x14] sm:$0xf] %v1559
      %v1561 = vld [vmem:[#allocation2 + $0x1c] sm:$0x1]
      %v1562 = vsel %vm1385, %v1487, %v1561
      %1563 = vst [vmem:[#allocation2 + $0x1c] sm:$0x1] %v1562
      %v1564 = vld [vmem:[#allocation2 + $0x24] sm:$0xf]
      %v1565 = vsel %vm1380, %v1494, %v1564
      %1566 = vst [vmem:[#allocation2 + $0x24] sm:$0xf] %v1565
      %v1567 = vld [vmem:[#allocation2 + $0x2c] sm:$0x1]
      %v1568 = vsel %vm1385, %v1495, %v1567
      %1569 = vst [vmem:[#allocation2 + $0x2c] sm:$0x1] %v1568
      %v1570 = vld [vmem:[#allocation2 + $0x34] sm:$0xf]
      %v1571 = vsel %vm1380, %v1502, %v1570
      %1572 = vst [vmem:[#allocation2 + $0x34] sm:$0xf] %v1571
      %v1573 = vld [vmem:[#allocation2 + $0x3c] sm:$0x1]
      %v1574 = vsel %vm1385, %v1503, %v1573
      %1575 = vst [vmem:[#allocation2 + $0x3c] sm:$0x1] %v1574
      %v1576 = vld [vmem:[#allocation2 + $0x44] sm:$0xf]
      %v1577 = vsel %vm1380, %v1510, %v1576
      %1578 = vst [vmem:[#allocation2 + $0x44] sm:$0xf] %v1577
      %v1579 = vld [vmem:[#allocation2 + $0x4c] sm:$0x1]
      %v1580 = vsel %vm1385, %v1511, %v1579
      %1581 = vst [vmem:[#allocation2 + $0x4c] sm:$0x1] %v1580
      %v1582 = vld [vmem:[#allocation2 + $0x54] sm:$0xf]
      %v1583 = vsel %vm1380, %v1518, %v1582
      %1584 = vst [vmem:[#allocation2 + $0x54] sm:$0xf] %v1583
      %v1585 = vld [vmem:[#allocation2 + $0x5c] sm:$0x1]
      %v1586 = vsel %vm1385, %v1519, %v1585
      %1587 = vst [vmem:[#allocation2 + $0x5c] sm:$0x1] %v1586
      %v1588 = vld [vmem:[#allocation2 + $0x64] sm:$0xf]
      %v1589 = vsel %vm1380, %v1526, %v1588
      %1590 = vst [vmem:[#allocation2 + $0x64] sm:$0xf] %v1589
      %v1591 = vld [vmem:[#allocation2 + $0x6c] sm:$0x1]
      %v1592 = vsel %vm1385, %v1527, %v1591
      %1593 = vst [vmem:[#allocation2 + $0x6c] sm:$0x1] %v1592
      %v1594 = vld [vmem:[#allocation2 + $0x74] sm:$0xf]
      %v1595 = vsel %vm1380, %v1534, %v1594
      %1596 = vst [vmem:[#allocation2 + $0x74] sm:$0xf] %v1595
      %v1597 = vld [vmem:[#allocation2 + $0x7c] sm:$0x1]
      %v1598 = vsel %vm1385, %v1535, %v1597
      %1599 = vst [vmem:[#allocation2 + $0x7c] sm:$0x1] %v1598
      %1600 = vst.msk [vmem:[#allocation2 + $0x4] sm:$0xf] %vm1431, %v1440
      %1601 = vst.msk [vmem:[#allocation2 + $0x14] sm:$0xf] %vm1431, %v1441
      %1602 = vst.msk [vmem:[#allocation2 + $0x24] sm:$0xf] %vm1431, %v1442
      %1603 = vst.msk [vmem:[#allocation2 + $0x34] sm:$0xf] %vm1431, %v1443
      %1604 = vst.msk [vmem:[#allocation2 + $0x44] sm:$0xf] %vm1431, %v1444
      %1605 = vst.msk [vmem:[#allocation2 + $0x54] sm:$0xf] %vm1431, %v1445
      %1606 = vst.msk [vmem:[#allocation2 + $0x64] sm:$0xf] %vm1431, %v1446
      %1607 = vst.msk [vmem:[#allocation2 + $0x74] sm:$0xf] %vm1431, %v1447
      %v1608 = vld [vmem:[#allocation2] sm:$0xff]
      %v1609 = vld [vmem:[#allocation2 + $0x10] sm:$0xff]
      %v1610 = vld [vmem:[#allocation2 + $0x20] sm:$0xff]
      %v1611 = vld [vmem:[#allocation2 + $0x30] sm:$0xff]
      %v1612 = vld [vmem:[#allocation2 + $0x40] sm:$0xff]
      %v1613 = vld [vmem:[#allocation2 + $0x50] sm:$0xff]
      %v1614 = vld [vmem:[#allocation2 + $0x60] sm:$0xff]
      %v1615 = vld [vmem:[#allocation2 + $0x70] sm:$0xff]
      %v1616 = vld [vmem:[%s3] sm:$0xf]
      %v1617 = vld [vmem:[%s3 + $0x4] sm:$0xf]
      %v1618 = vld [vmem:[%s3 + $0x8] sm:$0xf]
      %v1619 = vld [vmem:[%s3 + $0xc] sm:$0xf]
      %v1620 = vld [vmem:[%s3 + $0x10] sm:$0xf]
      %v1621 = vld [vmem:[%s3 + $0x14] sm:$0xf]
      %v1622 = vld [vmem:[%s3 + $0x18] sm:$0xf]
      %v1623 = vld [vmem:[%s3 + $0x1c] sm:$0xf]
      %v1624 = vld [vmem:[%s3 + $0x20] sm:$0xf]
      %v1625 = vld [vmem:[%s3 + $0x24] sm:$0xf]
      %v1626 = vld [vmem:[%s3 + $0x28] sm:$0xf]
      %v1627 = vld [vmem:[%s3 + $0x2c] sm:$0xf]
      %v1628 = vld [vmem:[%s3 + $0x30] sm:$0xf]
      %v1629 = vld [vmem:[%s3 + $0x34] sm:$0xf]
      %v1630 = vld [vmem:[%s3 + $0x38] sm:$0xf]
      %v1631 = vld [vmem:[%s3 + $0x3c] sm:$0xf]
      %v1632 = vld [vmem:[%s3 + $0x40] sm:$0xf]
      %v1633 = vld [vmem:[%s3 + $0x44] sm:$0xf]
      %v1634 = vld [vmem:[%s3 + $0x48] sm:$0xf]
      %v1635 = vld [vmem:[%s3 + $0x4c] sm:$0xf]
      %v1636 = vld [vmem:[%s3 + $0x50] sm:$0xf]
      %v1637 = vld [vmem:[%s3 + $0x54] sm:$0xf]
      %v1638 = vld [vmem:[%s3 + $0x58] sm:$0xf]
      %v1639 = vld [vmem:[%s3 + $0x5c] sm:$0xf]
      %v1640 = vld [vmem:[%s3 + $0x60] sm:$0xf]
      %v1641 = vld [vmem:[%s3 + $0x64] sm:$0xf]
      %v1642 = vld [vmem:[%s3 + $0x68] sm:$0xf]
      %v1643 = vld [vmem:[%s3 + $0x6c] sm:$0xf]
      %v1644 = vld [vmem:[%s3 + $0x70] sm:$0xf]
      %v1645 = vld [vmem:[%s3 + $0x74] sm:$0xf]
      %v1646 = vld [vmem:[%s3 + $0x78] sm:$0xf]
      %v1647 = vld [vmem:[%s3 + $0x7c] sm:$0xf]
      %v1648 = vld [vmem:[#allocation2 + $0x8] sm:$0x11]
      %v1649 = vld [vmem:[#allocation2 + $0x18] sm:$0x11]
      %v1650 = vld [vmem:[#allocation2 + $0x28] sm:$0x11]
      %v1651 = vld [vmem:[#allocation2 + $0x38] sm:$0x11]
      %v1652 = vld [vmem:[#allocation2 + $0x48] sm:$0x11]
      %v1653 = vld [vmem:[#allocation2 + $0x58] sm:$0x11]
      %v1654 = vld [vmem:[#allocation2 + $0x68] sm:$0x11]
      %v1655 = vld [vmem:[#allocation2 + $0x78] sm:$0x11]
      %v1657 = vshrl.u32 %v1608, 16
      %v1659 = vrot.slane %v1657, 4
      %v1660 = vshll.u32 %v1608, 16
      %v1662 = vrot.slane %v1660, 5
      %v1663 = vor.u32 %v1659, %v1662
      %v1664 = vrot.slane %v1663, 4
      %v1666 = vshll.u32 %v1648, 16
      %v1668 = vrot.slane %v1666, 5
      %v1669 = vsel %vm437, %v1664, %v1668
      %v1671 = vshrl.u32 %v1609, 16
      %v1673 = vrot.slane %v1671, 4
      %v1674 = vshll.u32 %v1609, 16
      %v1676 = vrot.slane %v1674, 5
      %v1677 = vor.u32 %v1673, %v1676
      %v1678 = vrot.slane %v1677, 4
      %v1680 = vshll.u32 %v1649, 16
      %v1682 = vrot.slane %v1680, 5
      %v1683 = vsel %vm437, %v1678, %v1682
      %v1685 = vshrl.u32 %v1610, 16
      %v1687 = vrot.slane %v1685, 4
      %v1688 = vshll.u32 %v1610, 16
      %v1690 = vrot.slane %v1688, 5
      %v1691 = vor.u32 %v1687, %v1690
      %v1692 = vrot.slane %v1691, 4
      %v1694 = vshll.u32 %v1650, 16
      %v1696 = vrot.slane %v1694, 5
      %v1697 = vsel %vm437, %v1692, %v1696
      %v1699 = vshrl.u32 %v1611, 16
      %v1701 = vrot.slane %v1699, 4
      %v1702 = vshll.u32 %v1611, 16
      %v1704 = vrot.slane %v1702, 5
      %v1705 = vor.u32 %v1701, %v1704
      %v1706 = vrot.slane %v1705, 4
      %v1708 = vshll.u32 %v1651, 16
      %v1710 = vrot.slane %v1708, 5
      %v1711 = vsel %vm437, %v1706, %v1710
      %v1713 = vshrl.u32 %v1612, 16
      %v1715 = vrot.slane %v1713, 4
      %v1716 = vshll.u32 %v1612, 16
      %v1718 = vrot.slane %v1716, 5
      %v1719 = vor.u32 %v1715, %v1718
      %v1720 = vrot.slane %v1719, 4
      %v1722 = vshll.u32 %v1652, 16
      %v1724 = vrot.slane %v1722, 5
      %v1725 = vsel %vm437, %v1720, %v1724
      %v1727 = vshrl.u32 %v1613, 16
      %v1729 = vrot.slane %v1727, 4
      %v1730 = vshll.u32 %v1613, 16
      %v1732 = vrot.slane %v1730, 5
      %v1733 = vor.u32 %v1729, %v1732
      %v1734 = vrot.slane %v1733, 4
      %v1736 = vshll.u32 %v1653, 16
      %v1738 = vrot.slane %v1736, 5
      %v1739 = vsel %vm437, %v1734, %v1738
      %v1741 = vshrl.u32 %v1614, 16
      %v1743 = vrot.slane %v1741, 4
      %v1744 = vshll.u32 %v1614, 16
      %v1746 = vrot.slane %v1744, 5
      %v1747 = vor.u32 %v1743, %v1746
      %v1748 = vrot.slane %v1747, 4
      %v1750 = vshll.u32 %v1654, 16
      %v1752 = vrot.slane %v1750, 5
      %v1753 = vsel %vm437, %v1748, %v1752
      %v1755 = vshrl.u32 %v1615, 16
      %v1757 = vrot.slane %v1755, 4
      %v1758 = vshll.u32 %v1615, 16
      %v1760 = vrot.slane %v1758, 5
      %v1761 = vor.u32 %v1757, %v1760
      %v1762 = vrot.slane %v1761, 4
      %v1764 = vshll.u32 %v1655, 16
      %v1766 = vrot.slane %v1764, 5
      %v1767 = vsel %vm437, %v1762, %v1766
      %s1768 = scalar_lea.vmem %s3, 128
      %v1769 = vld [vmem:[%s1768] sm:$0xf]
      %v1770 = vld [vmem:[%s1768 + $0x4] sm:$0xf]
      %v1771 = vld [vmem:[%s1768 + $0x8] sm:$0xf]
      %v1772 = vld [vmem:[%s1768 + $0xc] sm:$0xf]
      %v1773 = vld [vmem:[%s1768 + $0x10] sm:$0xf]
      %v1774 = vld [vmem:[%s1768 + $0x14] sm:$0xf]
      %v1775 = vld [vmem:[%s1768 + $0x18] sm:$0xf]
      %v1776 = vld [vmem:[%s1768 + $0x1c] sm:$0xf]
      %v1777 = vld [vmem:[%s1768 + $0x20] sm:$0xf]
      %v1778 = vld [vmem:[%s1768 + $0x24] sm:$0xf]
      %v1779 = vld [vmem:[%s1768 + $0x28] sm:$0xf]
      %v1780 = vld [vmem:[%s1768 + $0x2c] sm:$0xf]
      %v1781 = vld [vmem:[%s1768 + $0x30] sm:$0xf]
      %v1782 = vld [vmem:[%s1768 + $0x34] sm:$0xf]
      %v1783 = vld [vmem:[%s1768 + $0x38] sm:$0xf]
      %v1784 = vld [vmem:[%s1768 + $0x3c] sm:$0xf]
      %v1785 = vld [vmem:[%s1768 + $0x40] sm:$0xf]
      %v1786 = vld [vmem:[%s1768 + $0x44] sm:$0xf]
      %v1787 = vld [vmem:[%s1768 + $0x48] sm:$0xf]
      %v1788 = vld [vmem:[%s1768 + $0x4c] sm:$0xf]
      %v1789 = vld [vmem:[%s1768 + $0x50] sm:$0xf]
      %v1790 = vld [vmem:[%s1768 + $0x54] sm:$0xf]
      %v1791 = vld [vmem:[%s1768 + $0x58] sm:$0xf]
      %v1792 = vld [vmem:[%s1768 + $0x5c] sm:$0xf]
      %v1793 = vld [vmem:[%s1768 + $0x60] sm:$0xf]
      %v1794 = vld [vmem:[%s1768 + $0x64] sm:$0xf]
      %v1795 = vld [vmem:[%s1768 + $0x68] sm:$0xf]
      %v1796 = vld [vmem:[%s1768 + $0x6c] sm:$0xf]
      %v1797 = vld [vmem:[%s1768 + $0x70] sm:$0xf]
      %v1798 = vld [vmem:[%s1768 + $0x74] sm:$0xf]
      %v1799 = vld [vmem:[%s1768 + $0x78] sm:$0xf]
      %v1800 = vld [vmem:[%s1768 + $0x7c] sm:$0xf]
      %v1801 = vunpack.c.l.b16 %v1669
      %v1802 = vunpack.c.h.b16 %v1669
      %v1803 = vunpack.c.l.b16 %v1683
      %v1804 = vunpack.c.h.b16 %v1683
      %v1805 = vunpack.c.l.b16 %v1697
      %v1806 = vunpack.c.h.b16 %v1697
      %v1807 = vunpack.c.l.b16 %v1711
      %v1808 = vunpack.c.h.b16 %v1711
      %v1809 = vunpack.c.l.b16 %v1725
      %v1810 = vunpack.c.h.b16 %v1725
      %v1811 = vunpack.c.l.b16 %v1739
      %v1812 = vunpack.c.h.b16 %v1739
      %v1813 = vunpack.c.l.b16 %v1753
      %v1814 = vunpack.c.h.b16 %v1753
      %v1815 = vunpack.c.l.b16 %v1767
      %v1816 = vunpack.c.h.b16 %v1767
      %v1817 = vpack.c.b16 %v1803, %v1801
      %v1818 = vpack.c.b16 %v1804, %v1802
      %v1819 = vpack.c.b16 %v1807, %v1805
      %v1820 = vpack.c.b16 %v1808, %v1806
      %v1821 = vpack.c.b16 %v1811, %v1809
      %v1822 = vpack.c.b16 %v1812, %v1810
      %v1823 = vpack.c.b16 %v1815, %v1813
      %v1824 = vpack.c.b16 %v1816, %v1814
      %v1865 = vunpack.c.l.b16 %v1769
      %v1866 = vunpack.c.l.b16 %v1770
      %v1867 = vunpack.c.l.b16 %v1771
      %v1868 = vunpack.c.l.b16 %v1772
      %v1869 = vunpack.c.l.b16 %v1773
      %v1870 = vunpack.c.l.b16 %v1774
      %v1871 = vunpack.c.l.b16 %v1775
      %v1872 = vunpack.c.l.b16 %v1776
      %v1873 = vunpack.c.l.b16 %v1777
      %v1874 = vunpack.c.l.b16 %v1778
      %v1875 = vunpack.c.l.b16 %v1779
      %v1876 = vunpack.c.l.b16 %v1780
      %v1877 = vunpack.c.l.b16 %v1781
      %v1878 = vunpack.c.l.b16 %v1782
      %v1879 = vunpack.c.l.b16 %v1783
      %v1880 = vunpack.c.l.b16 %v1784
      %v1881 = vunpack.c.l.b16 %v1785
      %v1882 = vunpack.c.l.b16 %v1786
      %v1883 = vunpack.c.l.b16 %v1787
      %v1884 = vunpack.c.l.b16 %v1788
      %v1885 = vunpack.c.l.b16 %v1789
      %v1886 = vunpack.c.l.b16 %v1790
      %v1887 = vunpack.c.l.b16 %v1791
      %v1888 = vunpack.c.l.b16 %v1792
      %v1889 = vunpack.c.l.b16 %v1793
      %v1890 = vunpack.c.l.b16 %v1794
      %v1891 = vunpack.c.l.b16 %v1795
      %v1892 = vunpack.c.l.b16 %v1796
      %v1893 = vunpack.c.l.b16 %v1797
      %v1894 = vunpack.c.l.b16 %v1798
      %v1895 = vunpack.c.l.b16 %v1799
      %v1896 = vunpack.c.l.b16 %v1800
      %v1897 = vpack.c.b16 %v1866, %v1865
      %v1898 = vpack.c.b16 %v1868, %v1867
      %v1899 = vpack.c.b16 %v1870, %v1869
      %v1900 = vpack.c.b16 %v1872, %v1871
      %v1901 = vpack.c.b16 %v1874, %v1873
      %v1902 = vpack.c.b16 %v1876, %v1875
      %v1903 = vpack.c.b16 %v1878, %v1877
      %v1904 = vpack.c.b16 %v1880, %v1879
      %v1905 = vpack.c.b16 %v1882, %v1881
      %v1906 = vpack.c.b16 %v1884, %v1883
      %v1907 = vpack.c.b16 %v1886, %v1885
      %v1908 = vpack.c.b16 %v1888, %v1887
      %v1909 = vpack.c.b16 %v1890, %v1889
      %v1910 = vpack.c.b16 %v1892, %v1891
      %v1911 = vpack.c.b16 %v1894, %v1893
      %v1912 = vpack.c.b16 %v1896, %v1895
      %1929 = vmatprep.subr.bf16.mxu0 0
      %1930 = vmatpush1.bf16.msra.mxu0 %v1897
      %1931 = vmatprep.subr.bf16.mxu0 0
      %1932 = vmatpush1.bf16.msra.mxu0 %v1898
      %1933 = vmatprep.subr.bf16.mxu0 0
      %1934 = vmatpush1.bf16.msra.mxu0 %v1899
      %1935 = vmatprep.subr.bf16.mxu0 0
      %1936 = vmatpush1.bf16.msra.mxu0 %v1900
      %1937 = vmatprep.subr.bf16.mxu0 0
      %1938 = vmatpush1.bf16.msra.mxu0 %v1901
      %1939 = vmatprep.subr.bf16.mxu0 0
      %1940 = vmatpush1.bf16.msra.mxu0 %v1902
      %1941 = vmatprep.subr.bf16.mxu0 0
      %1942 = vmatpush1.bf16.msra.mxu0 %v1903
      %1943 = vmatprep.subr.bf16.mxu0 0
      %1944 = vmatpush1.bf16.msra.mxu0 %v1904
      %1945 = vmatprep.subr.bf16.mxu0 0
      %1946 = vmatpush1.bf16.msra.mxu0 %v1905
      %1947 = vmatprep.subr.bf16.mxu0 0
      %1948 = vmatpush1.bf16.msra.mxu0 %v1906
      %1949 = vmatprep.subr.bf16.mxu0 0
      %1950 = vmatpush1.bf16.msra.mxu0 %v1907
      %1951 = vmatprep.subr.bf16.mxu0 0
      %1952 = vmatpush1.bf16.msra.mxu0 %v1908
      %1953 = vmatprep.subr.bf16.mxu0 0
      %1954 = vmatpush1.bf16.msra.mxu0 %v1909
      %1955 = vmatprep.subr.bf16.mxu0 0
      %1956 = vmatpush1.bf16.msra.mxu0 %v1910
      %1957 = vmatprep.subr.bf16.mxu0 0
      %1958 = vmatpush1.bf16.msra.mxu0 %v1911
      %1959 = vmatprep.subr.bf16.mxu0 0
      %1960 = vmatpush1.bf16.msra.mxu0 %v1912
      %1961 = vmatprep.mubr.bf16.mxu0 %v1818
      %1962 = vmatmul.mubr.bf16.gmra.mrb[0].mxu0 %v1817
      %v1963 = vpop.f32.mrb[0].mxu0
      %v1964 = vadd.f32 0.0, %v1963
      %v1965 = vpop.f32.mrb[0].mxu0
      %v1966 = vpop.f32.mrb[0].mxu0
      %v1967 = vadd.f32 0.0, %v1966
      %v1968 = vpop.f32.mrb[0].mxu0
      %1969 = vmatprep.mubr.bf16.mxu0 %v1820
      %1970 = vmatmul.mubr.bf16.gmra.mrb[0].mxu0 %v1819
      %v1971 = vpop.f32.mrb[0].mxu0
      %v1972 = vadd.f32 0.0, %v1971
      %v1973 = vpop.f32.mrb[0].mxu0
      %v1974 = vpop.f32.mrb[0].mxu0
      %v1975 = vadd.f32 0.0, %v1974
      %v1976 = vpop.f32.mrb[0].mxu0
      %1977 = vmatprep.mubr.bf16.mxu0 %v1822
      %1978 = vmatmul.mubr.bf16.gmra.mrb[0].mxu0 %v1821
      %v1979 = vpop.f32.mrb[0].mxu0
      %v1980 = vadd.f32 0.0, %v1979
      %v1981 = vpop.f32.mrb[0].mxu0
      %v1982 = vpop.f32.mrb[0].mxu0
      %v1983 = vadd.f32 0.0, %v1982
      %v1984 = vpop.f32.mrb[0].mxu0
      %1985 = vmatprep.mubr.bf16.mxu0 %v1824
      %1986 = vmatmul.mubr.bf16.gmra.mrb[0].mxu0 %v1823
      %v1987 = vpop.f32.mrb[0].mxu0
      %v1988 = vadd.f32 0.0, %v1987
      %v1989 = vpop.f32.mrb[0].mxu0
      %v1990 = vpop.f32.mrb[0].mxu0
      %v1991 = vadd.f32 0.0, %v1990
      %v1992 = vpop.f32.mrb[0].mxu0
      %1993 = vdwg.mxu0
      %v2002 = vunpack.c.l.b16 %v1608
      %v2003 = vunpack.c.h.b16 %v1608
      %v2004 = vunpack.c.l.b16 %v1609
      %v2005 = vunpack.c.h.b16 %v1609
      %v2006 = vunpack.c.l.b16 %v1610
      %v2007 = vunpack.c.h.b16 %v1610
      %v2008 = vunpack.c.l.b16 %v1611
      %v2009 = vunpack.c.h.b16 %v1611
      %v2010 = vunpack.c.l.b16 %v1612
      %v2011 = vunpack.c.h.b16 %v1612
      %v2012 = vunpack.c.l.b16 %v1613
      %v2013 = vunpack.c.h.b16 %v1613
      %v2014 = vunpack.c.l.b16 %v1614
      %v2015 = vunpack.c.h.b16 %v1614
      %v2016 = vunpack.c.l.b16 %v1615
      %v2017 = vunpack.c.h.b16 %v1615
      %v2018 = vpack.c.b16 %v2004, %v2002
      %v2019 = vpack.c.b16 %v2005, %v2003
      %v2020 = vpack.c.b16 %v2008, %v2006
      %v2021 = vpack.c.b16 %v2009, %v2007
      %v2022 = vpack.c.b16 %v2012, %v2010
      %v2023 = vpack.c.b16 %v2013, %v2011
      %v2024 = vpack.c.b16 %v2016, %v2014
      %v2025 = vpack.c.b16 %v2017, %v2015
      %v2066 = vunpack.c.l.b16 %v1616
      %v2067 = vunpack.c.l.b16 %v1617
      %v2068 = vunpack.c.l.b16 %v1618
      %v2069 = vunpack.c.l.b16 %v1619
      %v2070 = vunpack.c.l.b16 %v1620
      %v2071 = vunpack.c.l.b16 %v1621
      %v2072 = vunpack.c.l.b16 %v1622
      %v2073 = vunpack.c.l.b16 %v1623
      %v2074 = vunpack.c.l.b16 %v1624
      %v2075 = vunpack.c.l.b16 %v1625
      %v2076 = vunpack.c.l.b16 %v1626
      %v2077 = vunpack.c.l.b16 %v1627
      %v2078 = vunpack.c.l.b16 %v1628
      %v2079 = vunpack.c.l.b16 %v1629
      %v2080 = vunpack.c.l.b16 %v1630
      %v2081 = vunpack.c.l.b16 %v1631
      %v2082 = vunpack.c.l.b16 %v1632
      %v2083 = vunpack.c.l.b16 %v1633
      %v2084 = vunpack.c.l.b16 %v1634
      %v2085 = vunpack.c.l.b16 %v1635
      %v2086 = vunpack.c.l.b16 %v1636
      %v2087 = vunpack.c.l.b16 %v1637
      %v2088 = vunpack.c.l.b16 %v1638
      %v2089 = vunpack.c.l.b16 %v1639
      %v2090 = vunpack.c.l.b16 %v1640
      %v2091 = vunpack.c.l.b16 %v1641
      %v2092 = vunpack.c.l.b16 %v1642
      %v2093 = vunpack.c.l.b16 %v1643
      %v2094 = vunpack.c.l.b16 %v1644
      %v2095 = vunpack.c.l.b16 %v1645
      %v2096 = vunpack.c.l.b16 %v1646
      %v2097 = vunpack.c.l.b16 %v1647
      %v2098 = vpack.c.b16 %v2067, %v2066
      %v2099 = vpack.c.b16 %v2069, %v2068
      %v2100 = vpack.c.b16 %v2071, %v2070
      %v2101 = vpack.c.b16 %v2073, %v2072
      %v2102 = vpack.c.b16 %v2075, %v2074
      %v2103 = vpack.c.b16 %v2077, %v2076
      %v2104 = vpack.c.b16 %v2079, %v2078
      %v2105 = vpack.c.b16 %v2081, %v2080
      %v2106 = vpack.c.b16 %v2083, %v2082
      %v2107 = vpack.c.b16 %v2085, %v2084
      %v2108 = vpack.c.b16 %v2087, %v2086
      %v2109 = vpack.c.b16 %v2089, %v2088
      %v2110 = vpack.c.b16 %v2091, %v2090
      %v2111 = vpack.c.b16 %v2093, %v2092
      %v2112 = vpack.c.b16 %v2095, %v2094
      %v2113 = vpack.c.b16 %v2097, %v2096
      %2130 = vmatprep.subr.bf16.mxu0 0
      %2131 = vmatpush1.bf16.msra.mxu0 %v2098
      %2132 = vmatprep.subr.bf16.mxu0 0
      %2133 = vmatpush1.bf16.msra.mxu0 %v2099
      %2134 = vmatprep.subr.bf16.mxu0 0
      %2135 = vmatpush1.bf16.msra.mxu0 %v2100
      %2136 = vmatprep.subr.bf16.mxu0 0
      %2137 = vmatpush1.bf16.msra.mxu0 %v2101
      %2138 = vmatprep.subr.bf16.mxu0 0
      %2139 = vmatpush1.bf16.msra.mxu0 %v2102
      %2140 = vmatprep.subr.bf16.mxu0 0
      %2141 = vmatpush1.bf16.msra.mxu0 %v2103
      %2142 = vmatprep.subr.bf16.mxu0 0
      %2143 = vmatpush1.bf16.msra.mxu0 %v2104
      %2144 = vmatprep.subr.bf16.mxu0 0
      %2145 = vmatpush1.bf16.msra.mxu0 %v2105
      %2146 = vmatprep.subr.bf16.mxu0 0
      %2147 = vmatpush1.bf16.msra.mxu0 %v2106
      %2148 = vmatprep.subr.bf16.mxu0 0
      %2149 = vmatpush1.bf16.msra.mxu0 %v2107
      %2150 = vmatprep.subr.bf16.mxu0 0
      %2151 = vmatpush1.bf16.msra.mxu0 %v2108
      %2152 = vmatprep.subr.bf16.mxu0 0
      %2153 = vmatpush1.bf16.msra.mxu0 %v2109
      %2154 = vmatprep.subr.bf16.mxu0 0
      %2155 = vmatpush1.bf16.msra.mxu0 %v2110
      %2156 = vmatprep.subr.bf16.mxu0 0
      %2157 = vmatpush1.bf16.msra.mxu0 %v2111
      %2158 = vmatprep.subr.bf16.mxu0 0
      %2159 = vmatpush1.bf16.msra.mxu0 %v2112
      %2160 = vmatprep.subr.bf16.mxu0 0
      %2161 = vmatpush1.bf16.msra.mxu0 %v2113
      %2162 = vmatprep.mubr.bf16.mxu0 %v2019
      %2163 = vmatmul.mubr.bf16.gmra.mrb[0].mxu0 %v2018
      %v2164 = vpop.f32.mrb[0].mxu0
      %v2165 = vadd.f32 %v1964, %v2164
      %v2166 = vpop.f32.mrb[0].mxu0
      %v2167 = vpop.f32.mrb[0].mxu0
      %v2168 = vadd.f32 %v1967, %v2167
      %v2169 = vpop.f32.mrb[0].mxu0
      %2170 = vmatprep.mubr.bf16.mxu0 %v2021
      %2171 = vmatmul.mubr.bf16.gmra.mrb[0].mxu0 %v2020
      %v2172 = vpop.f32.mrb[0].mxu0
      %v2173 = vadd.f32 %v1972, %v2172
      %v2174 = vpop.f32.mrb[0].mxu0
      %v2175 = vpop.f32.mrb[0].mxu0
      %v2176 = vadd.f32 %v1975, %v2175
      %v2177 = vpop.f32.mrb[0].mxu0
      %2178 = vmatprep.mubr.bf16.mxu0 %v2023
      %2179 = vmatmul.mubr.bf16.gmra.mrb[0].mxu0 %v2022
      %v2180 = vpop.f32.mrb[0].mxu0
      %v2181 = vadd.f32 %v1980, %v2180
      %v2182 = vpop.f32.mrb[0].mxu0
      %v2183 = vpop.f32.mrb[0].mxu0
      %v2184 = vadd.f32 %v1983, %v2183
      %v2185 = vpop.f32.mrb[0].mxu0
      %2186 = vmatprep.mubr.bf16.mxu0 %v2025
      %2187 = vmatmul.mubr.bf16.gmra.mrb[0].mxu0 %v2024
      %v2188 = vpop.f32.mrb[0].mxu0
      %v2189 = vadd.f32 %v1988, %v2188
      %v2190 = vpop.f32.mrb[0].mxu0
      %v2191 = vpop.f32.mrb[0].mxu0
      %v2192 = vadd.f32 %v1991, %v2191
      %v2193 = vpop.f32.mrb[0].mxu0
      %2194 = vdwg.mxu0
      %v2195 = vld [vmem:[%s1378] sm:$0xff]
      %v2196 = vld [vmem:[%s1378 + $0x10] sm:$0xff]
      %v2197 = vld [vmem:[%s1378 + $0x20] sm:$0xff]
      %v2198 = vld [vmem:[%s1378 + $0x30] sm:$0xff]
      %v2199 = vld [vmem:[%s1378 + $0x40] sm:$0xff]
      %v2200 = vld [vmem:[%s1378 + $0x50] sm:$0xff]
      %v2201 = vld [vmem:[%s1378 + $0x60] sm:$0xff]
      %v2202 = vld [vmem:[%s1378 + $0x70] sm:$0xff]
      %s2203 = scalar_lea.vmem %s3, 256
      %v2204 = vld [vmem:[%s2203] sm:$0xf]
      %v2205 = vld [vmem:[%s2203 + $0x4] sm:$0xf]
      %v2206 = vld [vmem:[%s2203 + $0x8] sm:$0xf]
      %v2207 = vld [vmem:[%s2203 + $0xc] sm:$0xf]
      %v2208 = vld [vmem:[%s2203 + $0x10] sm:$0xf]
      %v2209 = vld [vmem:[%s2203 + $0x14] sm:$0xf]
      %v2210 = vld [vmem:[%s2203 + $0x18] sm:$0xf]
      %v2211 = vld [vmem:[%s2203 + $0x1c] sm:$0xf]
      %v2212 = vld [vmem:[%s2203 + $0x20] sm:$0xf]
      %v2213 = vld [vmem:[%s2203 + $0x24] sm:$0xf]
      %v2214 = vld [vmem:[%s2203 + $0x28] sm:$0xf]
      %v2215 = vld [vmem:[%s2203 + $0x2c] sm:$0xf]
      %v2216 = vld [vmem:[%s2203 + $0x30] sm:$0xf]
      %v2217 = vld [vmem:[%s2203 + $0x34] sm:$0xf]
      %v2218 = vld [vmem:[%s2203 + $0x38] sm:$0xf]
      %v2219 = vld [vmem:[%s2203 + $0x3c] sm:$0xf]
      %v2220 = vld [vmem:[%s2203 + $0x40] sm:$0xf]
      %v2221 = vld [vmem:[%s2203 + $0x44] sm:$0xf]
      %v2222 = vld [vmem:[%s2203 + $0x48] sm:$0xf]
      %v2223 = vld [vmem:[%s2203 + $0x4c] sm:$0xf]
      %v2224 = vld [vmem:[%s2203 + $0x50] sm:$0xf]
      %v2225 = vld [vmem:[%s2203 + $0x54] sm:$0xf]
      %v2226 = vld [vmem:[%s2203 + $0x58] sm:$0xf]
      %v2227 = vld [vmem:[%s2203 + $0x5c] sm:$0xf]
      %v2228 = vld [vmem:[%s2203 + $0x60] sm:$0xf]
      %v2229 = vld [vmem:[%s2203 + $0x64] sm:$0xf]
      %v2230 = vld [vmem:[%s2203 + $0x68] sm:$0xf]
      %v2231 = vld [vmem:[%s2203 + $0x6c] sm:$0xf]
      %v2232 = vld [vmem:[%s2203 + $0x70] sm:$0xf]
      %v2233 = vld [vmem:[%s2203 + $0x74] sm:$0xf]
      %v2234 = vld [vmem:[%s2203 + $0x78] sm:$0xf]
      %v2235 = vld [vmem:[%s2203 + $0x7c] sm:$0xf]
      %v2244 = vunpack.c.l.b16 %v2195
      %v2245 = vunpack.c.h.b16 %v2195
      %v2246 = vunpack.c.l.b16 %v2196
      %v2247 = vunpack.c.h.b16 %v2196
      %v2248 = vunpack.c.l.b16 %v2197
      %v2249 = vunpack.c.h.b16 %v2197
      %v2250 = vunpack.c.l.b16 %v2198
      %v2251 = vunpack.c.h.b16 %v2198
      %v2252 = vunpack.c.l.b16 %v2199
      %v2253 = vunpack.c.h.b16 %v2199
      %v2254 = vunpack.c.l.b16 %v2200
      %v2255 = vunpack.c.h.b16 %v2200
      %v2256 = vunpack.c.l.b16 %v2201
      %v2257 = vunpack.c.h.b16 %v2201
      %v2258 = vunpack.c.l.b16 %v2202
      %v2259 = vunpack.c.h.b16 %v2202
      %v2260 = vpack.c.b16 %v2246, %v2244
      %v2261 = vpack.c.b16 %v2247, %v2245
      %v2262 = vpack.c.b16 %v2250, %v2248
      %v2263 = vpack.c.b16 %v2251, %v2249
      %v2264 = vpack.c.b16 %v2254, %v2252
      %v2265 = vpack.c.b16 %v2255, %v2253
      %v2266 = vpack.c.b16 %v2258, %v2256
      %v2267 = vpack.c.b16 %v2259, %v2257
      %v2308 = vunpack.c.l.b16 %v2204
      %v2309 = vunpack.c.l.b16 %v2205
      %v2310 = vunpack.c.l.b16 %v2206
      %v2311 = vunpack.c.l.b16 %v2207
      %v2312 = vunpack.c.l.b16 %v2208
      %v2313 = vunpack.c.l.b16 %v2209
      %v2314 = vunpack.c.l.b16 %v2210
      %v2315 = vunpack.c.l.b16 %v2211
      %v2316 = vunpack.c.l.b16 %v2212
      %v2317 = vunpack.c.l.b16 %v2213
      %v2318 = vunpack.c.l.b16 %v2214
      %v2319 = vunpack.c.l.b16 %v2215
      %v2320 = vunpack.c.l.b16 %v2216
      %v2321 = vunpack.c.l.b16 %v2217
      %v2322 = vunpack.c.l.b16 %v2218
      %v2323 = vunpack.c.l.b16 %v2219
      %v2324 = vunpack.c.l.b16 %v2220
      %v2325 = vunpack.c.l.b16 %v2221
      %v2326 = vunpack.c.l.b16 %v2222
      %v2327 = vunpack.c.l.b16 %v2223
      %v2328 = vunpack.c.l.b16 %v2224
      %v2329 = vunpack.c.l.b16 %v2225
      %v2330 = vunpack.c.l.b16 %v2226
      %v2331 = vunpack.c.l.b16 %v2227
      %v2332 = vunpack.c.l.b16 %v2228
      %v2333 = vunpack.c.l.b16 %v2229
      %v2334 = vunpack.c.l.b16 %v2230
      %v2335 = vunpack.c.l.b16 %v2231
      %v2336 = vunpack.c.l.b16 %v2232
      %v2337 = vunpack.c.l.b16 %v2233
      %v2338 = vunpack.c.l.b16 %v2234
      %v2339 = vunpack.c.l.b16 %v2235
      %v2340 = vpack.c.b16 %v2309, %v2308
      %v2341 = vpack.c.b16 %v2311, %v2310
      %v2342 = vpack.c.b16 %v2313, %v2312
      %v2343 = vpack.c.b16 %v2315, %v2314
      %v2344 = vpack.c.b16 %v2317, %v2316
      %v2345 = vpack.c.b16 %v2319, %v2318
      %v2346 = vpack.c.b16 %v2321, %v2320
      %v2347 = vpack.c.b16 %v2323, %v2322
      %v2348 = vpack.c.b16 %v2325, %v2324
      %v2349 = vpack.c.b16 %v2327, %v2326
      %v2350 = vpack.c.b16 %v2329, %v2328
      %v2351 = vpack.c.b16 %v2331, %v2330
      %v2352 = vpack.c.b16 %v2333, %v2332
      %v2353 = vpack.c.b16 %v2335, %v2334
      %v2354 = vpack.c.b16 %v2337, %v2336
      %v2355 = vpack.c.b16 %v2339, %v2338
      %2372 = vmatprep.subr.bf16.mxu0 0
      %2373 = vmatpush1.bf16.msra.mxu0 %v2340
      %2374 = vmatprep.subr.bf16.mxu0 0
      %2375 = vmatpush1.bf16.msra.mxu0 %v2341
      %2376 = vmatprep.subr.bf16.mxu0 0
      %2377 = vmatpush1.bf16.msra.mxu0 %v2342
      %2378 = vmatprep.subr.bf16.mxu0 0
      %2379 = vmatpush1.bf16.msra.mxu0 %v2343
      %2380 = vmatprep.subr.bf16.mxu0 0
      %2381 = vmatpush1.bf16.msra.mxu0 %v2344
      %2382 = vmatprep.subr.bf16.mxu0 0
      %2383 = vmatpush1.bf16.msra.mxu0 %v2345
      %2384 = vmatprep.subr.bf16.mxu0 0
      %2385 = vmatpush1.bf16.msra.mxu0 %v2346
      %2386 = vmatprep.subr.bf16.mxu0 0
      %2387 = vmatpush1.bf16.msra.mxu0 %v2347
      %2388 = vmatprep.subr.bf16.mxu0 0
      %2389 = vmatpush1.bf16.msra.mxu0 %v2348
      %2390 = vmatprep.subr.bf16.mxu0 0
      %2391 = vmatpush1.bf16.msra.mxu0 %v2349
      %2392 = vmatprep.subr.bf16.mxu0 0
      %2393 = vmatpush1.bf16.msra.mxu0 %v2350
      %2394 = vmatprep.subr.bf16.mxu0 0
      %2395 = vmatpush1.bf16.msra.mxu0 %v2351
      %2396 = vmatprep.subr.bf16.mxu0 0
      %2397 = vmatpush1.bf16.msra.mxu0 %v2352
      %2398 = vmatprep.subr.bf16.mxu0 0
      %2399 = vmatpush1.bf16.msra.mxu0 %v2353
      %2400 = vmatprep.subr.bf16.mxu0 0
      %2401 = vmatpush1.bf16.msra.mxu0 %v2354
      %2402 = vmatprep.subr.bf16.mxu0 0
      %2403 = vmatpush1.bf16.msra.mxu0 %v2355
      %2404 = vmatprep.mubr.bf16.mxu0 %v2261
      %2405 = vmatmul.mubr.bf16.gmra.mrb[0].mxu0 %v2260
      %v2406 = vpop.f32.mrb[0].mxu0
      %v2407 = vadd.f32 0.0, %v2406
      %v2408 = vpop.f32.mrb[0].mxu0
      %v2409 = vpop.f32.mrb[0].mxu0
      %v2410 = vadd.f32 0.0, %v2409
      %v2411 = vpop.f32.mrb[0].mxu0
      %2412 = vmatprep.mubr.bf16.mxu0 %v2263
      %2413 = vmatmul.mubr.bf16.gmra.mrb[0].mxu0 %v2262
      %v2414 = vpop.f32.mrb[0].mxu0
      %v2415 = vadd.f32 0.0, %v2414
      %v2416 = vpop.f32.mrb[0].mxu0
      %v2417 = vpop.f32.mrb[0].mxu0
      %v2418 = vadd.f32 0.0, %v2417
      %v2419 = vpop.f32.mrb[0].mxu0
      %2420 = vmatprep.mubr.bf16.mxu0 %v2265
      %2421 = vmatmul.mubr.bf16.gmra.mrb[0].mxu0 %v2264
      %v2422 = vpop.f32.mrb[0].mxu0
      %v2423 = vadd.f32 0.0, %v2422
      %v2424 = vpop.f32.mrb[0].mxu0
      %v2425 = vpop.f32.mrb[0].mxu0
      %v2426 = vadd.f32 0.0, %v2425
      %v2427 = vpop.f32.mrb[0].mxu0
      %2428 = vmatprep.mubr.bf16.mxu0 %v2267
      %2429 = vmatmul.mubr.bf16.gmra.mrb[0].mxu0 %v2266
      %v2430 = vpop.f32.mrb[0].mxu0
      %v2431 = vadd.f32 0.0, %v2430
      %v2432 = vpop.f32.mrb[0].mxu0
      %v2433 = vpop.f32.mrb[0].mxu0
      %v2434 = vadd.f32 0.0, %v2433
      %v2435 = vpop.f32.mrb[0].mxu0
      %2436 = vdwg.mxu0
      %v2437 = vadd.f32 %v2165, %v2407
      %v2438 = vadd.f32 %v2168, %v2410
      %v2439 = vadd.f32 %v2173, %v2415
      %v2440 = vadd.f32 %v2176, %v2418
      %v2441 = vadd.f32 %v2181, %v2423
      %v2442 = vadd.f32 %v2184, %v2426
      %v2443 = vadd.f32 %v2189, %v2431
      %v2444 = vadd.f32 %v2192, %v2434
      %v2445 = vld [vmem:[%s1378] sm:$0xff]
      %v2446 = vld [vmem:[%s1378 + $0x8] sm:$0x11]
      %v2447 = vld [vmem:[%s1378 + $0x10] sm:$0xff]
      %v2448 = vld [vmem:[%s1378 + $0x18] sm:$0x11]
      %v2449 = vld [vmem:[%s1378 + $0x20] sm:$0xff]
      %v2450 = vld [vmem:[%s1378 + $0x28] sm:$0x11]
      %v2451 = vld [vmem:[%s1378 + $0x30] sm:$0xff]
      %v2452 = vld [vmem:[%s1378 + $0x38] sm:$0x11]
      %v2453 = vld [vmem:[%s1378 + $0x40] sm:$0xff]
      %v2454 = vld [vmem:[%s1378 + $0x48] sm:$0x11]
      %v2455 = vld [vmem:[%s1378 + $0x50] sm:$0xff]
      %v2456 = vld [vmem:[%s1378 + $0x58] sm:$0x11]
      %v2457 = vld [vmem:[%s1378 + $0x60] sm:$0xff]
      %v2458 = vld [vmem:[%s1378 + $0x68] sm:$0x11]
      %v2459 = vld [vmem:[%s1378 + $0x70] sm:$0xff]
      %v2460 = vld [vmem:[%s1378 + $0x78] sm:$0x11]
      %v2462 = vshrl.u32 %v2445, 16
      %v2464 = vrot.slane %v2462, 4
      %v2465 = vshll.u32 %v2445, 16
      %v2467 = vrot.slane %v2465, 5
      %v2468 = vor.u32 %v2464, %v2467
      %v2469 = vrot.slane %v2468, 4
      %v2471 = vshll.u32 %v2446, 16
      %v2473 = vrot.slane %v2471, 5
      %v2474 = vsel %vm437, %v2469, %v2473
      %v2476 = vshrl.u32 %v2447, 16
      %v2478 = vrot.slane %v2476, 4
      %v2479 = vshll.u32 %v2447, 16
      %v2481 = vrot.slane %v2479, 5
      %v2482 = vor.u32 %v2478, %v2481
      %v2483 = vrot.slane %v2482, 4
      %v2485 = vshll.u32 %v2448, 16
      %v2487 = vrot.slane %v2485, 5
      %v2488 = vsel %vm437, %v2483, %v2487
      %v2490 = vshrl.u32 %v2449, 16
      %v2492 = vrot.slane %v2490, 4
      %v2493 = vshll.u32 %v2449, 16
      %v2495 = vrot.slane %v2493, 5
      %v2496 = vor.u32 %v2492, %v2495
      %v2497 = vrot.slane %v2496, 4
      %v2499 = vshll.u32 %v2450, 16
      %v2501 = vrot.slane %v2499, 5
      %v2502 = vsel %vm437, %v2497, %v2501
      %v2504 = vshrl.u32 %v2451, 16
      %v2506 = vrot.slane %v2504, 4
      %v2507 = vshll.u32 %v2451, 16
      %v2509 = vrot.slane %v2507, 5
      %v2510 = vor.u32 %v2506, %v2509
      %v2511 = vrot.slane %v2510, 4
      %v2513 = vshll.u32 %v2452, 16
      %v2515 = vrot.slane %v2513, 5
      %v2516 = vsel %vm437, %v2511, %v2515
      %v2518 = vshrl.u32 %v2453, 16
      %v2520 = vrot.slane %v2518, 4
      %v2521 = vshll.u32 %v2453, 16
      %v2523 = vrot.slane %v2521, 5
      %v2524 = vor.u32 %v2520, %v2523
      %v2525 = vrot.slane %v2524, 4
      %v2527 = vshll.u32 %v2454, 16
      %v2529 = vrot.slane %v2527, 5
      %v2530 = vsel %vm437, %v2525, %v2529
      %v2532 = vshrl.u32 %v2455, 16
      %v2534 = vrot.slane %v2532, 4
      %v2535 = vshll.u32 %v2455, 16
      %v2537 = vrot.slane %v2535, 5
      %v2538 = vor.u32 %v2534, %v2537
      %v2539 = vrot.slane %v2538, 4
      %v2541 = vshll.u32 %v2456, 16
      %v2543 = vrot.slane %v2541, 5
      %v2544 = vsel %vm437, %v2539, %v2543
      %v2546 = vshrl.u32 %v2457, 16
      %v2548 = vrot.slane %v2546, 4
      %v2549 = vshll.u32 %v2457, 16
      %v2551 = vrot.slane %v2549, 5
      %v2552 = vor.u32 %v2548, %v2551
      %v2553 = vrot.slane %v2552, 4
      %v2555 = vshll.u32 %v2458, 16
      %v2557 = vrot.slane %v2555, 5
      %v2558 = vsel %vm437, %v2553, %v2557
      %v2560 = vshrl.u32 %v2459, 16
      %v2562 = vrot.slane %v2560, 4
      %v2563 = vshll.u32 %v2459, 16
      %v2565 = vrot.slane %v2563, 5
      %v2566 = vor.u32 %v2562, %v2565
      %v2567 = vrot.slane %v2566, 4
      %v2569 = vshll.u32 %v2460, 16
      %v2571 = vrot.slane %v2569, 5
      %v2572 = vsel %vm437, %v2567, %v2571
      %s2573 = scalar_lea.vmem %s3, 384
      %v2574 = vld [vmem:[%s2573] sm:$0xf]
      %v2575 = vld [vmem:[%s2573 + $0x4] sm:$0xf]
      %v2576 = vld [vmem:[%s2573 + $0x8] sm:$0xf]
      %v2577 = vld [vmem:[%s2573 + $0xc] sm:$0xf]
      %v2578 = vld [vmem:[%s2573 + $0x10] sm:$0xf]
      %v2579 = vld [vmem:[%s2573 + $0x14] sm:$0xf]
      %v2580 = vld [vmem:[%s2573 + $0x18] sm:$0xf]
      %v2581 = vld [vmem:[%s2573 + $0x1c] sm:$0xf]
      %v2582 = vld [vmem:[%s2573 + $0x20] sm:$0xf]
      %v2583 = vld [vmem:[%s2573 + $0x24] sm:$0xf]
      %v2584 = vld [vmem:[%s2573 + $0x28] sm:$0xf]
      %v2585 = vld [vmem:[%s2573 + $0x2c] sm:$0xf]
      %v2586 = vld [vmem:[%s2573 + $0x30] sm:$0xf]
      %v2587 = vld [vmem:[%s2573 + $0x34] sm:$0xf]
      %v2588 = vld [vmem:[%s2573 + $0x38] sm:$0xf]
      %v2589 = vld [vmem:[%s2573 + $0x3c] sm:$0xf]
      %v2590 = vld [vmem:[%s2573 + $0x40] sm:$0xf]
      %v2591 = vld [vmem:[%s2573 + $0x44] sm:$0xf]
      %v2592 = vld [vmem:[%s2573 + $0x48] sm:$0xf]
      %v2593 = vld [vmem:[%s2573 + $0x4c] sm:$0xf]
      %v2594 = vld [vmem:[%s2573 + $0x50] sm:$0xf]
      %v2595 = vld [vmem:[%s2573 + $0x54] sm:$0xf]
      %v2596 = vld [vmem:[%s2573 + $0x58] sm:$0xf]
      %v2597 = vld [vmem:[%s2573 + $0x5c] sm:$0xf]
      %v2598 = vld [vmem:[%s2573 + $0x60] sm:$0xf]
      %v2599 = vld [vmem:[%s2573 + $0x64] sm:$0xf]
      %v2600 = vld [vmem:[%s2573 + $0x68] sm:$0xf]
      %v2601 = vld [vmem:[%s2573 + $0x6c] sm:$0xf]
      %v2602 = vld [vmem:[%s2573 + $0x70] sm:$0xf]
      %v2603 = vld [vmem:[%s2573 + $0x74] sm:$0xf]
      %v2604 = vld [vmem:[%s2573 + $0x78] sm:$0xf]
      %v2605 = vld [vmem:[%s2573 + $0x7c] sm:$0xf]
      %v2606 = vunpack.c.l.b16 %v2474
      %v2607 = vunpack.c.h.b16 %v2474
      %v2608 = vunpack.c.l.b16 %v2488
      %v2609 = vunpack.c.h.b16 %v2488
      %v2610 = vunpack.c.l.b16 %v2502
      %v2611 = vunpack.c.h.b16 %v2502
      %v2612 = vunpack.c.l.b16 %v2516
      %v2613 = vunpack.c.h.b16 %v2516
      %v2614 = vunpack.c.l.b16 %v2530
      %v2615 = vunpack.c.h.b16 %v2530
      %v2616 = vunpack.c.l.b16 %v2544
      %v2617 = vunpack.c.h.b16 %v2544
      %v2618 = vunpack.c.l.b16 %v2558
      %v2619 = vunpack.c.h.b16 %v2558
      %v2620 = vunpack.c.l.b16 %v2572
      %v2621 = vunpack.c.h.b16 %v2572
      %v2622 = vpack.c.b16 %v2608, %v2606
      %v2623 = vpack.c.b16 %v2609, %v2607
      %v2624 = vpack.c.b16 %v2612, %v2610
      %v2625 = vpack.c.b16 %v2613, %v2611
      %v2626 = vpack.c.b16 %v2616, %v2614
      %v2627 = vpack.c.b16 %v2617, %v2615
      %v2628 = vpack.c.b16 %v2620, %v2618
      %v2629 = vpack.c.b16 %v2621, %v2619
      %v2670 = vunpack.c.l.b16 %v2574
      %v2671 = vunpack.c.l.b16 %v2575
      %v2672 = vunpack.c.l.b16 %v2576
      %v2673 = vunpack.c.l.b16 %v2577
      %v2674 = vunpack.c.l.b16 %v2578
      %v2675 = vunpack.c.l.b16 %v2579
      %v2676 = vunpack.c.l.b16 %v2580
      %v2677 = vunpack.c.l.b16 %v2581
      %v2678 = vunpack.c.l.b16 %v2582
      %v2679 = vunpack.c.l.b16 %v2583
      %v2680 = vunpack.c.l.b16 %v2584
      %v2681 = vunpack.c.l.b16 %v2585
      %v2682 = vunpack.c.l.b16 %v2586
      %v2683 = vunpack.c.l.b16 %v2587
      %v2684 = vunpack.c.l.b16 %v2588
      %v2685 = vunpack.c.l.b16 %v2589
      %v2686 = vunpack.c.l.b16 %v2590
      %v2687 = vunpack.c.l.b16 %v2591
      %v2688 = vunpack.c.l.b16 %v2592
      %v2689 = vunpack.c.l.b16 %v2593
      %v2690 = vunpack.c.l.b16 %v2594
      %v2691 = vunpack.c.l.b16 %v2595
      %v2692 = vunpack.c.l.b16 %v2596
      %v2693 = vunpack.c.l.b16 %v2597
      %v2694 = vunpack.c.l.b16 %v2598
      %v2695 = vunpack.c.l.b16 %v2599
      %v2696 = vunpack.c.l.b16 %v2600
      %v2697 = vunpack.c.l.b16 %v2601
      %v2698 = vunpack.c.l.b16 %v2602
      %v2699 = vunpack.c.l.b16 %v2603
      %v2700 = vunpack.c.l.b16 %v2604
      %v2701 = vunpack.c.l.b16 %v2605
      %v2702 = vpack.c.b16 %v2671, %v2670
      %v2703 = vpack.c.b16 %v2673, %v2672
      %v2704 = vpack.c.b16 %v2675, %v2674
      %v2705 = vpack.c.b16 %v2677, %v2676
      %v2706 = vpack.c.b16 %v2679, %v2678
      %v2707 = vpack.c.b16 %v2681, %v2680
      %v2708 = vpack.c.b16 %v2683, %v2682
      %v2709 = vpack.c.b16 %v2685, %v2684
      %v2710 = vpack.c.b16 %v2687, %v2686
      %v2711 = vpack.c.b16 %v2689, %v2688
      %v2712 = vpack.c.b16 %v2691, %v2690
      %v2713 = vpack.c.b16 %v2693, %v2692
      %v2714 = vpack.c.b16 %v2695, %v2694
      %v2715 = vpack.c.b16 %v2697, %v2696
      %v2716 = vpack.c.b16 %v2699, %v2698
      %v2717 = vpack.c.b16 %v2701, %v2700
      %2734 = vmatprep.subr.bf16.mxu0 0
      %2735 = vmatpush1.bf16.msra.mxu0 %v2702
      %2736 = vmatprep.subr.bf16.mxu0 0
      %2737 = vmatpush1.bf16.msra.mxu0 %v2703
      %2738 = vmatprep.subr.bf16.mxu0 0
      %2739 = vmatpush1.bf16.msra.mxu0 %v2704
      %2740 = vmatprep.subr.bf16.mxu0 0
      %2741 = vmatpush1.bf16.msra.mxu0 %v2705
      %2742 = vmatprep.subr.bf16.mxu0 0
      %2743 = vmatpush1.bf16.msra.mxu0 %v2706
      %2744 = vmatprep.subr.bf16.mxu0 0
      %2745 = vmatpush1.bf16.msra.mxu0 %v2707
      %2746 = vmatprep.subr.bf16.mxu0 0
      %2747 = vmatpush1.bf16.msra.mxu0 %v2708
      %2748 = vmatprep.subr.bf16.mxu0 0
      %2749 = vmatpush1.bf16.msra.mxu0 %v2709
      %2750 = vmatprep.subr.bf16.mxu0 0
      %2751 = vmatpush1.bf16.msra.mxu0 %v2710
      %2752 = vmatprep.subr.bf16.mxu0 0
      %2753 = vmatpush1.bf16.msra.mxu0 %v2711
      %2754 = vmatprep.subr.bf16.mxu0 0
      %2755 = vmatpush1.bf16.msra.mxu0 %v2712
      %2756 = vmatprep.subr.bf16.mxu0 0
      %2757 = vmatpush1.bf16.msra.mxu0 %v2713
      %2758 = vmatprep.subr.bf16.mxu0 0
      %2759 = vmatpush1.bf16.msra.mxu0 %v2714
      %2760 = vmatprep.subr.bf16.mxu0 0
      %2761 = vmatpush1.bf16.msra.mxu0 %v2715
      %2762 = vmatprep.subr.bf16.mxu0 0
      %2763 = vmatpush1.bf16.msra.mxu0 %v2716
      %2764 = vmatprep.subr.bf16.mxu0 0
      %2765 = vmatpush1.bf16.msra.mxu0 %v2717
      %2766 = vmatprep.mubr.bf16.mxu0 %v2623
      %2767 = vmatmul.mubr.bf16.gmra.mrb[0].mxu0 %v2622
      %v2768 = vpop.f32.mrb[0].mxu0
      %v2769 = vadd.f32 0.0, %v2768
      %v2770 = vpop.f32.mrb[0].mxu0
      %v2771 = vpop.f32.mrb[0].mxu0
      %v2772 = vadd.f32 0.0, %v2771
      %v2773 = vpop.f32.mrb[0].mxu0
      %2774 = vmatprep.mubr.bf16.mxu0 %v2625
      %2775 = vmatmul.mubr.bf16.gmra.mrb[0].mxu0 %v2624
      %v2776 = vpop.f32.mrb[0].mxu0
      %v2777 = vadd.f32 0.0, %v2776
      %v2778 = vpop.f32.mrb[0].mxu0
      %v2779 = vpop.f32.mrb[0].mxu0
      %v2780 = vadd.f32 0.0, %v2779
      %v2781 = vpop.f32.mrb[0].mxu0
      %2782 = vmatprep.mubr.bf16.mxu0 %v2627
      %2783 = vmatmul.mubr.bf16.gmra.mrb[0].mxu0 %v2626
      %v2784 = vpop.f32.mrb[0].mxu0
      %v2785 = vadd.f32 0.0, %v2784
      %v2786 = vpop.f32.mrb[0].mxu0
      %v2787 = vpop.f32.mrb[0].mxu0
      %v2788 = vadd.f32 0.0, %v2787
      %v2789 = vpop.f32.mrb[0].mxu0
      %2790 = vmatprep.mubr.bf16.mxu0 %v2629
      %2791 = vmatmul.mubr.bf16.gmra.mrb[0].mxu0 %v2628
      %v2792 = vpop.f32.mrb[0].mxu0
      %v2793 = vadd.f32 0.0, %v2792
      %v2794 = vpop.f32.mrb[0].mxu0
      %v2795 = vpop.f32.mrb[0].mxu0
      %v2796 = vadd.f32 0.0, %v2795
      %v2797 = vpop.f32.mrb[0].mxu0
      %2798 = vdwg.mxu0
      %v2799 = vadd.f32 %v2437, %v2769
      %v2800 = vadd.f32 %v2438, %v2772
      %v2801 = vadd.f32 %v2439, %v2777
      %v2802 = vadd.f32 %v2440, %v2780
      %v2803 = vadd.f32 %v2441, %v2785
      %v2804 = vadd.f32 %v2442, %v2788
      %v2805 = vadd.f32 %v2443, %v2793
      %v2806 = vadd.f32 %v2444, %v2796
      %v2807 = vld [vmem:[%s4] sm:$0x1]
      %v2809 = vlaneseq
      %v2810 = vshrl.u32 %v2809, 7
      %v2811 = vsub.s32 0, %v2810
      %v2812 = vrot.slane %v2807, %v2811
      %v2814 = vadd.f32 %v2799, %v2812
      %v2815 = vadd.f32 %v2800, %v2812
      %v2816 = vadd.f32 %v2801, %v2812
      %v2817 = vadd.f32 %v2802, %v2812
      %v2818 = vadd.f32 %v2803, %v2812
      %v2819 = vadd.f32 %v2804, %v2812
      %v2820 = vadd.f32 %v2805, %v2812
      %v2821 = vadd.f32 %v2806, %v2812
      %vm2822 = vcmp.ge.f32.partialorder %v2814, 0.0
      %vm2823 = vcmp.ge.f32.partialorder %v2815, 0.0
      %vm2824 = vcmp.ge.f32.partialorder %v2816, 0.0
      %vm2825 = vcmp.ge.f32.partialorder %v2817, 0.0
      %vm2826 = vcmp.ge.f32.partialorder %v2818, 0.0
      %vm2827 = vcmp.ge.f32.partialorder %v2819, 0.0
      %vm2828 = vcmp.ge.f32.partialorder %v2820, 0.0
      %vm2829 = vcmp.ge.f32.partialorder %v2821, 0.0
      %v2830 = vmul.f32 %v2814, 0.1
      %v2831 = vmul.f32 %v2815, 0.1
      %v2832 = vmul.f32 %v2816, 0.1
      %v2833 = vmul.f32 %v2817, 0.1
      %v2834 = vmul.f32 %v2818, 0.1
      %v2835 = vmul.f32 %v2819, 0.1
      %v2836 = vmul.f32 %v2820, 0.1
      %v2837 = vmul.f32 %v2821, 0.1
      %v2838 = vsel %vm2822, %v2814, %v2830
      %v2839 = vsel %vm2823, %v2815, %v2831
      %v2840 = vsel %vm2824, %v2816, %v2832
      %v2841 = vsel %vm2825, %v2817, %v2833
      %v2842 = vsel %vm2826, %v2818, %v2834
      %v2843 = vsel %vm2827, %v2819, %v2835
      %v2844 = vsel %vm2828, %v2820, %v2836
      %v2845 = vsel %vm2829, %v2821, %v2837
      %v2846 = vpack.c.bf16 %v2838, %v2838
      %v2847 = vpack.c.bf16 %v2839, %v2839
      %v2848 = vpack.c.bf16 %v2840, %v2840
      %v2849 = vpack.c.bf16 %v2841, %v2841
      %v2850 = vpack.c.bf16 %v2842, %v2842
      %v2851 = vpack.c.bf16 %v2843, %v2843
      %v2852 = vpack.c.bf16 %v2844, %v2844
      %v2853 = vpack.c.bf16 %v2845, %v2845
      %v2862 = vunpack.c.l.b16 %v2846
      %v2863 = vunpack.c.l.b16 %v2847
      %v2864 = vunpack.c.l.b16 %v2848
      %v2865 = vunpack.c.l.b16 %v2849
      %v2866 = vunpack.c.l.b16 %v2850
      %v2867 = vunpack.c.l.b16 %v2851
      %v2868 = vunpack.c.l.b16 %v2852
      %v2869 = vunpack.c.l.b16 %v2853
      %v2870 = vpack.c.b16 %v2862, %v2862
      %v2871 = vpack.c.b16 %v2863, %v2863
      %v2872 = vpack.c.b16 %v2864, %v2864
      %v2873 = vpack.c.b16 %v2865, %v2865
      %v2874 = vpack.c.b16 %v2866, %v2866
      %v2875 = vpack.c.b16 %v2867, %v2867
      %v2876 = vpack.c.b16 %v2868, %v2868
      %v2877 = vpack.c.b16 %v2869, %v2869
      %v2879 = vshrl.u32 %v2870, 16
      %v2881 = vrot.slane %v2879, 7
      %v2882 = vshll.u32 %v2870, 16
      %v2884 = vor.u32 %v2881, %v2882
      %v2885 = vrot.slane %v2881, 4
      %v2887 = vshrl.u32 %v2871, 16
      %v2889 = vrot.slane %v2887, 7
      %v2890 = vshll.u32 %v2871, 16
      %v2892 = vor.u32 %v2889, %v2890
      %v2893 = vrot.slane %v2889, 4
      %v2895 = vshrl.u32 %v2872, 16
      %v2897 = vrot.slane %v2895, 7
      %v2898 = vshll.u32 %v2872, 16
      %v2900 = vor.u32 %v2897, %v2898
      %v2901 = vrot.slane %v2897, 4
      %v2903 = vshrl.u32 %v2873, 16
      %v2905 = vrot.slane %v2903, 7
      %v2906 = vshll.u32 %v2873, 16
      %v2908 = vor.u32 %v2905, %v2906
      %v2909 = vrot.slane %v2905, 4
      %v2911 = vshrl.u32 %v2874, 16
      %v2913 = vrot.slane %v2911, 7
      %v2914 = vshll.u32 %v2874, 16
      %v2916 = vor.u32 %v2913, %v2914
      %v2917 = vrot.slane %v2913, 4
      %v2919 = vshrl.u32 %v2875, 16
      %v2921 = vrot.slane %v2919, 7
      %v2922 = vshll.u32 %v2875, 16
      %v2924 = vor.u32 %v2921, %v2922
      %v2925 = vrot.slane %v2921, 4
      %v2927 = vshrl.u32 %v2876, 16
      %v2929 = vrot.slane %v2927, 7
      %v2930 = vshll.u32 %v2876, 16
      %v2932 = vor.u32 %v2929, %v2930
      %v2933 = vrot.slane %v2929, 4
      %v2935 = vshrl.u32 %v2877, 16
      %v2937 = vrot.slane %v2935, 7
      %v2938 = vshll.u32 %v2877, 16
      %v2940 = vor.u32 %v2937, %v2938
      %v2941 = vrot.slane %v2937, 4
      %s2958 = scalar_lea.vmem [#allocation3], 8
      %vm2959 = vcmask 1043456
      %vm2960 = vmand %vm2959, %vm385
      %v2961 = vld [vmem:[%s2958] sm:$0xf]
      %v2962 = vsel %vm2960, %v2884, %v2961
      %2963 = vst [vmem:[%s2958] sm:$0xf] %v2962
      %v2964 = vld [vmem:[%s2958 + $0x4] sm:$0x1]
      %v2965 = vsel %vm283, %v2885, %v2964
      %2966 = vst [vmem:[%s2958 + $0x4] sm:$0x1] %v2965
      %v2967 = vld [vmem:[%s2958 + $0x8] sm:$0xf]
      %v2968 = vsel %vm2960, %v2892, %v2967
      %2969 = vst [vmem:[%s2958 + $0x8] sm:$0xf] %v2968
      %v2970 = vld [vmem:[%s2958 + $0xc] sm:$0x1]
      %v2971 = vsel %vm283, %v2893, %v2970
      %2972 = vst [vmem:[%s2958 + $0xc] sm:$0x1] %v2971
      %v2973 = vld [vmem:[%s2958 + $0x10] sm:$0xf]
      %v2974 = vsel %vm2960, %v2900, %v2973
      %2975 = vst [vmem:[%s2958 + $0x10] sm:$0xf] %v2974
      %v2976 = vld [vmem:[%s2958 + $0x14] sm:$0x1]
      %v2977 = vsel %vm283, %v2901, %v2976
      %2978 = vst [vmem:[%s2958 + $0x14] sm:$0x1] %v2977
      %v2979 = vld [vmem:[%s2958 + $0x18] sm:$0xf]
      %v2980 = vsel %vm2960, %v2908, %v2979
      %2981 = vst [vmem:[%s2958 + $0x18] sm:$0xf] %v2980
      %v2982 = vld [vmem:[%s2958 + $0x1c] sm:$0x1]
      %v2983 = vsel %vm283, %v2909, %v2982
      %2984 = vst [vmem:[%s2958 + $0x1c] sm:$0x1] %v2983
      %v2985 = vld [vmem:[%s2958 + $0x20] sm:$0xf]
      %v2986 = vsel %vm2960, %v2916, %v2985
      %2987 = vst [vmem:[%s2958 + $0x20] sm:$0xf] %v2986
      %v2988 = vld [vmem:[%s2958 + $0x24] sm:$0x1]
      %v2989 = vsel %vm283, %v2917, %v2988
      %2990 = vst [vmem:[%s2958 + $0x24] sm:$0x1] %v2989
      %v2991 = vld [vmem:[%s2958 + $0x28] sm:$0xf]
      %v2992 = vsel %vm2960, %v2924, %v2991
      %2993 = vst [vmem:[%s2958 + $0x28] sm:$0xf] %v2992
      %v2994 = vld [vmem:[%s2958 + $0x2c] sm:$0x1]
      %v2995 = vsel %vm283, %v2925, %v2994
      %2996 = vst [vmem:[%s2958 + $0x2c] sm:$0x1] %v2995
      %v2997 = vld [vmem:[%s2958 + $0x30] sm:$0xf]
      %v2998 = vsel %vm2960, %v2932, %v2997
      %2999 = vst [vmem:[%s2958 + $0x30] sm:$0xf] %v2998
      %v3000 = vld [vmem:[%s2958 + $0x34] sm:$0x1]
      %v3001 = vsel %vm283, %v2933, %v3000
      %3002 = vst [vmem:[%s2958 + $0x34] sm:$0x1] %v3001
      %v3003 = vld [vmem:[%s2958 + $0x38] sm:$0xf]
      %v3004 = vsel %vm2960, %v2940, %v3003
      %3005 = vst [vmem:[%s2958 + $0x38] sm:$0xf] %v3004
      %v3006 = vld [vmem:[%s2958 + $0x3c] sm:$0x1]
      %v3007 = vsel %vm283, %v2941, %v3006
      %3008 = vst [vmem:[%s2958 + $0x3c] sm:$0x1] %v3007
      %v3009 = vld [vmem:[#allocation3] sm:$0xf]
      %v3010 = vld [vmem:[#allocation3 + $0x8] sm:$0xf]
      %v3011 = vld [vmem:[#allocation3 + $0x10] sm:$0xf]
      %v3012 = vld [vmem:[#allocation3 + $0x18] sm:$0xf]
      %v3013 = vld [vmem:[#allocation3 + $0x20] sm:$0xf]
      %v3014 = vld [vmem:[#allocation3 + $0x28] sm:$0xf]
      %v3015 = vld [vmem:[#allocation3 + $0x30] sm:$0xf]
      %v3016 = vld [vmem:[#allocation3 + $0x38] sm:$0xf]
      %v3017 = vld [vmem:[%s5] sm:$0xf]
      %v3018 = vld [vmem:[%s5 + $0x4] sm:$0xf]
      %v3019 = vld [vmem:[%s5 + $0x8] sm:$0xf]
      %v3020 = vld [vmem:[%s5 + $0xc] sm:$0xf]
      %v3021 = vld [vmem:[%s5 + $0x10] sm:$0xf]
      %v3022 = vld [vmem:[%s5 + $0x14] sm:$0xf]
      %v3023 = vld [vmem:[%s5 + $0x18] sm:$0xf]
      %v3024 = vld [vmem:[%s5 + $0x1c] sm:$0xf]
      %v3025 = vld [vmem:[%s5 + $0x20] sm:$0xf]
      %v3026 = vld [vmem:[%s5 + $0x24] sm:$0xf]
      %v3027 = vld [vmem:[%s5 + $0x28] sm:$0xf]
      %v3028 = vld [vmem:[%s5 + $0x2c] sm:$0xf]
      %v3029 = vld [vmem:[%s5 + $0x30] sm:$0xf]
      %v3030 = vld [vmem:[%s5 + $0x34] sm:$0xf]
      %v3031 = vld [vmem:[%s5 + $0x38] sm:$0xf]
      %v3032 = vld [vmem:[%s5 + $0x3c] sm:$0xf]
      %v3033 = vld [vmem:[#allocation3 + $0x4] sm:$0x1]
      %v3034 = vld [vmem:[#allocation3 + $0xc] sm:$0x1]
      %v3035 = vld [vmem:[#allocation3 + $0x14] sm:$0x1]
      %v3036 = vld [vmem:[#allocation3 + $0x1c] sm:$0x1]
      %v3037 = vld [vmem:[#allocation3 + $0x24] sm:$0x1]
      %v3038 = vld [vmem:[#allocation3 + $0x2c] sm:$0x1]
      %v3039 = vld [vmem:[#allocation3 + $0x34] sm:$0x1]
      %v3040 = vld [vmem:[#allocation3 + $0x3c] sm:$0x1]
      %v3042 = vshrl.u32 %v3009, 16
      %v3044 = vrot.slane %v3042, 4
      %v3045 = vshll.u32 %v3009, 16
      %v3047 = vrot.slane %v3045, 5
      %v3048 = vor.u32 %v3044, %v3047
      %v3049 = vrot.slane %v3048, 4
      %v3051 = vshll.u32 %v3033, 16
      %v3053 = vrot.slane %v3051, 5
      %v3054 = vsel %vm437, %v3049, %v3053
      %v3056 = vshrl.u32 %v3010, 16
      %v3058 = vrot.slane %v3056, 4
      %v3059 = vshll.u32 %v3010, 16
      %v3061 = vrot.slane %v3059, 5
      %v3062 = vor.u32 %v3058, %v3061
      %v3063 = vrot.slane %v3062, 4
      %v3065 = vshll.u32 %v3034, 16
      %v3067 = vrot.slane %v3065, 5
      %v3068 = vsel %vm437, %v3063, %v3067
      %v3070 = vshrl.u32 %v3011, 16
      %v3072 = vrot.slane %v3070, 4
      %v3073 = vshll.u32 %v3011, 16
      %v3075 = vrot.slane %v3073, 5
      %v3076 = vor.u32 %v3072, %v3075
      %v3077 = vrot.slane %v3076, 4
      %v3079 = vshll.u32 %v3035, 16
      %v3081 = vrot.slane %v3079, 5
      %v3082 = vsel %vm437, %v3077, %v3081
      %v3084 = vshrl.u32 %v3012, 16
      %v3086 = vrot.slane %v3084, 4
      %v3087 = vshll.u32 %v3012, 16
      %v3089 = vrot.slane %v3087, 5
      %v3090 = vor.u32 %v3086, %v3089
      %v3091 = vrot.slane %v3090, 4
      %v3093 = vshll.u32 %v3036, 16
      %v3095 = vrot.slane %v3093, 5
      %v3096 = vsel %vm437, %v3091, %v3095
      %v3098 = vshrl.u32 %v3013, 16
      %v3100 = vrot.slane %v3098, 4
      %v3101 = vshll.u32 %v3013, 16
      %v3103 = vrot.slane %v3101, 5
      %v3104 = vor.u32 %v3100, %v3103
      %v3105 = vrot.slane %v3104, 4
      %v3107 = vshll.u32 %v3037, 16
      %v3109 = vrot.slane %v3107, 5
      %v3110 = vsel %vm437, %v3105, %v3109
      %v3112 = vshrl.u32 %v3014, 16
      %v3114 = vrot.slane %v3112, 4
      %v3115 = vshll.u32 %v3014, 16
      %v3117 = vrot.slane %v3115, 5
      %v3118 = vor.u32 %v3114, %v3117
      %v3119 = vrot.slane %v3118, 4
      %v3121 = vshll.u32 %v3038, 16
      %v3123 = vrot.slane %v3121, 5
      %v3124 = vsel %vm437, %v3119, %v3123
      %v3126 = vshrl.u32 %v3015, 16
      %v3128 = vrot.slane %v3126, 4
      %v3129 = vshll.u32 %v3015, 16
      %v3131 = vrot.slane %v3129, 5
      %v3132 = vor.u32 %v3128, %v3131
      %v3133 = vrot.slane %v3132, 4
      %v3135 = vshll.u32 %v3039, 16
      %v3137 = vrot.slane %v3135, 5
      %v3138 = vsel %vm437, %v3133, %v3137
      %v3140 = vshrl.u32 %v3016, 16
      %v3142 = vrot.slane %v3140, 4
      %v3143 = vshll.u32 %v3016, 16
      %v3145 = vrot.slane %v3143, 5
      %v3146 = vor.u32 %v3142, %v3145
      %v3147 = vrot.slane %v3146, 4
      %v3149 = vshll.u32 %v3040, 16
      %v3151 = vrot.slane %v3149, 5
      %v3152 = vsel %vm437, %v3147, %v3151
      %s3153 = scalar_lea.vmem %s5, 64
      %v3154 = vld [vmem:[%s3153] sm:$0xf]
      %v3155 = vld [vmem:[%s3153 + $0x4] sm:$0xf]
      %v3156 = vld [vmem:[%s3153 + $0x8] sm:$0xf]
      %v3157 = vld [vmem:[%s3153 + $0xc] sm:$0xf]
      %v3158 = vld [vmem:[%s3153 + $0x10] sm:$0xf]
      %v3159 = vld [vmem:[%s3153 + $0x14] sm:$0xf]
      %v3160 = vld [vmem:[%s3153 + $0x18] sm:$0xf]
      %v3161 = vld [vmem:[%s3153 + $0x1c] sm:$0xf]
      %v3162 = vld [vmem:[%s3153 + $0x20] sm:$0xf]
      %v3163 = vld [vmem:[%s3153 + $0x24] sm:$0xf]
      %v3164 = vld [vmem:[%s3153 + $0x28] sm:$0xf]
      %v3165 = vld [vmem:[%s3153 + $0x2c] sm:$0xf]
      %v3166 = vld [vmem:[%s3153 + $0x30] sm:$0xf]
      %v3167 = vld [vmem:[%s3153 + $0x34] sm:$0xf]
      %v3168 = vld [vmem:[%s3153 + $0x38] sm:$0xf]
      %v3169 = vld [vmem:[%s3153 + $0x3c] sm:$0xf]
      %v3170 = vunpack.c.l.b16 %v3054
      %v3171 = vunpack.c.l.b16 %v3068
      %v3172 = vunpack.c.l.b16 %v3082
      %v3173 = vunpack.c.l.b16 %v3096
      %v3174 = vunpack.c.l.b16 %v3110
      %v3175 = vunpack.c.l.b16 %v3124
      %v3176 = vunpack.c.l.b16 %v3138
      %v3177 = vunpack.c.l.b16 %v3152
      %v3178 = vpack.c.b16 %v3171, %v3170
      %v3179 = vpack.c.b16 %v3173, %v3172
      %v3180 = vpack.c.b16 %v3175, %v3174
      %v3181 = vpack.c.b16 %v3177, %v3176
      %v3202 = vunpack.c.l.b16 %v3154
      %v3203 = vunpack.c.l.b16 %v3155
      %v3204 = vunpack.c.l.b16 %v3156
      %v3205 = vunpack.c.l.b16 %v3157
      %v3206 = vunpack.c.l.b16 %v3158
      %v3207 = vunpack.c.l.b16 %v3159
      %v3208 = vunpack.c.l.b16 %v3160
      %v3209 = vunpack.c.l.b16 %v3161
      %v3210 = vunpack.c.l.b16 %v3162
      %v3211 = vunpack.c.l.b16 %v3163
      %v3212 = vunpack.c.l.b16 %v3164
      %v3213 = vunpack.c.l.b16 %v3165
      %v3214 = vunpack.c.l.b16 %v3166
      %v3215 = vunpack.c.l.b16 %v3167
      %v3216 = vunpack.c.l.b16 %v3168
      %v3217 = vunpack.c.l.b16 %v3169
      %v3218 = vpack.c.b16 %v3203, %v3202
      %v3219 = vpack.c.b16 %v3205, %v3204
      %v3220 = vpack.c.b16 %v3207, %v3206
      %v3221 = vpack.c.b16 %v3209, %v3208
      %v3222 = vpack.c.b16 %v3211, %v3210
      %v3223 = vpack.c.b16 %v3213, %v3212
      %v3224 = vpack.c.b16 %v3215, %v3214
      %v3225 = vpack.c.b16 %v3217, %v3216
      %3234 = vmatprep.subr.bf16.mxu0 0
      %3235 = vmatpush1.bf16.msra.mxu0 %v3218
      %3236 = vmatprep.subr.bf16.mxu0 0
      %3237 = vmatpush1.bf16.msra.mxu0 %v3219
      %3238 = vmatprep.subr.bf16.mxu0 0
      %3239 = vmatpush1.bf16.msra.mxu0 %v3220
      %3240 = vmatprep.subr.bf16.mxu0 0
      %3241 = vmatpush1.bf16.msra.mxu0 %v3221
      %3242 = vmatprep.subr.bf16.mxu0 0
      %3243 = vmatpush1.bf16.msra.mxu0 %v3222
      %3244 = vmatprep.subr.bf16.mxu0 0
      %3245 = vmatpush1.bf16.msra.mxu0 %v3223
      %3246 = vmatprep.subr.bf16.mxu0 0
      %3247 = vmatpush1.bf16.msra.mxu0 %v3224
      %3248 = vmatprep.subr.bf16.mxu0 0
      %3249 = vmatpush1.bf16.msra.mxu0 %v3225
      %3250 = vmatprep.subr.bf16.mxu0 0
      %3251 = vmatpush1.bf16.msra.mxu0 0
      %3252 = vmatprep.subr.bf16.mxu0 0
      %3253 = vmatpush1.bf16.msra.mxu0 0
      %3254 = vmatprep.subr.bf16.mxu0 0
      %3255 = vmatpush1.bf16.msra.mxu0 0
      %3256 = vmatprep.subr.bf16.mxu0 0
      %3257 = vmatpush1.bf16.msra.mxu0 0
      %3258 = vmatprep.subr.bf16.mxu0 0
      %3259 = vmatpush1.bf16.msra.mxu0 0
      %3260 = vmatprep.subr.bf16.mxu0 0
      %3261 = vmatpush1.bf16.msra.mxu0 0
      %3262 = vmatprep.subr.bf16.mxu0 0
      %3263 = vmatpush1.bf16.msra.mxu0 0
      %3264 = vmatprep.subr.bf16.mxu0 0
      %3265 = vmatpush1.bf16.msra.mxu0 0
      %3266 = vmatprep.mubr.bf16.mxu0 0
      %3267 = vmatmul.mubr.bf16.gmra.mrb[0].mxu0 %v3178
      %v3268 = vpop.f32.mrb[0].mxu0
      %v3269 = vadd.f32 0.0, %v3268
      %v3270 = vpop.f32.mrb[0].mxu0
      %v3271 = vpop.f32.mrb[0].mxu0
      %v3272 = vadd.f32 0.0, %v3271
      %v3273 = vpop.f32.mrb[0].mxu0
      %3274 = vmatprep.mubr.bf16.mxu0 0
      %3275 = vmatmul.mubr.bf16.gmra.mrb[0].mxu0 %v3179
      %v3276 = vpop.f32.mrb[0].mxu0
      %v3277 = vadd.f32 0.0, %v3276
      %v3278 = vpop.f32.mrb[0].mxu0
      %v3279 = vpop.f32.mrb[0].mxu0
      %v3280 = vadd.f32 0.0, %v3279
      %v3281 = vpop.f32.mrb[0].mxu0
      %3282 = vmatprep.mubr.bf16.mxu0 0
      %3283 = vmatmul.mubr.bf16.gmra.mrb[0].mxu0 %v3180
      %v3284 = vpop.f32.mrb[0].mxu0
      %v3285 = vadd.f32 0.0, %v3284
      %v3286 = vpop.f32.mrb[0].mxu0
      %v3287 = vpop.f32.mrb[0].mxu0
      %v3288 = vadd.f32 0.0, %v3287
      %v3289 = vpop.f32.mrb[0].mxu0
      %3290 = vmatprep.mubr.bf16.mxu0 0
      %3291 = vmatmul.mubr.bf16.gmra.mrb[0].mxu0 %v3181
      %v3292 = vpop.f32.mrb[0].mxu0
      %v3293 = vadd.f32 0.0, %v3292
      %v3294 = vpop.f32.mrb[0].mxu0
      %v3295 = vpop.f32.mrb[0].mxu0
      %v3296 = vadd.f32 0.0, %v3295
      %v3297 = vpop.f32.mrb[0].mxu0
      %3298 = vdwg.mxu0
      %v3307 = vunpack.c.l.b16 %v3009
      %v3308 = vunpack.c.l.b16 %v3010
      %v3309 = vunpack.c.l.b16 %v3011
      %v3310 = vunpack.c.l.b16 %v3012
      %v3311 = vunpack.c.l.b16 %v3013
      %v3312 = vunpack.c.l.b16 %v3014
      %v3313 = vunpack.c.l.b16 %v3015
      %v3314 = vunpack.c.l.b16 %v3016
      %v3315 = vpack.c.b16 %v3308, %v3307
      %v3316 = vpack.c.b16 %v3310, %v3309
      %v3317 = vpack.c.b16 %v3312, %v3311
      %v3318 = vpack.c.b16 %v3314, %v3313
      %v3339 = vunpack.c.l.b16 %v3017
      %v3340 = vunpack.c.l.b16 %v3018
      %v3341 = vunpack.c.l.b16 %v3019
      %v3342 = vunpack.c.l.b16 %v3020
      %v3343 = vunpack.c.l.b16 %v3021
      %v3344 = vunpack.c.l.b16 %v3022
      %v3345 = vunpack.c.l.b16 %v3023
      %v3346 = vunpack.c.l.b16 %v3024
      %v3347 = vunpack.c.l.b16 %v3025
      %v3348 = vunpack.c.l.b16 %v3026
      %v3349 = vunpack.c.l.b16 %v3027
      %v3350 = vunpack.c.l.b16 %v3028
      %v3351 = vunpack.c.l.b16 %v3029
      %v3352 = vunpack.c.l.b16 %v3030
      %v3353 = vunpack.c.l.b16 %v3031
      %v3354 = vunpack.c.l.b16 %v3032
      %v3355 = vpack.c.b16 %v3340, %v3339
      %v3356 = vpack.c.b16 %v3342, %v3341
      %v3357 = vpack.c.b16 %v3344, %v3343
      %v3358 = vpack.c.b16 %v3346, %v3345
      %v3359 = vpack.c.b16 %v3348, %v3347
      %v3360 = vpack.c.b16 %v3350, %v3349
      %v3361 = vpack.c.b16 %v3352, %v3351
      %v3362 = vpack.c.b16 %v3354, %v3353
      %3371 = vmatprep.subr.bf16.mxu0 0
      %3372 = vmatpush1.bf16.msra.mxu0 %v3355
      %3373 = vmatprep.subr.bf16.mxu0 0
      %3374 = vmatpush1.bf16.msra.mxu0 %v3356
      %3375 = vmatprep.subr.bf16.mxu0 0
      %3376 = vmatpush1.bf16.msra.mxu0 %v3357
      %3377 = vmatprep.subr.bf16.mxu0 0
      %3378 = vmatpush1.bf16.msra.mxu0 %v3358
      %3379 = vmatprep.subr.bf16.mxu0 0
      %3380 = vmatpush1.bf16.msra.mxu0 %v3359
      %3381 = vmatprep.subr.bf16.mxu0 0
      %3382 = vmatpush1.bf16.msra.mxu0 %v3360
      %3383 = vmatprep.subr.bf16.mxu0 0
      %3384 = vmatpush1.bf16.msra.mxu0 %v3361
      %3385 = vmatprep.subr.bf16.mxu0 0
      %3386 = vmatpush1.bf16.msra.mxu0 %v3362
      %3387 = vmatprep.subr.bf16.mxu0 0
      %3388 = vmatpush1.bf16.msra.mxu0 0
      %3389 = vmatprep.subr.bf16.mxu0 0
      %3390 = vmatpush1.bf16.msra.mxu0 0
      %3391 = vmatprep.subr.bf16.mxu0 0
      %3392 = vmatpush1.bf16.msra.mxu0 0
      %3393 = vmatprep.subr.bf16.mxu0 0
      %3394 = vmatpush1.bf16.msra.mxu0 0
      %3395 = vmatprep.subr.bf16.mxu0 0
      %3396 = vmatpush1.bf16.msra.mxu0 0
      %3397 = vmatprep.subr.bf16.mxu0 0
      %3398 = vmatpush1.bf16.msra.mxu0 0
      %3399 = vmatprep.subr.bf16.mxu0 0
      %3400 = vmatpush1.bf16.msra.mxu0 0
      %3401 = vmatprep.subr.bf16.mxu0 0
      %3402 = vmatpush1.bf16.msra.mxu0 0
      %3403 = vmatprep.mubr.bf16.mxu0 0
      %3404 = vmatmul.mubr.bf16.gmra.mrb[0].mxu0 %v3315
      %v3405 = vpop.f32.mrb[0].mxu0
      %v3406 = vadd.f32 %v3269, %v3405
      %v3407 = vpop.f32.mrb[0].mxu0
      %v3408 = vpop.f32.mrb[0].mxu0
      %v3409 = vadd.f32 %v3272, %v3408
      %v3410 = vpop.f32.mrb[0].mxu0
      %3411 = vmatprep.mubr.bf16.mxu0 0
      %3412 = vmatmul.mubr.bf16.gmra.mrb[0].mxu0 %v3316
      %v3413 = vpop.f32.mrb[0].mxu0
      %v3414 = vadd.f32 %v3277, %v3413
      %v3415 = vpop.f32.mrb[0].mxu0
      %v3416 = vpop.f32.mrb[0].mxu0
      %v3417 = vadd.f32 %v3280, %v3416
      %v3418 = vpop.f32.mrb[0].mxu0
      %3419 = vmatprep.mubr.bf16.mxu0 0
      %3420 = vmatmul.mubr.bf16.gmra.mrb[0].mxu0 %v3317
      %v3421 = vpop.f32.mrb[0].mxu0
      %v3422 = vadd.f32 %v3285, %v3421
      %v3423 = vpop.f32.mrb[0].mxu0
      %v3424 = vpop.f32.mrb[0].mxu0
      %v3425 = vadd.f32 %v3288, %v3424
      %v3426 = vpop.f32.mrb[0].mxu0
      %3427 = vmatprep.mubr.bf16.mxu0 0
      %3428 = vmatmul.mubr.bf16.gmra.mrb[0].mxu0 %v3318
      %v3429 = vpop.f32.mrb[0].mxu0
      %v3430 = vadd.f32 %v3293, %v3429
      %v3431 = vpop.f32.mrb[0].mxu0
      %v3432 = vpop.f32.mrb[0].mxu0
      %v3433 = vadd.f32 %v3296, %v3432
      %v3434 = vpop.f32.mrb[0].mxu0
      %3435 = vdwg.mxu0
      %v3436 = vld [vmem:[#allocation3] sm:$0xe]
      %v3437 = vld [vmem:[#allocation3 + $0x8] sm:$0xe]
      %v3438 = vld [vmem:[#allocation3 + $0x10] sm:$0xe]
      %v3439 = vld [vmem:[#allocation3 + $0x18] sm:$0xe]
      %v3440 = vld [vmem:[#allocation3 + $0x20] sm:$0xe]
      %v3441 = vld [vmem:[#allocation3 + $0x28] sm:$0xe]
      %v3442 = vld [vmem:[#allocation3 + $0x30] sm:$0xe]
      %v3443 = vld [vmem:[#allocation3 + $0x38] sm:$0xe]
      %vm3460 = vcmask 1042432
      %vm3461 = vcmask 1046532
      %vm3462 = vmor %vm3460, %vm3461
      %v3463 = vrot.slane %v3436, 5
      %v3464 = vrot.slane %v3463, 4
      %v3465 = vrot.slane %v3033, 5
      %v3466 = vsel %vm3462, %v3464, %v3465
      %v3467 = vrot.slane %v3437, 5
      %v3468 = vrot.slane %v3467, 4
      %v3469 = vrot.slane %v3034, 5
      %v3470 = vsel %vm3462, %v3468, %v3469
      %v3471 = vrot.slane %v3438, 5
      %v3472 = vrot.slane %v3471, 4
      %v3473 = vrot.slane %v3035, 5
      %v3474 = vsel %vm3462, %v3472, %v3473
      %v3475 = vrot.slane %v3439, 5
      %v3476 = vrot.slane %v3475, 4
      %v3477 = vrot.slane %v3036, 5
      %v3478 = vsel %vm3462, %v3476, %v3477
      %v3479 = vrot.slane %v3440, 5
      %v3480 = vrot.slane %v3479, 4
      %v3481 = vrot.slane %v3037, 5
      %v3482 = vsel %vm3462, %v3480, %v3481
      %v3483 = vrot.slane %v3441, 5
      %v3484 = vrot.slane %v3483, 4
      %v3485 = vrot.slane %v3038, 5
      %v3486 = vsel %vm3462, %v3484, %v3485
      %v3487 = vrot.slane %v3442, 5
      %v3488 = vrot.slane %v3487, 4
      %v3489 = vrot.slane %v3039, 5
      %v3490 = vsel %vm3462, %v3488, %v3489
      %v3491 = vrot.slane %v3443, 5
      %v3492 = vrot.slane %v3491, 4
      %v3493 = vrot.slane %v3040, 5
      %v3494 = vsel %vm3462, %v3492, %v3493
      %s3495 = scalar_lea.vmem %s5, 128
      %v3496 = vld [vmem:[%s3495] sm:$0xf]
      %v3497 = vld [vmem:[%s3495 + $0x4] sm:$0xf]
      %v3498 = vld [vmem:[%s3495 + $0x8] sm:$0xf]
      %v3499 = vld [vmem:[%s3495 + $0xc] sm:$0xf]
      %v3500 = vld [vmem:[%s3495 + $0x10] sm:$0xf]
      %v3501 = vld [vmem:[%s3495 + $0x14] sm:$0xf]
      %v3502 = vld [vmem:[%s3495 + $0x18] sm:$0xf]
      %v3503 = vld [vmem:[%s3495 + $0x1c] sm:$0xf]
      %v3504 = vld [vmem:[%s3495 + $0x20] sm:$0xf]
      %v3505 = vld [vmem:[%s3495 + $0x24] sm:$0xf]
      %v3506 = vld [vmem:[%s3495 + $0x28] sm:$0xf]
      %v3507 = vld [vmem:[%s3495 + $0x2c] sm:$0xf]
      %v3508 = vld [vmem:[%s3495 + $0x30] sm:$0xf]
      %v3509 = vld [vmem:[%s3495 + $0x34] sm:$0xf]
      %v3510 = vld [vmem:[%s3495 + $0x38] sm:$0xf]
      %v3511 = vld [vmem:[%s3495 + $0x3c] sm:$0xf]
      %v3512 = vunpack.c.l.b16 %v3466
      %v3513 = vunpack.c.l.b16 %v3470
      %v3514 = vunpack.c.l.b16 %v3474
      %v3515 = vunpack.c.l.b16 %v3478
      %v3516 = vunpack.c.l.b16 %v3482
      %v3517 = vunpack.c.l.b16 %v3486
      %v3518 = vunpack.c.l.b16 %v3490
      %v3519 = vunpack.c.l.b16 %v3494
      %v3520 = vpack.c.b16 %v3513, %v3512
      %v3521 = vpack.c.b16 %v3515, %v3514
      %v3522 = vpack.c.b16 %v3517, %v3516
      %v3523 = vpack.c.b16 %v3519, %v3518
      %v3544 = vunpack.c.l.b16 %v3496
      %v3545 = vunpack.c.l.b16 %v3497
      %v3546 = vunpack.c.l.b16 %v3498
      %v3547 = vunpack.c.l.b16 %v3499
      %v3548 = vunpack.c.l.b16 %v3500
      %v3549 = vunpack.c.l.b16 %v3501
      %v3550 = vunpack.c.l.b16 %v3502
      %v3551 = vunpack.c.l.b16 %v3503
      %v3552 = vunpack.c.l.b16 %v3504
      %v3553 = vunpack.c.l.b16 %v3505
      %v3554 = vunpack.c.l.b16 %v3506
      %v3555 = vunpack.c.l.b16 %v3507
      %v3556 = vunpack.c.l.b16 %v3508
      %v3557 = vunpack.c.l.b16 %v3509
      %v3558 = vunpack.c.l.b16 %v3510
      %v3559 = vunpack.c.l.b16 %v3511
      %v3560 = vpack.c.b16 %v3545, %v3544
      %v3561 = vpack.c.b16 %v3547, %v3546
      %v3562 = vpack.c.b16 %v3549, %v3548
      %v3563 = vpack.c.b16 %v3551, %v3550
      %v3564 = vpack.c.b16 %v3553, %v3552
      %v3565 = vpack.c.b16 %v3555, %v3554
      %v3566 = vpack.c.b16 %v3557, %v3556
      %v3567 = vpack.c.b16 %v3559, %v3558
      %3576 = vmatprep.subr.bf16.mxu0 0
      %3577 = vmatpush1.bf16.msra.mxu0 %v3560
      %3578 = vmatprep.subr.bf16.mxu0 0
      %3579 = vmatpush1.bf16.msra.mxu0 %v3561
      %3580 = vmatprep.subr.bf16.mxu0 0
      %3581 = vmatpush1.bf16.msra.mxu0 %v3562
      %3582 = vmatprep.subr.bf16.mxu0 0
      %3583 = vmatpush1.bf16.msra.mxu0 %v3563
      %3584 = vmatprep.subr.bf16.mxu0 0
      %3585 = vmatpush1.bf16.msra.mxu0 %v3564
      %3586 = vmatprep.subr.bf16.mxu0 0
      %3587 = vmatpush1.bf16.msra.mxu0 %v3565
      %3588 = vmatprep.subr.bf16.mxu0 0
      %3589 = vmatpush1.bf16.msra.mxu0 %v3566
      %3590 = vmatprep.subr.bf16.mxu0 0
      %3591 = vmatpush1.bf16.msra.mxu0 %v3567
      %3592 = vmatprep.subr.bf16.mxu0 0
      %3593 = vmatpush1.bf16.msra.mxu0 0
      %3594 = vmatprep.subr.bf16.mxu0 0
      %3595 = vmatpush1.bf16.msra.mxu0 0
      %3596 = vmatprep.subr.bf16.mxu0 0
      %3597 = vmatpush1.bf16.msra.mxu0 0
      %3598 = vmatprep.subr.bf16.mxu0 0
      %3599 = vmatpush1.bf16.msra.mxu0 0
      %3600 = vmatprep.subr.bf16.mxu0 0
      %3601 = vmatpush1.bf16.msra.mxu0 0
      %3602 = vmatprep.subr.bf16.mxu0 0
      %3603 = vmatpush1.bf16.msra.mxu0 0
      %3604 = vmatprep.subr.bf16.mxu0 0
      %3605 = vmatpush1.bf16.msra.mxu0 0
      %3606 = vmatprep.subr.bf16.mxu0 0
      %3607 = vmatpush1.bf16.msra.mxu0 0
      %3608 = vmatprep.mubr.bf16.mxu0 0
      %3609 = vmatmul.mubr.bf16.gmra.mrb[0].mxu0 %v3520
      %v3610 = vpop.f32.mrb[0].mxu0
      %v3611 = vadd.f32 0.0, %v3610
      %v3612 = vpop.f32.mrb[0].mxu0
      %v3613 = vpop.f32.mrb[0].mxu0
      %v3614 = vadd.f32 0.0, %v3613
      %v3615 = vpop.f32.mrb[0].mxu0
      %3616 = vmatprep.mubr.bf16.mxu0 0
      %3617 = vmatmul.mubr.bf16.gmra.mrb[0].mxu0 %v3521
      %v3618 = vpop.f32.mrb[0].mxu0
      %v3619 = vadd.f32 0.0, %v3618
      %v3620 = vpop.f32.mrb[0].mxu0
      %v3621 = vpop.f32.mrb[0].mxu0
      %v3622 = vadd.f32 0.0, %v3621
      %v3623 = vpop.f32.mrb[0].mxu0
      %3624 = vmatprep.mubr.bf16.mxu0 0
      %3625 = vmatmul.mubr.bf16.gmra.mrb[0].mxu0 %v3522
      %v3626 = vpop.f32.mrb[0].mxu0
      %v3627 = vadd.f32 0.0, %v3626
      %v3628 = vpop.f32.mrb[0].mxu0
      %v3629 = vpop.f32.mrb[0].mxu0
      %v3630 = vadd.f32 0.0, %v3629
      %v3631 = vpop.f32.mrb[0].mxu0
      %3632 = vmatprep.mubr.bf16.mxu0 0
      %3633 = vmatmul.mubr.bf16.gmra.mrb[0].mxu0 %v3523
      %v3634 = vpop.f32.mrb[0].mxu0
      %v3635 = vadd.f32 0.0, %v3634
      %v3636 = vpop.f32.mrb[0].mxu0
      %v3637 = vpop.f32.mrb[0].mxu0
      %v3638 = vadd.f32 0.0, %v3637
      %v3639 = vpop.f32.mrb[0].mxu0
      %3640 = vdwg.mxu0
      %v3641 = vadd.f32 %v3406, %v3611
      %v3642 = vadd.f32 %v3409, %v3614
      %v3643 = vadd.f32 %v3414, %v3619
      %v3644 = vadd.f32 %v3417, %v3622
      %v3645 = vadd.f32 %v3422, %v3627
      %v3646 = vadd.f32 %v3425, %v3630
      %v3647 = vadd.f32 %v3430, %v3635
      %v3648 = vadd.f32 %v3433, %v3638
      %v3649 = vld [vmem:[%s2958] sm:$0xf]
      %v3650 = vld [vmem:[%s2958 + $0x8] sm:$0xf]
      %v3651 = vld [vmem:[%s2958 + $0x10] sm:$0xf]
      %v3652 = vld [vmem:[%s2958 + $0x18] sm:$0xf]
      %v3653 = vld [vmem:[%s2958 + $0x20] sm:$0xf]
      %v3654 = vld [vmem:[%s2958 + $0x28] sm:$0xf]
      %v3655 = vld [vmem:[%s2958 + $0x30] sm:$0xf]
      %v3656 = vld [vmem:[%s2958 + $0x38] sm:$0xf]
      %s3657 = scalar_lea.vmem %s5, 192
      %v3658 = vld [vmem:[%s3657] sm:$0xf]
      %v3659 = vld [vmem:[%s3657 + $0x4] sm:$0xf]
      %v3660 = vld [vmem:[%s3657 + $0x8] sm:$0xf]
      %v3661 = vld [vmem:[%s3657 + $0xc] sm:$0xf]
      %v3662 = vld [vmem:[%s3657 + $0x10] sm:$0xf]
      %v3663 = vld [vmem:[%s3657 + $0x14] sm:$0xf]
      %v3664 = vld [vmem:[%s3657 + $0x18] sm:$0xf]
      %v3665 = vld [vmem:[%s3657 + $0x1c] sm:$0xf]
      %v3666 = vld [vmem:[%s3657 + $0x20] sm:$0xf]
      %v3667 = vld [vmem:[%s3657 + $0x24] sm:$0xf]
      %v3668 = vld [vmem:[%s3657 + $0x28] sm:$0xf]
      %v3669 = vld [vmem:[%s3657 + $0x2c] sm:$0xf]
      %v3670 = vld [vmem:[%s3657 + $0x30] sm:$0xf]
      %v3671 = vld [vmem:[%s3657 + $0x34] sm:$0xf]
      %v3672 = vld [vmem:[%s3657 + $0x38] sm:$0xf]
      %v3673 = vld [vmem:[%s3657 + $0x3c] sm:$0xf]
      %v3682 = vunpack.c.l.b16 %v3649
      %v3683 = vunpack.c.l.b16 %v3650
      %v3684 = vunpack.c.l.b16 %v3651
      %v3685 = vunpack.c.l.b16 %v3652
      %v3686 = vunpack.c.l.b16 %v3653
      %v3687 = vunpack.c.l.b16 %v3654
      %v3688 = vunpack.c.l.b16 %v3655
      %v3689 = vunpack.c.l.b16 %v3656
      %v3690 = vpack.c.b16 %v3683, %v3682
      %v3691 = vpack.c.b16 %v3685, %v3684
      %v3692 = vpack.c.b16 %v3687, %v3686
      %v3693 = vpack.c.b16 %v3689, %v3688
      %v3714 = vunpack.c.l.b16 %v3658
      %v3715 = vunpack.c.l.b16 %v3659
      %v3716 = vunpack.c.l.b16 %v3660
      %v3717 = vunpack.c.l.b16 %v3661
      %v3718 = vunpack.c.l.b16 %v3662
      %v3719 = vunpack.c.l.b16 %v3663
      %v3720 = vunpack.c.l.b16 %v3664
      %v3721 = vunpack.c.l.b16 %v3665
      %v3722 = vunpack.c.l.b16 %v3666
      %v3723 = vunpack.c.l.b16 %v3667
      %v3724 = vunpack.c.l.b16 %v3668
      %v3725 = vunpack.c.l.b16 %v3669
      %v3726 = vunpack.c.l.b16 %v3670
      %v3727 = vunpack.c.l.b16 %v3671
      %v3728 = vunpack.c.l.b16 %v3672
      %v3729 = vunpack.c.l.b16 %v3673
      %v3730 = vpack.c.b16 %v3715, %v3714
      %v3731 = vpack.c.b16 %v3717, %v3716
      %v3732 = vpack.c.b16 %v3719, %v3718
      %v3733 = vpack.c.b16 %v3721, %v3720
      %v3734 = vpack.c.b16 %v3723, %v3722
      %v3735 = vpack.c.b16 %v3725, %v3724
      %v3736 = vpack.c.b16 %v3727, %v3726
      %v3737 = vpack.c.b16 %v3729, %v3728
      %3746 = vmatprep.subr.bf16.mxu0 0
      %3747 = vmatpush1.bf16.msra.mxu0 %v3730
      %3748 = vmatprep.subr.bf16.mxu0 0
      %3749 = vmatpush1.bf16.msra.mxu0 %v3731
      %3750 = vmatprep.subr.bf16.mxu0 0
      %3751 = vmatpush1.bf16.msra.mxu0 %v3732
      %3752 = vmatprep.subr.bf16.mxu0 0
      %3753 = vmatpush1.bf16.msra.mxu0 %v3733
      %3754 = vmatprep.subr.bf16.mxu0 0
      %3755 = vmatpush1.bf16.msra.mxu0 %v3734
      %3756 = vmatprep.subr.bf16.mxu0 0
      %3757 = vmatpush1.bf16.msra.mxu0 %v3735
      %3758 = vmatprep.subr.bf16.mxu0 0
      %3759 = vmatpush1.bf16.msra.mxu0 %v3736
      %3760 = vmatprep.subr.bf16.mxu0 0
      %3761 = vmatpush1.bf16.msra.mxu0 %v3737
      %3762 = vmatprep.subr.bf16.mxu0 0
      %3763 = vmatpush1.bf16.msra.mxu0 0
      %3764 = vmatprep.subr.bf16.mxu0 0
      %3765 = vmatpush1.bf16.msra.mxu0 0
      %3766 = vmatprep.subr.bf16.mxu0 0
      %3767 = vmatpush1.bf16.msra.mxu0 0
      %3768 = vmatprep.subr.bf16.mxu0 0
      %3769 = vmatpush1.bf16.msra.mxu0 0
      %3770 = vmatprep.subr.bf16.mxu0 0
      %3771 = vmatpush1.bf16.msra.mxu0 0
      %3772 = vmatprep.subr.bf16.mxu0 0
      %3773 = vmatpush1.bf16.msra.mxu0 0
      %3774 = vmatprep.subr.bf16.mxu0 0
      %3775 = vmatpush1.bf16.msra.mxu0 0
      %3776 = vmatprep.subr.bf16.mxu0 0
      %3777 = vmatpush1.bf16.msra.mxu0 0
      %3778 = vmatprep.mubr.bf16.mxu0 0
      %3779 = vmatmul.mubr.bf16.gmra.mrb[0].mxu0 %v3690
      %v3780 = vpop.f32.mrb[0].mxu0
      %v3781 = vadd.f32 0.0, %v3780
      %v3782 = vpop.f32.mrb[0].mxu0
      %v3783 = vpop.f32.mrb[0].mxu0
      %v3784 = vadd.f32 0.0, %v3783
      %v3785 = vpop.f32.mrb[0].mxu0
      %3786 = vmatprep.mubr.bf16.mxu0 0
      %3787 = vmatmul.mubr.bf16.gmra.mrb[0].mxu0 %v3691
      %v3788 = vpop.f32.mrb[0].mxu0
      %v3789 = vadd.f32 0.0, %v3788
      %v3790 = vpop.f32.mrb[0].mxu0
      %v3791 = vpop.f32.mrb[0].mxu0
      %v3792 = vadd.f32 0.0, %v3791
      %v3793 = vpop.f32.mrb[0].mxu0
      %3794 = vmatprep.mubr.bf16.mxu0 0
      %3795 = vmatmul.mubr.bf16.gmra.mrb[0].mxu0 %v3692
      %v3796 = vpop.f32.mrb[0].mxu0
      %v3797 = vadd.f32 0.0, %v3796
      %v3798 = vpop.f32.mrb[0].mxu0
      %v3799 = vpop.f32.mrb[0].mxu0
      %v3800 = vadd.f32 0.0, %v3799
      %v3801 = vpop.f32.mrb[0].mxu0
      %3802 = vmatprep.mubr.bf16.mxu0 0
      %3803 = vmatmul.mubr.bf16.gmra.mrb[0].mxu0 %v3693
      %v3804 = vpop.f32.mrb[0].mxu0
      %v3805 = vadd.f32 0.0, %v3804
      %v3806 = vpop.f32.mrb[0].mxu0
      %v3807 = vpop.f32.mrb[0].mxu0
      %v3808 = vadd.f32 0.0, %v3807
      %v3809 = vpop.f32.mrb[0].mxu0
      %3810 = vdwg.mxu0
      %v3811 = vadd.f32 %v3641, %v3781
      %v3812 = vadd.f32 %v3642, %v3784
      %v3813 = vadd.f32 %v3643, %v3789
      %v3814 = vadd.f32 %v3644, %v3792
      %v3815 = vadd.f32 %v3645, %v3797
      %v3816 = vadd.f32 %v3646, %v3800
      %v3817 = vadd.f32 %v3647, %v3805
      %v3818 = vadd.f32 %v3648, %v3808
      %v3819 = vld [vmem:[%s2958] sm:$0xf]
      %v3820 = vld [vmem:[%s2958 + $0x4] sm:$0x1]
      %v3821 = vld [vmem:[%s2958 + $0x8] sm:$0xf]
      %v3822 = vld [vmem:[%s2958 + $0xc] sm:$0x1]
      %v3823 = vld [vmem:[%s2958 + $0x10] sm:$0xf]
      %v3824 = vld [vmem:[%s2958 + $0x14] sm:$0x1]
      %v3825 = vld [vmem:[%s2958 + $0x18] sm:$0xf]
      %v3826 = vld [vmem:[%s2958 + $0x1c] sm:$0x1]
      %v3827 = vld [vmem:[%s2958 + $0x20] sm:$0xf]
      %v3828 = vld [vmem:[%s2958 + $0x24] sm:$0x1]
      %v3829 = vld [vmem:[%s2958 + $0x28] sm:$0xf]
      %v3830 = vld [vmem:[%s2958 + $0x2c] sm:$0x1]
      %v3831 = vld [vmem:[%s2958 + $0x30] sm:$0xf]
      %v3832 = vld [vmem:[%s2958 + $0x34] sm:$0x1]
      %v3833 = vld [vmem:[%s2958 + $0x38] sm:$0xf]
      %v3834 = vld [vmem:[%s2958 + $0x3c] sm:$0x1]
      %v3836 = vshrl.u32 %v3819, 16
      %v3838 = vrot.slane %v3836, 4
      %v3839 = vshll.u32 %v3819, 16
      %v3841 = vrot.slane %v3839, 5
      %v3842 = vor.u32 %v3838, %v3841
      %v3843 = vrot.slane %v3842, 4
      %v3845 = vshll.u32 %v3820, 16
      %v3847 = vrot.slane %v3845, 5
      %v3848 = vsel %vm437, %v3843, %v3847
      %v3850 = vshrl.u32 %v3821, 16
      %v3852 = vrot.slane %v3850, 4
      %v3853 = vshll.u32 %v3821, 16
      %v3855 = vrot.slane %v3853, 5
      %v3856 = vor.u32 %v3852, %v3855
      %v3857 = vrot.slane %v3856, 4
      %v3859 = vshll.u32 %v3822, 16
      %v3861 = vrot.slane %v3859, 5
      %v3862 = vsel %vm437, %v3857, %v3861
      %v3864 = vshrl.u32 %v3823, 16
      %v3866 = vrot.slane %v3864, 4
      %v3867 = vshll.u32 %v3823, 16
      %v3869 = vrot.slane %v3867, 5
      %v3870 = vor.u32 %v3866, %v3869
      %v3871 = vrot.slane %v3870, 4
      %v3873 = vshll.u32 %v3824, 16
      %v3875 = vrot.slane %v3873, 5
      %v3876 = vsel %vm437, %v3871, %v3875
      %v3878 = vshrl.u32 %v3825, 16
      %v3880 = vrot.slane %v3878, 4
      %v3881 = vshll.u32 %v3825, 16
      %v3883 = vrot.slane %v3881, 5
      %v3884 = vor.u32 %v3880, %v3883
      %v3885 = vrot.slane %v3884, 4
      %v3887 = vshll.u32 %v3826, 16
      %v3889 = vrot.slane %v3887, 5
      %v3890 = vsel %vm437, %v3885, %v3889
      %v3892 = vshrl.u32 %v3827, 16
      %v3894 = vrot.slane %v3892, 4
      %v3895 = vshll.u32 %v3827, 16
      %v3897 = vrot.slane %v3895, 5
      %v3898 = vor.u32 %v3894, %v3897
      %v3899 = vrot.slane %v3898, 4
      %v3901 = vshll.u32 %v3828, 16
      %v3903 = vrot.slane %v3901, 5
      %v3904 = vsel %vm437, %v3899, %v3903
      %v3906 = vshrl.u32 %v3829, 16
      %v3908 = vrot.slane %v3906, 4
      %v3909 = vshll.u32 %v3829, 16
      %v3911 = vrot.slane %v3909, 5
      %v3912 = vor.u32 %v3908, %v3911
      %v3913 = vrot.slane %v3912, 4
      %v3915 = vshll.u32 %v3830, 16
      %v3917 = vrot.slane %v3915, 5
      %v3918 = vsel %vm437, %v3913, %v3917
      %v3920 = vshrl.u32 %v3831, 16
      %v3922 = vrot.slane %v3920, 4
      %v3923 = vshll.u32 %v3831, 16
      %v3925 = vrot.slane %v3923, 5
      %v3926 = vor.u32 %v3922, %v3925
      %v3927 = vrot.slane %v3926, 4
      %v3929 = vshll.u32 %v3832, 16
      %v3931 = vrot.slane %v3929, 5
      %v3932 = vsel %vm437, %v3927, %v3931
      %v3934 = vshrl.u32 %v3833, 16
      %v3936 = vrot.slane %v3934, 4
      %v3937 = vshll.u32 %v3833, 16
      %v3939 = vrot.slane %v3937, 5
      %v3940 = vor.u32 %v3936, %v3939
      %v3941 = vrot.slane %v3940, 4
      %v3943 = vshll.u32 %v3834, 16
      %v3945 = vrot.slane %v3943, 5
      %v3946 = vsel %vm437, %v3941, %v3945
      %s3947 = scalar_lea.vmem %s5, 256
      %v3948 = vld [vmem:[%s3947] sm:$0xf]
      %v3949 = vld [vmem:[%s3947 + $0x4] sm:$0xf]
      %v3950 = vld [vmem:[%s3947 + $0x8] sm:$0xf]
      %v3951 = vld [vmem:[%s3947 + $0xc] sm:$0xf]
      %v3952 = vld [vmem:[%s3947 + $0x10] sm:$0xf]
      %v3953 = vld [vmem:[%s3947 + $0x14] sm:$0xf]
      %v3954 = vld [vmem:[%s3947 + $0x18] sm:$0xf]
      %v3955 = vld [vmem:[%s3947 + $0x1c] sm:$0xf]
      %v3956 = vld [vmem:[%s3947 + $0x20] sm:$0xf]
      %v3957 = vld [vmem:[%s3947 + $0x24] sm:$0xf]
      %v3958 = vld [vmem:[%s3947 + $0x28] sm:$0xf]
      %v3959 = vld [vmem:[%s3947 + $0x2c] sm:$0xf]
      %v3960 = vld [vmem:[%s3947 + $0x30] sm:$0xf]
      %v3961 = vld [vmem:[%s3947 + $0x34] sm:$0xf]
      %v3962 = vld [vmem:[%s3947 + $0x38] sm:$0xf]
      %v3963 = vld [vmem:[%s3947 + $0x3c] sm:$0xf]
      %v3964 = vunpack.c.l.b16 %v3848
      %v3965 = vunpack.c.l.b16 %v3862
      %v3966 = vunpack.c.l.b16 %v3876
      %v3967 = vunpack.c.l.b16 %v3890
      %v3968 = vunpack.c.l.b16 %v3904
      %v3969 = vunpack.c.l.b16 %v3918
      %v3970 = vunpack.c.l.b16 %v3932
      %v3971 = vunpack.c.l.b16 %v3946
      %v3972 = vpack.c.b16 %v3965, %v3964
      %v3973 = vpack.c.b16 %v3967, %v3966
      %v3974 = vpack.c.b16 %v3969, %v3968
      %v3975 = vpack.c.b16 %v3971, %v3970
      %v3996 = vunpack.c.l.b16 %v3948
      %v3997 = vunpack.c.l.b16 %v3949
      %v3998 = vunpack.c.l.b16 %v3950
      %v3999 = vunpack.c.l.b16 %v3951
      %v4000 = vunpack.c.l.b16 %v3952
      %v4001 = vunpack.c.l.b16 %v3953
      %v4002 = vunpack.c.l.b16 %v3954
      %v4003 = vunpack.c.l.b16 %v3955
      %v4004 = vunpack.c.l.b16 %v3956
      %v4005 = vunpack.c.l.b16 %v3957
      %v4006 = vunpack.c.l.b16 %v3958
      %v4007 = vunpack.c.l.b16 %v3959
      %v4008 = vunpack.c.l.b16 %v3960
      %v4009 = vunpack.c.l.b16 %v3961
      %v4010 = vunpack.c.l.b16 %v3962
      %v4011 = vunpack.c.l.b16 %v3963
      %v4012 = vpack.c.b16 %v3997, %v3996
      %v4013 = vpack.c.b16 %v3999, %v3998
      %v4014 = vpack.c.b16 %v4001, %v4000
      %v4015 = vpack.c.b16 %v4003, %v4002
      %v4016 = vpack.c.b16 %v4005, %v4004
      %v4017 = vpack.c.b16 %v4007, %v4006
      %v4018 = vpack.c.b16 %v4009, %v4008
      %v4019 = vpack.c.b16 %v4011, %v4010
      %4028 = vmatprep.subr.bf16.mxu0 0
      %4029 = vmatpush1.bf16.msra.mxu0 %v4012
      %4030 = vmatprep.subr.bf16.mxu0 0
      %4031 = vmatpush1.bf16.msra.mxu0 %v4013
      %4032 = vmatprep.subr.bf16.mxu0 0
      %4033 = vmatpush1.bf16.msra.mxu0 %v4014
      %4034 = vmatprep.subr.bf16.mxu0 0
      %4035 = vmatpush1.bf16.msra.mxu0 %v4015
      %4036 = vmatprep.subr.bf16.mxu0 0
      %4037 = vmatpush1.bf16.msra.mxu0 %v4016
      %4038 = vmatprep.subr.bf16.mxu0 0
      %4039 = vmatpush1.bf16.msra.mxu0 %v4017
      %4040 = vmatprep.subr.bf16.mxu0 0
      %4041 = vmatpush1.bf16.msra.mxu0 %v4018
      %4042 = vmatprep.subr.bf16.mxu0 0
      %4043 = vmatpush1.bf16.msra.mxu0 %v4019
      %4044 = vmatprep.subr.bf16.mxu0 0
      %4045 = vmatpush1.bf16.msra.mxu0 0
      %4046 = vmatprep.subr.bf16.mxu0 0
      %4047 = vmatpush1.bf16.msra.mxu0 0
      %4048 = vmatprep.subr.bf16.mxu0 0
      %4049 = vmatpush1.bf16.msra.mxu0 0
      %4050 = vmatprep.subr.bf16.mxu0 0
      %4051 = vmatpush1.bf16.msra.mxu0 0
      %4052 = vmatprep.subr.bf16.mxu0 0
      %4053 = vmatpush1.bf16.msra.mxu0 0
      %4054 = vmatprep.subr.bf16.mxu0 0
      %4055 = vmatpush1.bf16.msra.mxu0 0
      %4056 = vmatprep.subr.bf16.mxu0 0
      %4057 = vmatpush1.bf16.msra.mxu0 0
      %4058 = vmatprep.subr.bf16.mxu0 0
      %4059 = vmatpush1.bf16.msra.mxu0 0
      %4060 = vmatprep.mubr.bf16.mxu0 0
      %4061 = vmatmul.mubr.bf16.gmra.mrb[0].mxu0 %v3972
      %v4062 = vpop.f32.mrb[0].mxu0
      %v4063 = vadd.f32 0.0, %v4062
      %v4064 = vpop.f32.mrb[0].mxu0
      %v4065 = vpop.f32.mrb[0].mxu0
      %v4066 = vadd.f32 0.0, %v4065
      %v4067 = vpop.f32.mrb[0].mxu0
      %4068 = vmatprep.mubr.bf16.mxu0 0
      %4069 = vmatmul.mubr.bf16.gmra.mrb[0].mxu0 %v3973
      %v4070 = vpop.f32.mrb[0].mxu0
      %v4071 = vadd.f32 0.0, %v4070
      %v4072 = vpop.f32.mrb[0].mxu0
      %v4073 = vpop.f32.mrb[0].mxu0
      %v4074 = vadd.f32 0.0, %v4073
      %v4075 = vpop.f32.mrb[0].mxu0
      %4076 = vmatprep.mubr.bf16.mxu0 0
      %4077 = vmatmul.mubr.bf16.gmra.mrb[0].mxu0 %v3974
      %v4078 = vpop.f32.mrb[0].mxu0
      %v4079 = vadd.f32 0.0, %v4078
      %v4080 = vpop.f32.mrb[0].mxu0
      %v4081 = vpop.f32.mrb[0].mxu0
      %v4082 = vadd.f32 0.0, %v4081
      %v4083 = vpop.f32.mrb[0].mxu0
      %4084 = vmatprep.mubr.bf16.mxu0 0
      %4085 = vmatmul.mubr.bf16.gmra.mrb[0].mxu0 %v3975
      %v4086 = vpop.f32.mrb[0].mxu0
      %v4087 = vadd.f32 0.0, %v4086
      %v4088 = vpop.f32.mrb[0].mxu0
      %v4089 = vpop.f32.mrb[0].mxu0
      %v4090 = vadd.f32 0.0, %v4089
      %v4091 = vpop.f32.mrb[0].mxu0
      %4092 = vdwg.mxu0
      %v4093 = vadd.f32 %v3811, %v4063
      %v4094 = vadd.f32 %v3812, %v4066
      %v4095 = vadd.f32 %v3813, %v4071
      %v4096 = vadd.f32 %v3814, %v4074
      %v4097 = vadd.f32 %v3815, %v4079
      %v4098 = vadd.f32 %v3816, %v4082
      %v4099 = vadd.f32 %v3817, %v4087
      %v4100 = vadd.f32 %v3818, %v4090
      %v4101 = vld [vmem:[%s2958] sm:$0xe]
      %v4102 = vld [vmem:[%s2958 + $0x8] sm:$0xe]
      %v4103 = vld [vmem:[%s2958 + $0x10] sm:$0xe]
      %v4104 = vld [vmem:[%s2958 + $0x18] sm:$0xe]
      %v4105 = vld [vmem:[%s2958 + $0x20] sm:$0xe]
      %v4106 = vld [vmem:[%s2958 + $0x28] sm:$0xe]
      %v4107 = vld [vmem:[%s2958 + $0x30] sm:$0xe]
      %v4108 = vld [vmem:[%s2958 + $0x38] sm:$0xe]
      %v4125 = vrot.slane %v4101, 5
      %v4126 = vrot.slane %v4125, 4
      %v4127 = vrot.slane %v3820, 5
      %v4128 = vsel %vm3462, %v4126, %v4127
      %v4129 = vrot.slane %v4102, 5
      %v4130 = vrot.slane %v4129, 4
      %v4131 = vrot.slane %v3822, 5
      %v4132 = vsel %vm3462, %v4130, %v4131
      %v4133 = vrot.slane %v4103, 5
      %v4134 = vrot.slane %v4133, 4
      %v4135 = vrot.slane %v3824, 5
      %v4136 = vsel %vm3462, %v4134, %v4135
      %v4137 = vrot.slane %v4104, 5
      %v4138 = vrot.slane %v4137, 4
      %v4139 = vrot.slane %v3826, 5
      %v4140 = vsel %vm3462, %v4138, %v4139
      %v4141 = vrot.slane %v4105, 5
      %v4142 = vrot.slane %v4141, 4
      %v4143 = vrot.slane %v3828, 5
      %v4144 = vsel %vm3462, %v4142, %v4143
      %v4145 = vrot.slane %v4106, 5
      %v4146 = vrot.slane %v4145, 4
      %v4147 = vrot.slane %v3830, 5
      %v4148 = vsel %vm3462, %v4146, %v4147
      %v4149 = vrot.slane %v4107, 5
      %v4150 = vrot.slane %v4149, 4
      %v4151 = vrot.slane %v3832, 5
      %v4152 = vsel %vm3462, %v4150, %v4151
      %v4153 = vrot.slane %v4108, 5
      %v4154 = vrot.slane %v4153, 4
      %v4155 = vrot.slane %v3834, 5
      %v4156 = vsel %vm3462, %v4154, %v4155
      %s4157 = scalar_lea.vmem %s5, 320
      %v4158 = vld [vmem:[%s4157] sm:$0xf]
      %v4159 = vld [vmem:[%s4157 + $0x4] sm:$0xf]
      %v4160 = vld [vmem:[%s4157 + $0x8] sm:$0xf]
      %v4161 = vld [vmem:[%s4157 + $0xc] sm:$0xf]
      %v4162 = vld [vmem:[%s4157 + $0x10] sm:$0xf]
      %v4163 = vld [vmem:[%s4157 + $0x14] sm:$0xf]
      %v4164 = vld [vmem:[%s4157 + $0x18] sm:$0xf]
      %v4165 = vld [vmem:[%s4157 + $0x1c] sm:$0xf]
      %v4166 = vld [vmem:[%s4157 + $0x20] sm:$0xf]
      %v4167 = vld [vmem:[%s4157 + $0x24] sm:$0xf]
      %v4168 = vld [vmem:[%s4157 + $0x28] sm:$0xf]
      %v4169 = vld [vmem:[%s4157 + $0x2c] sm:$0xf]
      %v4170 = vld [vmem:[%s4157 + $0x30] sm:$0xf]
      %v4171 = vld [vmem:[%s4157 + $0x34] sm:$0xf]
      %v4172 = vld [vmem:[%s4157 + $0x38] sm:$0xf]
      %v4173 = vld [vmem:[%s4157 + $0x3c] sm:$0xf]
      %v4174 = vunpack.c.l.b16 %v4128
      %v4175 = vunpack.c.l.b16 %v4132
      %v4176 = vunpack.c.l.b16 %v4136
      %v4177 = vunpack.c.l.b16 %v4140
      %v4178 = vunpack.c.l.b16 %v4144
      %v4179 = vunpack.c.l.b16 %v4148
      %v4180 = vunpack.c.l.b16 %v4152
      %v4181 = vunpack.c.l.b16 %v4156
      %v4182 = vpack.c.b16 %v4175, %v4174
      %v4183 = vpack.c.b16 %v4177, %v4176
      %v4184 = vpack.c.b16 %v4179, %v4178
      %v4185 = vpack.c.b16 %v4181, %v4180
      %v4206 = vunpack.c.l.b16 %v4158
      %v4207 = vunpack.c.l.b16 %v4159
      %v4208 = vunpack.c.l.b16 %v4160
      %v4209 = vunpack.c.l.b16 %v4161
      %v4210 = vunpack.c.l.b16 %v4162
      %v4211 = vunpack.c.l.b16 %v4163
      %v4212 = vunpack.c.l.b16 %v4164
      %v4213 = vunpack.c.l.b16 %v4165
      %v4214 = vunpack.c.l.b16 %v4166
      %v4215 = vunpack.c.l.b16 %v4167
      %v4216 = vunpack.c.l.b16 %v4168
      %v4217 = vunpack.c.l.b16 %v4169
      %v4218 = vunpack.c.l.b16 %v4170
      %v4219 = vunpack.c.l.b16 %v4171
      %v4220 = vunpack.c.l.b16 %v4172
      %v4221 = vunpack.c.l.b16 %v4173
      %v4222 = vpack.c.b16 %v4207, %v4206
      %v4223 = vpack.c.b16 %v4209, %v4208
      %v4224 = vpack.c.b16 %v4211, %v4210
      %v4225 = vpack.c.b16 %v4213, %v4212
      %v4226 = vpack.c.b16 %v4215, %v4214
      %v4227 = vpack.c.b16 %v4217, %v4216
      %v4228 = vpack.c.b16 %v4219, %v4218
      %v4229 = vpack.c.b16 %v4221, %v4220
      %4238 = vmatprep.subr.bf16.mxu0 0
      %4239 = vmatpush1.bf16.msra.mxu0 %v4222
      %4240 = vmatprep.subr.bf16.mxu0 0
      %4241 = vmatpush1.bf16.msra.mxu0 %v4223
      %4242 = vmatprep.subr.bf16.mxu0 0
      %4243 = vmatpush1.bf16.msra.mxu0 %v4224
      %4244 = vmatprep.subr.bf16.mxu0 0
      %4245 = vmatpush1.bf16.msra.mxu0 %v4225
      %4246 = vmatprep.subr.bf16.mxu0 0
      %4247 = vmatpush1.bf16.msra.mxu0 %v4226
      %4248 = vmatprep.subr.bf16.mxu0 0
      %4249 = vmatpush1.bf16.msra.mxu0 %v4227
      %4250 = vmatprep.subr.bf16.mxu0 0
      %4251 = vmatpush1.bf16.msra.mxu0 %v4228
      %4252 = vmatprep.subr.bf16.mxu0 0
      %4253 = vmatpush1.bf16.msra.mxu0 %v4229
      %4254 = vmatprep.subr.bf16.mxu0 0
      %4255 = vmatpush1.bf16.msra.mxu0 0
      %4256 = vmatprep.subr.bf16.mxu0 0
      %4257 = vmatpush1.bf16.msra.mxu0 0
      %4258 = vmatprep.subr.bf16.mxu0 0
      %4259 = vmatpush1.bf16.msra.mxu0 0
      %4260 = vmatprep.subr.bf16.mxu0 0
      %4261 = vmatpush1.bf16.msra.mxu0 0
      %4262 = vmatprep.subr.bf16.mxu0 0
      %4263 = vmatpush1.bf16.msra.mxu0 0
      %4264 = vmatprep.subr.bf16.mxu0 0
      %4265 = vmatpush1.bf16.msra.mxu0 0
      %4266 = vmatprep.subr.bf16.mxu0 0
      %4267 = vmatpush1.bf16.msra.mxu0 0
      %4268 = vmatprep.subr.bf16.mxu0 0
      %4269 = vmatpush1.bf16.msra.mxu0 0
      %4270 = vmatprep.mubr.bf16.mxu0 0
      %4271 = vmatmul.mubr.bf16.gmra.mrb[0].mxu0 %v4182
      %v4272 = vpop.f32.mrb[0].mxu0
      %v4273 = vadd.f32 0.0, %v4272
      %v4274 = vpop.f32.mrb[0].mxu0
      %v4275 = vpop.f32.mrb[0].mxu0
      %v4276 = vadd.f32 0.0, %v4275
      %v4277 = vpop.f32.mrb[0].mxu0
      %4278 = vmatprep.mubr.bf16.mxu0 0
      %4279 = vmatmul.mubr.bf16.gmra.mrb[0].mxu0 %v4183
      %v4280 = vpop.f32.mrb[0].mxu0
      %v4281 = vadd.f32 0.0, %v4280
      %v4282 = vpop.f32.mrb[0].mxu0
      %v4283 = vpop.f32.mrb[0].mxu0
      %v4284 = vadd.f32 0.0, %v4283
      %v4285 = vpop.f32.mrb[0].mxu0
      %4286 = vmatprep.mubr.bf16.mxu0 0
      %4287 = vmatmul.mubr.bf16.gmra.mrb[0].mxu0 %v4184
      %v4288 = vpop.f32.mrb[0].mxu0
      %v4289 = vadd.f32 0.0, %v4288
      %v4290 = vpop.f32.mrb[0].mxu0
      %v4291 = vpop.f32.mrb[0].mxu0
      %v4292 = vadd.f32 0.0, %v4291
      %v4293 = vpop.f32.mrb[0].mxu0
      %4294 = vmatprep.mubr.bf16.mxu0 0
      %4295 = vmatmul.mubr.bf16.gmra.mrb[0].mxu0 %v4185
      %v4296 = vpop.f32.mrb[0].mxu0
      %v4297 = vadd.f32 0.0, %v4296
      %v4298 = vpop.f32.mrb[0].mxu0
      %v4299 = vpop.f32.mrb[0].mxu0
      %v4300 = vadd.f32 0.0, %v4299
      %v4301 = vpop.f32.mrb[0].mxu0
      %4302 = vdwg.mxu0
      %v4303 = vadd.f32 %v4093, %v4273
      %v4304 = vadd.f32 %v4094, %v4276
      %v4305 = vadd.f32 %v4095, %v4281
      %v4306 = vadd.f32 %v4096, %v4284
      %v4307 = vadd.f32 %v4097, %v4289
      %v4308 = vadd.f32 %v4098, %v4292
      %v4309 = vadd.f32 %v4099, %v4297
      %v4310 = vadd.f32 %v4100, %v4300
      %s4311 = scalar_lea.vmem [#allocation3], 16
      %v4312 = vld [vmem:[%s4311] sm:$0xf]
      %v4313 = vld [vmem:[%s4311 + $0x8] sm:$0xf]
      %v4314 = vld [vmem:[%s4311 + $0x10] sm:$0xf]
      %v4315 = vld [vmem:[%s4311 + $0x18] sm:$0xf]
      %v4316 = vld [vmem:[%s4311 + $0x20] sm:$0xf]
      %v4317 = vld [vmem:[%s4311 + $0x28] sm:$0xf]
      %v4318 = vld [vmem:[%s4311 + $0x30] sm:$0xf]
      %v4319 = vld [vmem:[%s4311 + $0x38] sm:$0xf]
      %s4320 = scalar_lea.vmem %s5, 384
      %v4321 = vld [vmem:[%s4320] sm:$0xf]
      %v4322 = vld [vmem:[%s4320 + $0x4] sm:$0xf]
      %v4323 = vld [vmem:[%s4320 + $0x8] sm:$0xf]
      %v4324 = vld [vmem:[%s4320 + $0xc] sm:$0xf]
      %v4325 = vld [vmem:[%s4320 + $0x10] sm:$0xf]
      %v4326 = vld [vmem:[%s4320 + $0x14] sm:$0xf]
      %v4327 = vld [vmem:[%s4320 + $0x18] sm:$0xf]
      %v4328 = vld [vmem:[%s4320 + $0x1c] sm:$0xf]
      %v4329 = vld [vmem:[%s4320 + $0x20] sm:$0xf]
      %v4330 = vld [vmem:[%s4320 + $0x24] sm:$0xf]
      %v4331 = vld [vmem:[%s4320 + $0x28] sm:$0xf]
      %v4332 = vld [vmem:[%s4320 + $0x2c] sm:$0xf]
      %v4333 = vld [vmem:[%s4320 + $0x30] sm:$0xf]
      %v4334 = vld [vmem:[%s4320 + $0x34] sm:$0xf]
      %v4335 = vld [vmem:[%s4320 + $0x38] sm:$0xf]
      %v4336 = vld [vmem:[%s4320 + $0x3c] sm:$0xf]
      %v4345 = vunpack.c.l.b16 %v4312
      %v4346 = vunpack.c.l.b16 %v4313
      %v4347 = vunpack.c.l.b16 %v4314
      %v4348 = vunpack.c.l.b16 %v4315
      %v4349 = vunpack.c.l.b16 %v4316
      %v4350 = vunpack.c.l.b16 %v4317
      %v4351 = vunpack.c.l.b16 %v4318
      %v4352 = vunpack.c.l.b16 %v4319
      %v4353 = vpack.c.b16 %v4346, %v4345
      %v4354 = vpack.c.b16 %v4348, %v4347
      %v4355 = vpack.c.b16 %v4350, %v4349
      %v4356 = vpack.c.b16 %v4352, %v4351
      %v4377 = vunpack.c.l.b16 %v4321
      %v4378 = vunpack.c.l.b16 %v4322
      %v4379 = vunpack.c.l.b16 %v4323
      %v4380 = vunpack.c.l.b16 %v4324
      %v4381 = vunpack.c.l.b16 %v4325
      %v4382 = vunpack.c.l.b16 %v4326
      %v4383 = vunpack.c.l.b16 %v4327
      %v4384 = vunpack.c.l.b16 %v4328
      %v4385 = vunpack.c.l.b16 %v4329
      %v4386 = vunpack.c.l.b16 %v4330
      %v4387 = vunpack.c.l.b16 %v4331
      %v4388 = vunpack.c.l.b16 %v4332
      %v4389 = vunpack.c.l.b16 %v4333
      %v4390 = vunpack.c.l.b16 %v4334
      %v4391 = vunpack.c.l.b16 %v4335
      %v4392 = vunpack.c.l.b16 %v4336
      %v4393 = vpack.c.b16 %v4378, %v4377
      %v4394 = vpack.c.b16 %v4380, %v4379
      %v4395 = vpack.c.b16 %v4382, %v4381
      %v4396 = vpack.c.b16 %v4384, %v4383
      %v4397 = vpack.c.b16 %v4386, %v4385
      %v4398 = vpack.c.b16 %v4388, %v4387
      %v4399 = vpack.c.b16 %v4390, %v4389
      %v4400 = vpack.c.b16 %v4392, %v4391
      %4409 = vmatprep.subr.bf16.mxu0 0
      %4410 = vmatpush1.bf16.msra.mxu0 %v4393
      %4411 = vmatprep.subr.bf16.mxu0 0
      %4412 = vmatpush1.bf16.msra.mxu0 %v4394
      %4413 = vmatprep.subr.bf16.mxu0 0
      %4414 = vmatpush1.bf16.msra.mxu0 %v4395
      %4415 = vmatprep.subr.bf16.mxu0 0
      %4416 = vmatpush1.bf16.msra.mxu0 %v4396
      %4417 = vmatprep.subr.bf16.mxu0 0
      %4418 = vmatpush1.bf16.msra.mxu0 %v4397
      %4419 = vmatprep.subr.bf16.mxu0 0
      %4420 = vmatpush1.bf16.msra.mxu0 %v4398
      %4421 = vmatprep.subr.bf16.mxu0 0
      %4422 = vmatpush1.bf16.msra.mxu0 %v4399
      %4423 = vmatprep.subr.bf16.mxu0 0
      %4424 = vmatpush1.bf16.msra.mxu0 %v4400
      %4425 = vmatprep.subr.bf16.mxu0 0
      %4426 = vmatpush1.bf16.msra.mxu0 0
      %4427 = vmatprep.subr.bf16.mxu0 0
      %4428 = vmatpush1.bf16.msra.mxu0 0
      %4429 = vmatprep.subr.bf16.mxu0 0
      %4430 = vmatpush1.bf16.msra.mxu0 0
      %4431 = vmatprep.subr.bf16.mxu0 0
      %4432 = vmatpush1.bf16.msra.mxu0 0
      %4433 = vmatprep.subr.bf16.mxu0 0
      %4434 = vmatpush1.bf16.msra.mxu0 0
      %4435 = vmatprep.subr.bf16.mxu0 0
      %4436 = vmatpush1.bf16.msra.mxu0 0
      %4437 = vmatprep.subr.bf16.mxu0 0
      %4438 = vmatpush1.bf16.msra.mxu0 0
      %4439 = vmatprep.subr.bf16.mxu0 0
      %4440 = vmatpush1.bf16.msra.mxu0 0
      %4441 = vmatprep.mubr.bf16.mxu0 0
      %4442 = vmatmul.mubr.bf16.gmra.mrb[0].mxu0 %v4353
      %v4443 = vpop.f32.mrb[0].mxu0
      %v4444 = vadd.f32 0.0, %v4443
      %v4445 = vpop.f32.mrb[0].mxu0
      %v4446 = vpop.f32.mrb[0].mxu0
      %v4447 = vadd.f32 0.0, %v4446
      %v4448 = vpop.f32.mrb[0].mxu0
      %4449 = vmatprep.mubr.bf16.mxu0 0
      %4450 = vmatmul.mubr.bf16.gmra.mrb[0].mxu0 %v4354
      %v4451 = vpop.f32.mrb[0].mxu0
      %v4452 = vadd.f32 0.0, %v4451
      %v4453 = vpop.f32.mrb[0].mxu0
      %v4454 = vpop.f32.mrb[0].mxu0
      %v4455 = vadd.f32 0.0, %v4454
      %v4456 = vpop.f32.mrb[0].mxu0
      %4457 = vmatprep.mubr.bf16.mxu0 0
      %4458 = vmatmul.mubr.bf16.gmra.mrb[0].mxu0 %v4355
      %v4459 = vpop.f32.mrb[0].mxu0
      %v4460 = vadd.f32 0.0, %v4459
      %v4461 = vpop.f32.mrb[0].mxu0
      %v4462 = vpop.f32.mrb[0].mxu0
      %v4463 = vadd.f32 0.0, %v4462
      %v4464 = vpop.f32.mrb[0].mxu0
      %4465 = vmatprep.mubr.bf16.mxu0 0
      %4466 = vmatmul.mubr.bf16.gmra.mrb[0].mxu0 %v4356
      %v4467 = vpop.f32.mrb[0].mxu0
      %v4468 = vadd.f32 0.0, %v4467
      %v4469 = vpop.f32.mrb[0].mxu0
      %v4470 = vpop.f32.mrb[0].mxu0
      %v4471 = vadd.f32 0.0, %v4470
      %v4472 = vpop.f32.mrb[0].mxu0
      %4473 = vdwg.mxu0
      %v4474 = vadd.f32 %v4303, %v4444
      %v4475 = vadd.f32 %v4304, %v4447
      %v4476 = vadd.f32 %v4305, %v4452
      %v4477 = vadd.f32 %v4306, %v4455
      %v4478 = vadd.f32 %v4307, %v4460
      %v4479 = vadd.f32 %v4308, %v4463
      %v4480 = vadd.f32 %v4309, %v4468
      %v4481 = vadd.f32 %v4310, %v4471
      %v4482 = vld [vmem:[%s4311] sm:$0xf]
      %v4483 = vld [vmem:[%s4311 + $0x4] sm:$0x1]
      %v4484 = vld [vmem:[%s4311 + $0x8] sm:$0xf]
      %v4485 = vld [vmem:[%s4311 + $0xc] sm:$0x1]
      %v4486 = vld [vmem:[%s4311 + $0x10] sm:$0xf]
      %v4487 = vld [vmem:[%s4311 + $0x14] sm:$0x1]
      %v4488 = vld [vmem:[%s4311 + $0x18] sm:$0xf]
      %v4489 = vld [vmem:[%s4311 + $0x1c] sm:$0x1]
      %v4490 = vld [vmem:[%s4311 + $0x20] sm:$0xf]
      %v4491 = vld [vmem:[%s4311 + $0x24] sm:$0x1]
      %v4492 = vld [vmem:[%s4311 + $0x28] sm:$0xf]
      %v4493 = vld [vmem:[%s4311 + $0x2c] sm:$0x1]
      %v4494 = vld [vmem:[%s4311 + $0x30] sm:$0xf]
      %v4495 = vld [vmem:[%s4311 + $0x34] sm:$0x1]
      %v4496 = vld [vmem:[%s4311 + $0x38] sm:$0xf]
      %v4497 = vld [vmem:[%s4311 + $0x3c] sm:$0x1]
      %v4499 = vshrl.u32 %v4482, 16
      %v4501 = vrot.slane %v4499, 4
      %v4502 = vshll.u32 %v4482, 16
      %v4504 = vrot.slane %v4502, 5
      %v4505 = vor.u32 %v4501, %v4504
      %v4506 = vrot.slane %v4505, 4
      %v4508 = vshll.u32 %v4483, 16
      %v4510 = vrot.slane %v4508, 5
      %v4511 = vsel %vm437, %v4506, %v4510
      %v4513 = vshrl.u32 %v4484, 16
      %v4515 = vrot.slane %v4513, 4
      %v4516 = vshll.u32 %v4484, 16
      %v4518 = vrot.slane %v4516, 5
      %v4519 = vor.u32 %v4515, %v4518
      %v4520 = vrot.slane %v4519, 4
      %v4522 = vshll.u32 %v4485, 16
      %v4524 = vrot.slane %v4522, 5
      %v4525 = vsel %vm437, %v4520, %v4524
      %v4527 = vshrl.u32 %v4486, 16
      %v4529 = vrot.slane %v4527, 4
      %v4530 = vshll.u32 %v4486, 16
      %v4532 = vrot.slane %v4530, 5
      %v4533 = vor.u32 %v4529, %v4532
      %v4534 = vrot.slane %v4533, 4
      %v4536 = vshll.u32 %v4487, 16
      %v4538 = vrot.slane %v4536, 5
      %v4539 = vsel %vm437, %v4534, %v4538
      %v4541 = vshrl.u32 %v4488, 16
      %v4543 = vrot.slane %v4541, 4
      %v4544 = vshll.u32 %v4488, 16
      %v4546 = vrot.slane %v4544, 5
      %v4547 = vor.u32 %v4543, %v4546
      %v4548 = vrot.slane %v4547, 4
      %v4550 = vshll.u32 %v4489, 16
      %v4552 = vrot.slane %v4550, 5
      %v4553 = vsel %vm437, %v4548, %v4552
      %v4555 = vshrl.u32 %v4490, 16
      %v4557 = vrot.slane %v4555, 4
      %v4558 = vshll.u32 %v4490, 16
      %v4560 = vrot.slane %v4558, 5
      %v4561 = vor.u32 %v4557, %v4560
      %v4562 = vrot.slane %v4561, 4
      %v4564 = vshll.u32 %v4491, 16
      %v4566 = vrot.slane %v4564, 5
      %v4567 = vsel %vm437, %v4562, %v4566
      %v4569 = vshrl.u32 %v4492, 16
      %v4571 = vrot.slane %v4569, 4
      %v4572 = vshll.u32 %v4492, 16
      %v4574 = vrot.slane %v4572, 5
      %v4575 = vor.u32 %v4571, %v4574
      %v4576 = vrot.slane %v4575, 4
      %v4578 = vshll.u32 %v4493, 16
      %v4580 = vrot.slane %v4578, 5
      %v4581 = vsel %vm437, %v4576, %v4580
      %v4583 = vshrl.u32 %v4494, 16
      %v4585 = vrot.slane %v4583, 4
      %v4586 = vshll.u32 %v4494, 16
      %v4588 = vrot.slane %v4586, 5
      %v4589 = vor.u32 %v4585, %v4588
      %v4590 = vrot.slane %v4589, 4
      %v4592 = vshll.u32 %v4495, 16
      %v4594 = vrot.slane %v4592, 5
      %v4595 = vsel %vm437, %v4590, %v4594
      %v4597 = vshrl.u32 %v4496, 16
      %v4599 = vrot.slane %v4597, 4
      %v4600 = vshll.u32 %v4496, 16
      %v4602 = vrot.slane %v4600, 5
      %v4603 = vor.u32 %v4599, %v4602
      %v4604 = vrot.slane %v4603, 4
      %v4606 = vshll.u32 %v4497, 16
      %v4608 = vrot.slane %v4606, 5
      %v4609 = vsel %vm437, %v4604, %v4608
      %s4610 = scalar_lea.vmem %s5, 448
      %v4611 = vld [vmem:[%s4610] sm:$0xf]
      %v4612 = vld [vmem:[%s4610 + $0x4] sm:$0xf]
      %v4613 = vld [vmem:[%s4610 + $0x8] sm:$0xf]
      %v4614 = vld [vmem:[%s4610 + $0xc] sm:$0xf]
      %v4615 = vld [vmem:[%s4610 + $0x10] sm:$0xf]
      %v4616 = vld [vmem:[%s4610 + $0x14] sm:$0xf]
      %v4617 = vld [vmem:[%s4610 + $0x18] sm:$0xf]
      %v4618 = vld [vmem:[%s4610 + $0x1c] sm:$0xf]
      %v4619 = vld [vmem:[%s4610 + $0x20] sm:$0xf]
      %v4620 = vld [vmem:[%s4610 + $0x24] sm:$0xf]
      %v4621 = vld [vmem:[%s4610 + $0x28] sm:$0xf]
      %v4622 = vld [vmem:[%s4610 + $0x2c] sm:$0xf]
      %v4623 = vld [vmem:[%s4610 + $0x30] sm:$0xf]
      %v4624 = vld [vmem:[%s4610 + $0x34] sm:$0xf]
      %v4625 = vld [vmem:[%s4610 + $0x38] sm:$0xf]
      %v4626 = vld [vmem:[%s4610 + $0x3c] sm:$0xf]
      %v4627 = vunpack.c.l.b16 %v4511
      %v4628 = vunpack.c.l.b16 %v4525
      %v4629 = vunpack.c.l.b16 %v4539
      %v4630 = vunpack.c.l.b16 %v4553
      %v4631 = vunpack.c.l.b16 %v4567
      %v4632 = vunpack.c.l.b16 %v4581
      %v4633 = vunpack.c.l.b16 %v4595
      %v4634 = vunpack.c.l.b16 %v4609
      %v4635 = vpack.c.b16 %v4628, %v4627
      %v4636 = vpack.c.b16 %v4630, %v4629
      %v4637 = vpack.c.b16 %v4632, %v4631
      %v4638 = vpack.c.b16 %v4634, %v4633
      %v4659 = vunpack.c.l.b16 %v4611
      %v4660 = vunpack.c.l.b16 %v4612
      %v4661 = vunpack.c.l.b16 %v4613
      %v4662 = vunpack.c.l.b16 %v4614
      %v4663 = vunpack.c.l.b16 %v4615
      %v4664 = vunpack.c.l.b16 %v4616
      %v4665 = vunpack.c.l.b16 %v4617
      %v4666 = vunpack.c.l.b16 %v4618
      %v4667 = vunpack.c.l.b16 %v4619
      %v4668 = vunpack.c.l.b16 %v4620
      %v4669 = vunpack.c.l.b16 %v4621
      %v4670 = vunpack.c.l.b16 %v4622
      %v4671 = vunpack.c.l.b16 %v4623
      %v4672 = vunpack.c.l.b16 %v4624
      %v4673 = vunpack.c.l.b16 %v4625
      %v4674 = vunpack.c.l.b16 %v4626
      %v4675 = vpack.c.b16 %v4660, %v4659
      %v4676 = vpack.c.b16 %v4662, %v4661
      %v4677 = vpack.c.b16 %v4664, %v4663
      %v4678 = vpack.c.b16 %v4666, %v4665
      %v4679 = vpack.c.b16 %v4668, %v4667
      %v4680 = vpack.c.b16 %v4670, %v4669
      %v4681 = vpack.c.b16 %v4672, %v4671
      %v4682 = vpack.c.b16 %v4674, %v4673
      %4691 = vmatprep.subr.bf16.mxu0 0
      %4692 = vmatpush1.bf16.msra.mxu0 %v4675
      %4693 = vmatprep.subr.bf16.mxu0 0
      %4694 = vmatpush1.bf16.msra.mxu0 %v4676
      %4695 = vmatprep.subr.bf16.mxu0 0
      %4696 = vmatpush1.bf16.msra.mxu0 %v4677
      %4697 = vmatprep.subr.bf16.mxu0 0
      %4698 = vmatpush1.bf16.msra.mxu0 %v4678
      %4699 = vmatprep.subr.bf16.mxu0 0
      %4700 = vmatpush1.bf16.msra.mxu0 %v4679
      %4701 = vmatprep.subr.bf16.mxu0 0
      %4702 = vmatpush1.bf16.msra.mxu0 %v4680
      %4703 = vmatprep.subr.bf16.mxu0 0
      %4704 = vmatpush1.bf16.msra.mxu0 %v4681
      %4705 = vmatprep.subr.bf16.mxu0 0
      %4706 = vmatpush1.bf16.msra.mxu0 %v4682
      %4707 = vmatprep.subr.bf16.mxu0 0
      %4708 = vmatpush1.bf16.msra.mxu0 0
      %4709 = vmatprep.subr.bf16.mxu0 0
      %4710 = vmatpush1.bf16.msra.mxu0 0
      %4711 = vmatprep.subr.bf16.mxu0 0
      %4712 = vmatpush1.bf16.msra.mxu0 0
      %4713 = vmatprep.subr.bf16.mxu0 0
      %4714 = vmatpush1.bf16.msra.mxu0 0
      %4715 = vmatprep.subr.bf16.mxu0 0
      %4716 = vmatpush1.bf16.msra.mxu0 0
      %4717 = vmatprep.subr.bf16.mxu0 0
      %4718 = vmatpush1.bf16.msra.mxu0 0
      %4719 = vmatprep.subr.bf16.mxu0 0
      %4720 = vmatpush1.bf16.msra.mxu0 0
      %4721 = vmatprep.subr.bf16.mxu0 0
      %4722 = vmatpush1.bf16.msra.mxu0 0
      %4723 = vmatprep.mubr.bf16.mxu0 0
      %4724 = vmatmul.mubr.bf16.gmra.mrb[0].mxu0 %v4635
      %v4725 = vpop.f32.mrb[0].mxu0
      %v4726 = vadd.f32 0.0, %v4725
      %v4727 = vpop.f32.mrb[0].mxu0
      %v4728 = vpop.f32.mrb[0].mxu0
      %v4729 = vadd.f32 0.0, %v4728
      %v4730 = vpop.f32.mrb[0].mxu0
      %4731 = vmatprep.mubr.bf16.mxu0 0
      %4732 = vmatmul.mubr.bf16.gmra.mrb[0].mxu0 %v4636
      %v4733 = vpop.f32.mrb[0].mxu0
      %v4734 = vadd.f32 0.0, %v4733
      %v4735 = vpop.f32.mrb[0].mxu0
      %v4736 = vpop.f32.mrb[0].mxu0
      %v4737 = vadd.f32 0.0, %v4736
      %v4738 = vpop.f32.mrb[0].mxu0
      %4739 = vmatprep.mubr.bf16.mxu0 0
      %4740 = vmatmul.mubr.bf16.gmra.mrb[0].mxu0 %v4637
      %v4741 = vpop.f32.mrb[0].mxu0
      %v4742 = vadd.f32 0.0, %v4741
      %v4743 = vpop.f32.mrb[0].mxu0
      %v4744 = vpop.f32.mrb[0].mxu0
      %v4745 = vadd.f32 0.0, %v4744
      %v4746 = vpop.f32.mrb[0].mxu0
      %4747 = vmatprep.mubr.bf16.mxu0 0
      %4748 = vmatmul.mubr.bf16.gmra.mrb[0].mxu0 %v4638
      %v4749 = vpop.f32.mrb[0].mxu0
      %v4750 = vadd.f32 0.0, %v4749
      %v4751 = vpop.f32.mrb[0].mxu0
      %v4752 = vpop.f32.mrb[0].mxu0
      %v4753 = vadd.f32 0.0, %v4752
      %v4754 = vpop.f32.mrb[0].mxu0
      %4755 = vdwg.mxu0
      %v4756 = vadd.f32 %v4474, %v4726
      %v4757 = vadd.f32 %v4475, %v4729
      %v4758 = vadd.f32 %v4476, %v4734
      %v4759 = vadd.f32 %v4477, %v4737
      %v4760 = vadd.f32 %v4478, %v4742
      %v4761 = vadd.f32 %v4479, %v4745
      %v4762 = vadd.f32 %v4480, %v4750
      %v4763 = vadd.f32 %v4481, %v4753
      %v4764 = vld [vmem:[%s4311] sm:$0xe]
      %v4765 = vld [vmem:[%s4311 + $0x8] sm:$0xe]
      %v4766 = vld [vmem:[%s4311 + $0x10] sm:$0xe]
      %v4767 = vld [vmem:[%s4311 + $0x18] sm:$0xe]
      %v4768 = vld [vmem:[%s4311 + $0x20] sm:$0xe]
      %v4769 = vld [vmem:[%s4311 + $0x28] sm:$0xe]
      %v4770 = vld [vmem:[%s4311 + $0x30] sm:$0xe]
      %v4771 = vld [vmem:[%s4311 + $0x38] sm:$0xe]
      %v4788 = vrot.slane %v4764, 5
      %v4789 = vrot.slane %v4788, 4
      %v4790 = vrot.slane %v4483, 5
      %v4791 = vsel %vm3462, %v4789, %v4790
      %v4792 = vrot.slane %v4765, 5
      %v4793 = vrot.slane %v4792, 4
      %v4794 = vrot.slane %v4485, 5
      %v4795 = vsel %vm3462, %v4793, %v4794
      %v4796 = vrot.slane %v4766, 5
      %v4797 = vrot.slane %v4796, 4
      %v4798 = vrot.slane %v4487, 5
      %v4799 = vsel %vm3462, %v4797, %v4798
      %v4800 = vrot.slane %v4767, 5
      %v4801 = vrot.slane %v4800, 4
      %v4802 = vrot.slane %v4489, 5
      %v4803 = vsel %vm3462, %v4801, %v4802
      %v4804 = vrot.slane %v4768, 5
      %v4805 = vrot.slane %v4804, 4
      %v4806 = vrot.slane %v4491, 5
      %v4807 = vsel %vm3462, %v4805, %v4806
      %v4808 = vrot.slane %v4769, 5
      %v4809 = vrot.slane %v4808, 4
      %v4810 = vrot.slane %v4493, 5
      %v4811 = vsel %vm3462, %v4809, %v4810
      %v4812 = vrot.slane %v4770, 5
      %v4813 = vrot.slane %v4812, 4
      %v4814 = vrot.slane %v4495, 5
      %v4815 = vsel %vm3462, %v4813, %v4814
      %v4816 = vrot.slane %v4771, 5
      %v4817 = vrot.slane %v4816, 4
      %v4818 = vrot.slane %v4497, 5
      %v4819 = vsel %vm3462, %v4817, %v4818
      %s4820 = scalar_lea.vmem %s5, 512
      %v4821 = vld [vmem:[%s4820] sm:$0xf]
      %v4822 = vld [vmem:[%s4820 + $0x4] sm:$0xf]
      %v4823 = vld [vmem:[%s4820 + $0x8] sm:$0xf]
      %v4824 = vld [vmem:[%s4820 + $0xc] sm:$0xf]
      %v4825 = vld [vmem:[%s4820 + $0x10] sm:$0xf]
      %v4826 = vld [vmem:[%s4820 + $0x14] sm:$0xf]
      %v4827 = vld [vmem:[%s4820 + $0x18] sm:$0xf]
      %v4828 = vld [vmem:[%s4820 + $0x1c] sm:$0xf]
      %v4829 = vld [vmem:[%s4820 + $0x20] sm:$0xf]
      %v4830 = vld [vmem:[%s4820 + $0x24] sm:$0xf]
      %v4831 = vld [vmem:[%s4820 + $0x28] sm:$0xf]
      %v4832 = vld [vmem:[%s4820 + $0x2c] sm:$0xf]
      %v4833 = vld [vmem:[%s4820 + $0x30] sm:$0xf]
      %v4834 = vld [vmem:[%s4820 + $0x34] sm:$0xf]
      %v4835 = vld [vmem:[%s4820 + $0x38] sm:$0xf]
      %v4836 = vld [vmem:[%s4820 + $0x3c] sm:$0xf]
      %v4837 = vunpack.c.l.b16 %v4791
      %v4838 = vunpack.c.l.b16 %v4795
      %v4839 = vunpack.c.l.b16 %v4799
      %v4840 = vunpack.c.l.b16 %v4803
      %v4841 = vunpack.c.l.b16 %v4807
      %v4842 = vunpack.c.l.b16 %v4811
      %v4843 = vunpack.c.l.b16 %v4815
      %v4844 = vunpack.c.l.b16 %v4819
      %v4845 = vpack.c.b16 %v4838, %v4837
      %v4846 = vpack.c.b16 %v4840, %v4839
      %v4847 = vpack.c.b16 %v4842, %v4841
      %v4848 = vpack.c.b16 %v4844, %v4843
      %v4869 = vunpack.c.l.b16 %v4821
      %v4870 = vunpack.c.l.b16 %v4822
      %v4871 = vunpack.c.l.b16 %v4823
      %v4872 = vunpack.c.l.b16 %v4824
      %v4873 = vunpack.c.l.b16 %v4825
      %v4874 = vunpack.c.l.b16 %v4826
      %v4875 = vunpack.c.l.b16 %v4827
      %v4876 = vunpack.c.l.b16 %v4828
      %v4877 = vunpack.c.l.b16 %v4829
      %v4878 = vunpack.c.l.b16 %v4830
      %v4879 = vunpack.c.l.b16 %v4831
      %v4880 = vunpack.c.l.b16 %v4832
      %v4881 = vunpack.c.l.b16 %v4833
      %v4882 = vunpack.c.l.b16 %v4834
      %v4883 = vunpack.c.l.b16 %v4835
      %v4884 = vunpack.c.l.b16 %v4836
      %v4885 = vpack.c.b16 %v4870, %v4869
      %v4886 = vpack.c.b16 %v4872, %v4871
      %v4887 = vpack.c.b16 %v4874, %v4873
      %v4888 = vpack.c.b16 %v4876, %v4875
      %v4889 = vpack.c.b16 %v4878, %v4877
      %v4890 = vpack.c.b16 %v4880, %v4879
      %v4891 = vpack.c.b16 %v4882, %v4881
      %v4892 = vpack.c.b16 %v4884, %v4883
      %4901 = vmatprep.subr.bf16.mxu0 0
      %4902 = vmatpush1.bf16.msra.mxu0 %v4885
      %4903 = vmatprep.subr.bf16.mxu0 0
      %4904 = vmatpush1.bf16.msra.mxu0 %v4886
      %4905 = vmatprep.subr.bf16.mxu0 0
      %4906 = vmatpush1.bf16.msra.mxu0 %v4887
      %4907 = vmatprep.subr.bf16.mxu0 0
      %4908 = vmatpush1.bf16.msra.mxu0 %v4888
      %4909 = vmatprep.subr.bf16.mxu0 0
      %4910 = vmatpush1.bf16.msra.mxu0 %v4889
      %4911 = vmatprep.subr.bf16.mxu0 0
      %4912 = vmatpush1.bf16.msra.mxu0 %v4890
      %4913 = vmatprep.subr.bf16.mxu0 0
      %4914 = vmatpush1.bf16.msra.mxu0 %v4891
      %4915 = vmatprep.subr.bf16.mxu0 0
      %4916 = vmatpush1.bf16.msra.mxu0 %v4892
      %4917 = vmatprep.subr.bf16.mxu0 0
      %4918 = vmatpush1.bf16.msra.mxu0 0
      %4919 = vmatprep.subr.bf16.mxu0 0
      %4920 = vmatpush1.bf16.msra.mxu0 0
      %4921 = vmatprep.subr.bf16.mxu0 0
      %4922 = vmatpush1.bf16.msra.mxu0 0
      %4923 = vmatprep.subr.bf16.mxu0 0
      %4924 = vmatpush1.bf16.msra.mxu0 0
      %4925 = vmatprep.subr.bf16.mxu0 0
      %4926 = vmatpush1.bf16.msra.mxu0 0
      %4927 = vmatprep.subr.bf16.mxu0 0
      %4928 = vmatpush1.bf16.msra.mxu0 0
      %4929 = vmatprep.subr.bf16.mxu0 0
      %4930 = vmatpush1.bf16.msra.mxu0 0
      %4931 = vmatprep.subr.bf16.mxu0 0
      %4932 = vmatpush1.bf16.msra.mxu0 0
      %4933 = vmatprep.mubr.bf16.mxu0 0
      %4934 = vmatmul.mubr.bf16.gmra.mrb[0].mxu0 %v4845
      %v4935 = vpop.f32.mrb[0].mxu0
      %v4936 = vadd.f32 0.0, %v4935
      %v4937 = vpop.f32.mrb[0].mxu0
      %v4938 = vpop.f32.mrb[0].mxu0
      %v4939 = vadd.f32 0.0, %v4938
      %v4940 = vpop.f32.mrb[0].mxu0
      %4941 = vmatprep.mubr.bf16.mxu0 0
      %4942 = vmatmul.mubr.bf16.gmra.mrb[0].mxu0 %v4846
      %v4943 = vpop.f32.mrb[0].mxu0
      %v4944 = vadd.f32 0.0, %v4943
      %v4945 = vpop.f32.mrb[0].mxu0
      %v4946 = vpop.f32.mrb[0].mxu0
      %v4947 = vadd.f32 0.0, %v4946
      %v4948 = vpop.f32.mrb[0].mxu0
      %4949 = vmatprep.mubr.bf16.mxu0 0
      %4950 = vmatmul.mubr.bf16.gmra.mrb[0].mxu0 %v4847
      %v4951 = vpop.f32.mrb[0].mxu0
      %v4952 = vadd.f32 0.0, %v4951
      %v4953 = vpop.f32.mrb[0].mxu0
      %v4954 = vpop.f32.mrb[0].mxu0
      %v4955 = vadd.f32 0.0, %v4954
      %v4956 = vpop.f32.mrb[0].mxu0
      %4957 = vmatprep.mubr.bf16.mxu0 0
      %4958 = vmatmul.mubr.bf16.gmra.mrb[0].mxu0 %v4848
      %v4959 = vpop.f32.mrb[0].mxu0
      %v4960 = vadd.f32 0.0, %v4959
      %v4961 = vpop.f32.mrb[0].mxu0
      %v4962 = vpop.f32.mrb[0].mxu0
      %v4963 = vadd.f32 0.0, %v4962
      %v4964 = vpop.f32.mrb[0].mxu0
      %4965 = vdwg.mxu0
      %v4966 = vadd.f32 %v4756, %v4936
      %v4967 = vadd.f32 %v4757, %v4939
      %v4968 = vadd.f32 %v4758, %v4944
      %v4969 = vadd.f32 %v4759, %v4947
      %v4970 = vadd.f32 %v4760, %v4952
      %v4971 = vadd.f32 %v4761, %v4955
      %v4972 = vadd.f32 %v4762, %v4960
      %v4973 = vadd.f32 %v4763, %v4963
      %v4974 = vld [vmem:[%s6] sm:$0x1]
      %v4976 = vlaneseq
      %v4977 = vshrl.u32 %v4976, 7
      %v4978 = vsub.s32 0, %v4977
      %v4979 = vrot.slane %v4974, %v4978
      %v4981 = vadd.f32 %v4966, %v4979
      %v4982 = vadd.f32 %v4967, %v4979
      %v4983 = vadd.f32 %v4968, %v4979
      %v4984 = vadd.f32 %v4969, %v4979
      %v4985 = vadd.f32 %v4970, %v4979
      %v4986 = vadd.f32 %v4971, %v4979
      %v4987 = vadd.f32 %v4972, %v4979
      %v4988 = vadd.f32 %v4973, %v4979
      %vm4989 = vcmp.ge.f32.partialorder %v4981, 0.0
      %vm4990 = vcmp.ge.f32.partialorder %v4982, 0.0
      %vm4991 = vcmp.ge.f32.partialorder %v4983, 0.0
      %vm4992 = vcmp.ge.f32.partialorder %v4984, 0.0
      %vm4993 = vcmp.ge.f32.partialorder %v4985, 0.0
      %vm4994 = vcmp.ge.f32.partialorder %v4986, 0.0
      %vm4995 = vcmp.ge.f32.partialorder %v4987, 0.0
      %vm4996 = vcmp.ge.f32.partialorder %v4988, 0.0
      %v4997 = vmul.f32 %v4981, 0.1
      %v4998 = vmul.f32 %v4982, 0.1
      %v4999 = vmul.f32 %v4983, 0.1
      %v5000 = vmul.f32 %v4984, 0.1
      %v5001 = vmul.f32 %v4985, 0.1
      %v5002 = vmul.f32 %v4986, 0.1
      %v5003 = vmul.f32 %v4987, 0.1
      %v5004 = vmul.f32 %v4988, 0.1
      %v5005 = vsel %vm4989, %v4981, %v4997
      %v5006 = vsel %vm4990, %v4982, %v4998
      %v5007 = vsel %vm4991, %v4983, %v4999
      %v5008 = vsel %vm4992, %v4984, %v5000
      %v5009 = vsel %vm4993, %v4985, %v5001
      %v5010 = vsel %vm4994, %v4986, %v5002
      %v5011 = vsel %vm4995, %v4987, %v5003
      %v5012 = vsel %vm4996, %v4988, %v5004
      %5013 = vxpose.xlu0.b32.start [1/16] %v5005, 128
      %5014 = vxpose.xlu0.b32.cont [2/16] %v5006, 128
      %5015 = vxpose.xlu0.b32.cont [3/16] %v5007, 128
      %5016 = vxpose.xlu0.b32.cont [4/16] %v5008, 128
      %5017 = vxpose.xlu0.b32.cont [5/16] %v5009, 128
      %5018 = vxpose.xlu0.b32.cont [6/16] %v5010, 128
      %5019 = vxpose.xlu0.b32.cont [7/16] %v5011, 128
      %5020 = vxpose.xlu0.b32.cont [8/16] %v5012, 128
      %5021 = vxpose.xlu0.b32.cont [9/16] 0.0, 128
      %5022 = vxpose.xlu0.b32.cont [10/16] 0.0, 128
      %5023 = vxpose.xlu0.b32.cont [11/16] 0.0, 128
      %5024 = vxpose.xlu0.b32.cont [12/16] 0.0, 128
      %5025 = vxpose.xlu0.b32.cont [13/16] 0.0, 128
      %5026 = vxpose.xlu0.b32.cont [14/16] 0.0, 128
      %5027 = vxpose.xlu0.b32.cont [15/16] 0.0, 128
      %5028 = vxpose.xlu0.b32.end [16/16] 0.0, 128
      %v5029 = vpop.trf.xlu0
      %v5030 = vpop.trf.xlu0
      %v5031 = vpop.trf.xlu0
      %v5032 = vpop.trf.xlu0
      %v5033 = vpop.trf.xlu0
      %v5034 = vpop.trf.xlu0
      %v5035 = vpop.trf.xlu0
      %v5036 = vpop.trf.xlu0
      %v5037 = vpop.trf.xlu0
      %v5038 = vpop.trf.xlu0
      %v5039 = vpop.trf.xlu0
      %v5040 = vpop.trf.xlu0
      %v5041 = vpop.trf.xlu0
      %v5042 = vpop.trf.xlu0
      %v5043 = vpop.trf.xlu0
      %v5044 = vpop.trf.xlu0
      %vm5045 = vcmask 523264
      %5046 = vst.msk [vmem:[%s278] sm:$0xff] %vm5045, %v5029
      %5047 = vst.msk [vmem:[%s278 + $0x8] sm:$0xff] %vm5045, %v5030
      %5048 = vst.msk [vmem:[%s278 + $0x10] sm:$0xff] %vm5045, %v5031
      %5049 = vst.msk [vmem:[%s278 + $0x18] sm:$0xff] %vm5045, %v5032
      %5050 = vst.msk [vmem:[%s278 + $0x20] sm:$0xff] %vm5045, %v5033
      %5051 = vst.msk [vmem:[%s278 + $0x28] sm:$0xff] %vm5045, %v5034
      %5052 = vst.msk [vmem:[%s278 + $0x30] sm:$0xff] %vm5045, %v5035
      %5053 = vst.msk [vmem:[%s278 + $0x38] sm:$0xff] %vm5045, %v5036
      %5054 = vst.msk [vmem:[%s278 + $0x40] sm:$0xff] %vm5045, %v5037
      %5055 = vst.msk [vmem:[%s278 + $0x48] sm:$0xff] %vm5045, %v5038
      %5056 = vst.msk [vmem:[%s278 + $0x50] sm:$0xff] %vm5045, %v5039
      %5057 = vst.msk [vmem:[%s278 + $0x58] sm:$0xff] %vm5045, %v5040
      %5058 = vst.msk [vmem:[%s278 + $0x60] sm:$0xff] %vm5045, %v5041
      %5059 = vst.msk [vmem:[%s278 + $0x68] sm:$0xff] %vm5045, %v5042
      %5060 = vst.msk [vmem:[%s278 + $0x70] sm:$0xff] %vm5045, %v5043
      %5061 = vst.msk [vmem:[%s278 + $0x78] sm:$0xff] %vm5045, %v5044
      %p5062 = scmp.lt.s32.totalorder %s18, 1
      %s5063 = scalar_select %p5062, %s18, 1
      %s5064 = smul.addr %s5063, 16
      %s5065 = smul.addr %s5064, 8
      %s5066 = scalar_lea.vmem %s7, %s5065
      // Predicated region
      $region49: #{feat_extractor1_forward.1} parent=47 // pred_check
        %p5067 = pneg %p188
      $region50: #{feat_extractor1_forward.1} parent=47 // pred_check_branch
        %5069 = sbr.rel (%p5067) target = $region52
      $region51: #{feat_extractor1_forward.1} parent=47 // pred_region
        _
      $region52: #{feat_extractor1_forward.1} parent=47 // pred_fallthru
        _
    $region48: #{feat_extractor1_forward.1} parent=5 // pred_fallthru
      _
    %p5070 = scmp.le.s32.totalorder 2, %s13
    // Predicated region
    $region53: #{feat_extractor1_forward.1} parent=5 // pred_check
      %p5071 = pneg %p5070
    $region54: #{feat_extractor1_forward.1} parent=5 // pred_check_branch
      %5073 = sbr.rel (%p5071) target = $region56
    $region55: #{feat_extractor1_forward.1} parent=5 // pred_region
      %s5074 = ssub.s32 %s13, 2
      // Predicated region
      $region57: #{feat_extractor1_forward.1} parent=55 // pred_check
        %p5075 = pneg %p194
      $region58: #{feat_extractor1_forward.1} parent=55 // pred_check_branch
        %5077 = sbr.rel (%p5075) target = $region60
      $region59: #{feat_extractor1_forward.1} parent=55 // pred_region
        %p5078 = scmp.lt.s32.totalorder %s19, 1
        %s5079 = scalar_select %p5078, %s19, 1
        %s5080 = smul.addr %s5079, 16
        %s5081 = smul.addr %s5080, 8
        %s5082 = scalar_lea.vmem %s7, %s5081
      $region60: #{feat_extractor1_forward.1} parent=55 // pred_fallthru
        _
    $region56: #{feat_extractor1_forward.1} parent=5 // pred_fallthru
      _
  $region6: #{feat_extractor1_forward.1} parent=0 // loop_footer
    %s17 = sadd.s32 1, %s13
  $region7: #{feat_extractor1_forward.1} parent=0 // loop_footer_branch
    %12 = sbr.rel target = $region3
  $region8: #{feat_extractor1_forward.1} parent=0 // loop_exit
    _

</llo_original>
